<compile_context>
chip_gen: v7x
topology: tpu7x:2x2x1
jax: 0.10.0
libtpu: 0.0.40
codegen_flags: <defaults>
</compile_context>

<pallas_src>
import jax
import jax.numpy as jnp
from jax import lax
from jax.experimental import pallas as pl
from jax.experimental.pallas import tpu as pltpu


# ------------------------- fused GCN + LSTM + head -------------------------
def gcnn_rnn_fused_kernel(x_ref, adj_ref, gcn_w_ref, gcn_b_ref,
                          wih_ref, whh_ref, bg_ref, wo_ref, bo_ref, out_ref):
    # x_ref:   (Gb, S, N, F)  this row-group's features, native (B,S,..) layout
    # adj_ref: (S, Gb, N, N)  adjacency flat-block s*B + b for this row group
    Gb, S, N, F = x_ref.shape
    Hg = gcn_w_ref.shape[1]
    H = whh_ref.shape[0]

    gcn_w = gcn_w_ref[...]
    gcn_b = gcn_b_ref[...]
    wo = wo_ref[...]
    bo = bo_ref[...]

    # tanh(x) = 2*sigmoid(2x) - 1: double the g-gate (2H:3H) pre-activation
    # columns ONCE (weights + bias) so the recurrence needs only one full-width
    # sigmoid per step; the 2x-1 correction is cheap VALU work.
    col = lax.broadcasted_iota(jnp.int32, (1, 4 * H), 1)
    g2 = jnp.where((col >= 2 * H) & (col < 3 * H), 2.0, 1.0)      # (1, 4H)
    wih2 = wih_ref[...] * g2                                       # (Hg, 4H)
    whh2 = whh_ref[...] * g2                                       # (H, 4H)
    bg2 = bg_ref[...] * g2                                         # (1, 4H)

    x_all = x_ref[...]                                             # (Gb, S, N, F)
    a_all = adj_ref[...]                                           # (S, Gb, N, N)

    # Gb is 1 (multi-TC grid) or B (single-TC, single grid step): static unroll.
    for g in range(Gb):
        # ------------------------------ GCN stage ------------------------------
        a = a_all[:, g]                                            # (S, N, N)
        x = x_all[g]                                               # (S, N, F)

        rows = lax.broadcasted_iota(jnp.int32, (S, N, N), 1)
        cols = lax.broadcasted_iota(jnp.int32, (S, N, N), 2)
        # dense_to_sparse discards edge values -> weight-1 edges; add self loops.
        a = jnp.where(a != 0, 1.0, 0.0)
        a = jnp.where(rows == cols, 1.0, a)

        # gcn_norm scatters weights onto the destination (col) index -> column
        # degrees; bring them to node-on-sublane layout (tiny minor transpose).
        deg = jnp.sum(a, axis=1, keepdims=True)                    # (S, 1, N)
        dinv = jnp.swapaxes(lax.rsqrt(deg), 1, 2)                  # (S, N, 1)

        # Hoisted feature projection: one (S*N, F) @ (F, Hg) MXU pass.
        xw = jnp.dot(x.reshape(S * N, F), gcn_w,
                     preferred_element_type=jnp.float32).reshape(S, N, Hg)
        y = xw * dinv                                              # scale source rows
        # z[s, j, :] = sum_i a[s, i, j] * y[s, i, :]  -- contract the source axis
        # of the untransposed adjacency directly (transposed-LHS on the MXU).
        z = lax.dot_general(a, y, (((1,), (1,)), ((0,), (0,))),
                            preferred_element_type=jnp.float32)   # (S, N, Hg)
        emb = z * dinv + gcn_b                                     # graph embedding

        # ---------------------- LSTM (last hidden) + head ----------------------
        # Hoisted input projection for every timestep in one MXU pass (g-columns
        # already doubled via wih2/bg2).
        gx = (jnp.dot(emb.reshape(S * N, Hg), wih2,
                      preferred_element_type=jnp.float32).reshape(S, N, 4 * H)
              + bg2)

        h = jnp.zeros((N, H), jnp.float32)
        c = jnp.zeros((N, H), jnp.float32)
        for t in range(S):                       # static unroll; h/c stay in vregs
            gates = gx[t] + jnp.dot(h, whh2, preferred_element_type=jnp.float32)
            sig = jax.nn.sigmoid(gates)          # (N, 4H): single EUP pass per step
            i = sig[:, 0:H]                      # torch gate order: i, f, g, o
            f = sig[:, H:2 * H]
            gg = sig[:, 2 * H:3 * H] * 2.0 - 1.0  # == tanh of the un-doubled gate
            o = sig[:, 3 * H:4 * H]
            c = f * c + i * gg
            h = o * jnp.tanh(c)

        # out_layer(hidden.permute(1,0,2).reshape(BN, -1)) with num_layers == 1
        out_ref[g] = jnp.dot(h, wo, preferred_element_type=jnp.float32) + bo


# ------------------------------- wrapper ------------------------------------
def _multi_tensorcore_chip():
    # 2 TensorCores per chip: v7x (and megacore v4 / v5p). v5e / v6e are 1-TC.
    try:
        kind = jax.devices()[0].device_kind.lower()
    except Exception:
        return False
    return any(tag in kind for tag in ("v7", "7x", "v5p", "v4"))


def gcnn_rnn_forward(batch_inputs, batch_graph, params, *, grid_b=None):
    B, S, N, F = batch_inputs.shape
    Hg = params["gcn_w"].shape[1]
    H = params["w_hh_t"].shape[0]
    O = params["w_out_t"].shape[1]

    if grid_b is None:
        grid_b = B if _multi_tensorcore_chip() else 1
    n_steps = grid_b if (grid_b > 0 and B % grid_b == 0) else 1
    Gb = B // n_steps                      # batch elements handled per grid step

    # Free contiguous relabel (no copy): viewing the batch-major flat adjacency
    # blocks (torch's flatten(end_dim=-3) order) as (S, B, N, N) makes
    # view[s, b] == flat block s*B + b, exactly the block torch's dense_to_sparse
    # numbering pairs with feature block s*B + b.
    adj_sb = batch_graph.reshape(S, B, N, N)

    out = pl.pallas_call(
        gcnn_rnn_fused_kernel,
        out_shape=jax.ShapeDtypeStruct((B, N, O), jnp.float32),
        grid=(n_steps,),
        in_specs=[
            pl.BlockSpec((Gb, S, N, F), lambda b: (b, 0, 0, 0)),   # batch_inputs
            pl.BlockSpec((S, Gb, N, N), lambda b: (0, b, 0, 0)),   # adjacency view
            pl.BlockSpec((F, Hg), lambda b: (0, 0)),               # gcn_w
            pl.BlockSpec((1, Hg), lambda b: (0, 0)),               # gcn_b
            pl.BlockSpec((Hg, 4 * H), lambda b: (0, 0)),           # w_ih_t
            pl.BlockSpec((H, 4 * H), lambda b: (0, 0)),            # w_hh_t
            pl.BlockSpec((1, 4 * H), lambda b: (0, 0)),            # b_gates
            pl.BlockSpec((H, O), lambda b: (0, 0)),                # w_out_t
            pl.BlockSpec((1, O), lambda b: (0, 0)),                # b_out
        ],
        out_specs=pl.BlockSpec((Gb, N, O), lambda b: (b, 0, 0)),
        compiler_params=pltpu.CompilerParams(dimension_semantics=("parallel",)),
    )(batch_inputs, adj_sb, params["gcn_w"], params["gcn_b"],
      params["w_ih_t"], params["w_hh_t"], params["b_gates"],
      params["w_out_t"], params["b_out"])

    return out.reshape(B * N, O)           # free relabel, (batch*num_companies, out)


# ---------------------------- pure-JAX reference ----------------------------
def ref_forward(batch_inputs, batch_graph, params):
    B, S, N, F = batch_inputs.shape
    Hg = params["gcn_w"].shape[1]
    H = params["w_hh_t"].shape[0]
    x = jnp.transpose(batch_inputs, (1, 0, 2, 3)).reshape(S * B, N, F)
    adj = batch_graph.reshape(B * S, N, N)
    a = (adj != 0).astype(jnp.float32)
    a = jnp.maximum(a, jnp.eye(N, dtype=jnp.float32))
    deg = jnp.sum(a, axis=1)                       # column degrees, (K, N)
    dinv = lax.rsqrt(deg)
    xw = jnp.einsum("knf,fh->knh", x, params["gcn_w"])
    y = xw * dinv[..., None]
    z = jnp.einsum("kji,kjh->kih", a, y)
    gcn_out = z * dinv[..., None] + params["gcn_b"]
    seq_in = gcn_out.reshape(S, B * N, Hg)
    h = jnp.zeros((B * N, H), jnp.float32)
    c = jnp.zeros((B * N, H), jnp.float32)
    for t in range(S):
        gates = seq_in[t] @ params["w_ih_t"] + h @ params["w_hh_t"] + params["b_gates"]
        i = jax.nn.sigmoid(gates[:, :H])
        f = jax.nn.sigmoid(gates[:, H:2 * H])
        g = jnp.tanh(gates[:, 2 * H:3 * H])
        o = jax.nn.sigmoid(gates[:, 3 * H:4 * H])
        c = f * c + i * g
        h = o * jnp.tanh(c)
    return h @ params["w_out_t"] + params["b_out"]


if __name__ == "__main__":
    B, S, N, F = 2, 8, 8, 16        # batch, seq_length, num_companies, feature_size
    Hg, H, O = 32, 32, 8            # GCN hidden, LSTM hidden, out_layer dim

    keys = jax.random.split(jax.random.PRNGKey(0), 9)
    batch_inputs = jax.random.normal(keys[0], (B, S, N, F), jnp.float32)
    batch_graph = jax.random.bernoulli(keys[1], 0.35, (B, S, N, N)).astype(jnp.float32)

    params = {
        # GCNConv weight (F->Hg) and bias
        "gcn_w": 0.1 * jax.random.normal(keys[2], (F, Hg), jnp.float32),
        "gcn_b": 0.1 * jax.random.normal(keys[3], (1, Hg), jnp.float32),
        # nn.LSTM (1 layer) weights, stored pre-transposed; gate order i,f,g,o
        "w_ih_t": 0.1 * jax.random.normal(keys[4], (Hg, 4 * H), jnp.float32),
        "w_hh_t": 0.1 * jax.random.normal(keys[5], (H, 4 * H), jnp.float32),
        "b_gates": 0.1 * jax.random.normal(keys[6], (1, 4 * H), jnp.float32),  # b_ih + b_hh
        # out_layer Linear (H -> O), pre-transposed
        "w_out_t": 0.1 * jax.random.normal(keys[7], (H, O), jnp.float32),
        "b_out": 0.1 * jax.random.normal(keys[8], (1, O), jnp.float32),
    }

    out = gcnn_rnn_forward(batch_inputs, batch_graph, params)
    out = jax.block_until_ready(out)

    ref = ref_forward(batch_inputs, batch_graph, params)
    assert out.shape == (B * N, O)
    assert jnp.allclose(out, ref, atol=2e-3, rtol=2e-3), "Pallas output mismatch vs JAX reference"

    print("KERNEL_OK")
</pallas_src>

<mosaic_0001>
module attributes {stable_mosaic.version = 11 : i64} {
  func.func @gcnn_rnn_fused_kernel(%arg0: i32, %arg1: memref<2x8x8x16xf32, #tpu.memory_space<vmem>>, %arg2: memref<8x2x8x8xf32, #tpu.memory_space<vmem>>, %arg3: memref<16x32xf32, #tpu.memory_space<vmem>>, %arg4: memref<1x32xf32, #tpu.memory_space<vmem>>, %arg5: memref<32x128xf32, #tpu.memory_space<vmem>>, %arg6: memref<32x128xf32, #tpu.memory_space<vmem>>, %arg7: memref<1x128xf32, #tpu.memory_space<vmem>>, %arg8: memref<32x8xf32, #tpu.memory_space<vmem>>, %arg9: memref<1x8xf32, #tpu.memory_space<vmem>>, %arg10: memref<2x8x8xf32, #tpu.memory_space<vmem>>) attributes {dimension_semantics = [#tpu.dimension_semantics<parallel>], iteration_bounds = array<i64: 1>, scalar_prefetch = 0 : i64, scratch_operands = 0 : i64, tpu.core_type = #tpu.core_type<tc>, window_params = [{transform_indices = @transform_0, window_bounds = array<i64: 2, 8, 8, 16>}, {transform_indices = @transform_1, window_bounds = array<i64: 8, 2, 8, 8>}, {pipeline_mode = #tpu.pipeline_mode<synchronous>, transform_indices = @transform_2, window_bounds = array<i64: 16, 32>}, {pipeline_mode = #tpu.pipeline_mode<synchronous>, transform_indices = @transform_3, window_bounds = array<i64: 1, 32>}, {pipeline_mode = #tpu.pipeline_mode<synchronous>, transform_indices = @transform_4, window_bounds = array<i64: 32, 128>}, {pipeline_mode = #tpu.pipeline_mode<synchronous>, transform_indices = @transform_5, window_bounds = array<i64: 32, 128>}, {pipeline_mode = #tpu.pipeline_mode<synchronous>, transform_indices = @transform_6, window_bounds = array<i64: 1, 128>}, {pipeline_mode = #tpu.pipeline_mode<synchronous>, transform_indices = @transform_7, window_bounds = array<i64: 32, 8>}, {pipeline_mode = #tpu.pipeline_mode<synchronous>, transform_indices = @transform_8, window_bounds = array<i64: 1, 8>}, {transform_indices = @transform_9, window_bounds = array<i64: 2, 8, 8>}]} {
    %c0 = arith.constant 0 : index
    %c0_0 = arith.constant 0 : index
    %0 = vector.load %arg3[%c0, %c0_0] : memref<16x32xf32, #tpu.memory_space<vmem>>, vector<16x32xf32>
    %c0_1 = arith.constant 0 : index
    %c0_2 = arith.constant 0 : index
    %1 = vector.load %arg4[%c0_1, %c0_2] : memref<1x32xf32, #tpu.memory_space<vmem>>, vector<1x32xf32>
    %c0_3 = arith.constant 0 : index
    %c0_4 = arith.constant 0 : index
    %2 = vector.load %arg8[%c0_3, %c0_4] : memref<32x8xf32, #tpu.memory_space<vmem>>, vector<32x8xf32>
    %c0_5 = arith.constant 0 : index
    %c0_6 = arith.constant 0 : index
    %3 = vector.load %arg9[%c0_5, %c0_6] : memref<1x8xf32, #tpu.memory_space<vmem>>, vector<1x8xf32>
    %4 = tpu.iota {dimensions = array<i32: 1>} : vector<1x128xi32>
    %c64_i32 = arith.constant 64 : i32
    %5 = vector.broadcast %c64_i32 : i32 to vector<1x128xi32>
    %6 = arith.cmpi sge, %4, %5 : vector<1x128xi32>
    %c96_i32 = arith.constant 96 : i32
    %7 = vector.broadcast %c96_i32 : i32 to vector<1x128xi32>
    %8 = arith.cmpi slt, %4, %7 : vector<1x128xi32>
    %9 = arith.andi %6, %8 : vector<1x128xi1>
    %cst = arith.constant 2.000000e+00 : f32
    %cst_7 = arith.constant 1.000000e+00 : f32
    %10 = vector.broadcast %cst : f32 to vector<1x128xf32>
    %11 = vector.broadcast %cst_7 : f32 to vector<1x128xf32>
    %12 = arith.select %9, %10, %11 : vector<1x128xi1>, vector<1x128xf32>
    %c0_8 = arith.constant 0 : index
    %c0_9 = arith.constant 0 : index
    %13 = vector.load %arg5[%c0_8, %c0_9] : memref<32x128xf32, #tpu.memory_space<vmem>>, vector<32x128xf32>
    %14 = vector.broadcast %12 : vector<1x128xf32> to vector<32x128xf32>
    %15 = arith.mulf %13, %14 : vector<32x128xf32>
    %c0_10 = arith.constant 0 : index
    %c0_11 = arith.constant 0 : index
    %16 = vector.load %arg6[%c0_10, %c0_11] : memref<32x128xf32, #tpu.memory_space<vmem>>, vector<32x128xf32>
    %17 = vector.broadcast %12 : vector<1x128xf32> to vector<32x128xf32>
    %18 = arith.mulf %16, %17 : vector<32x128xf32>
    %c0_12 = arith.constant 0 : index
    %c0_13 = arith.constant 0 : index
    %19 = vector.load %arg7[%c0_12, %c0_13] : memref<1x128xf32, #tpu.memory_space<vmem>>, vector<1x128xf32>
    %20 = arith.mulf %19, %12 : vector<1x128xf32>
    %c0_14 = arith.constant 0 : index
    %c0_15 = arith.constant 0 : index
    %c0_16 = arith.constant 0 : index
    %c0_17 = arith.constant 0 : index
    %21 = vector.load %arg1[%c0_14, %c0_15, %c0_16, %c0_17] : memref<2x8x8x16xf32, #tpu.memory_space<vmem>>, vector<2x8x8x16xf32>
    %c0_18 = arith.constant 0 : index
    %c0_19 = arith.constant 0 : index
    %c0_20 = arith.constant 0 : index
    %c0_21 = arith.constant 0 : index
    %22 = vector.load %arg2[%c0_18, %c0_19, %c0_20, %c0_21] : memref<8x2x8x8xf32, #tpu.memory_space<vmem>>, vector<8x2x8x8xf32>
    %23 = vector.extract_strided_slice %22 {offsets = [0, 0, 0, 0], sizes = [8, 1, 8, 8], strides = [1, 1, 1, 1]} : vector<8x2x8x8xf32> to vector<8x1x8x8xf32>
    %24 = vector.shape_cast %23 : vector<8x1x8x8xf32> to vector<8x8x8xf32>
    %25 = vector.extract_strided_slice %21 {offsets = [0, 0, 0, 0], sizes = [1, 8, 8, 16], strides = [1, 1, 1, 1]} : vector<2x8x8x16xf32> to vector<1x8x8x16xf32>
    %26 = vector.shape_cast %25 : vector<1x8x8x16xf32> to vector<8x8x16xf32>
    %27 = tpu.iota {dimensions = array<i32: 1>} : vector<8x8x8xi32>
    %28 = tpu.iota {dimensions = array<i32: 2>} : vector<8x8x8xi32>
    %cst_22 = arith.constant 0.000000e+00 : f32
    %29 = vector.broadcast %cst_22 : f32 to vector<8x8x8xf32>
    %30 = arith.cmpf one, %24, %29 : vector<8x8x8xf32>
    %cst_23 = arith.constant 1.000000e+00 : f32
    %cst_24 = arith.constant 0.000000e+00 : f32
    %31 = vector.broadcast %cst_23 : f32 to vector<8x8x8xf32>
    %32 = vector.broadcast %cst_24 : f32 to vector<8x8x8xf32>
    %33 = arith.select %30, %31, %32 : vector<8x8x8xi1>, vector<8x8x8xf32>
    %34 = arith.cmpi eq, %27, %28 : vector<8x8x8xi32>
    %cst_25 = arith.constant 1.000000e+00 : f32
    %35 = vector.broadcast %cst_25 : f32 to vector<8x8x8xf32>
    %36 = arith.select %34, %35, %33 : vector<8x8x8xi1>, vector<8x8x8xf32>
    %cst_26 = arith.constant dense<0.000000e+00> : vector<8x8xf32>
    %37 = vector.multi_reduction <add>, %36, %cst_26 [1] : vector<8x8x8xf32> to vector<8x8xf32>
    %38 = vector.shape_cast %37 : vector<8x8xf32> to vector<8x1x8xf32>
    %39 = math.rsqrt %38 : vector<8x1x8xf32>
    %40 = tpu.transpose %39, [0, 2, 1] : vector<8x1x8xf32> -> vector<8x8x1xf32>
    %41 = vector.shape_cast %26 : vector<8x8x16xf32> to vector<64x16xf32>
    %cst_27 = arith.constant dense<0.000000e+00> : vector<64x32xf32>
    %42 = tpu.matmul %41, %0, %cst_27 {dimension_numbers = #tpu.dot_dimension_numbers<[1], [0], [0], [1], [0, 0, 1, 1], [], []>} : vector<64x16xf32>, vector<16x32xf32>, vector<64x32xf32> -> vector<64x32xf32>
    %43 = vector.shape_cast %42 : vector<64x32xf32> to vector<8x8x32xf32>
    %44 = vector.broadcast %40 : vector<8x8x1xf32> to vector<8x8x32xf32>
    %45 = arith.mulf %43, %44 : vector<8x8x32xf32>
    %cst_28 = arith.constant dense<0.000000e+00> : vector<8x8x32xf32>
    %46 = tpu.matmul %36, %45, %cst_28 {dimension_numbers = #tpu.dot_dimension_numbers<[1], [1], [2], [2], [0, 0, 0, 2, 1, 2], [0], [0]>} : vector<8x8x8xf32>, vector<8x8x32xf32>, vector<8x8x32xf32> -> vector<8x8x32xf32>
    %47 = vector.broadcast %40 : vector<8x8x1xf32> to vector<8x8x32xf32>
    %48 = arith.mulf %46, %47 : vector<8x8x32xf32>
    %49 = vector.shape_cast %1 : vector<1x32xf32> to vector<1x1x32xf32>
    %50 = vector.broadcast %49 : vector<1x1x32xf32> to vector<8x8x32xf32>
    %51 = arith.addf %48, %50 : vector<8x8x32xf32>
    %52 = vector.shape_cast %51 : vector<8x8x32xf32> to vector<64x32xf32>
    %cst_29 = arith.constant dense<0.000000e+00> : vector<64x128xf32>
    %53 = tpu.matmul %52, %15, %cst_29 {dimension_numbers = #tpu.dot_dimension_numbers<[1], [0], [0], [1], [0, 0, 1, 1], [], []>} : vector<64x32xf32>, vector<32x128xf32>, vector<64x128xf32> -> vector<64x128xf32>
    %54 = vector.shape_cast %53 : vector<64x128xf32> to vector<8x8x128xf32>
    %55 = vector.shape_cast %20 : vector<1x128xf32> to vector<1x1x128xf32>
    %56 = vector.broadcast %55 : vector<1x1x128xf32> to vector<8x8x128xf32>
    %57 = arith.addf %54, %56 : vector<8x8x128xf32>
    %cst_30 = arith.constant 0.000000e+00 : f32
    %58 = vector.broadcast %cst_30 : f32 to vector<8x32xf32>
    %cst_31 = arith.constant 0.000000e+00 : f32
    %59 = vector.broadcast %cst_31 : f32 to vector<8x32xf32>
    %60 = vector.extract_strided_slice %57 {offsets = [0, 0, 0], sizes = [1, 8, 128], strides = [1, 1, 1]} : vector<8x8x128xf32> to vector<1x8x128xf32>
    %61 = vector.shape_cast %60 : vector<1x8x128xf32> to vector<8x128xf32>
    %cst_32 = arith.constant dense<0.000000e+00> : vector<8x128xf32>
    %62 = tpu.matmul %58, %18, %cst_32 {dimension_numbers = #tpu.dot_dimension_numbers<[1], [0], [0], [1], [0, 0, 1, 1], [], []>} : vector<8x32xf32>, vector<32x128xf32>, vector<8x128xf32> -> vector<8x128xf32>
    %63 = arith.addf %61, %62 : vector<8x128xf32>
    %64 = arith.negf %63 : vector<8x128xf32>
    %65 = math.exp %64 : vector<8x128xf32>
    %cst_33 = arith.constant 1.000000e+00 : f32
    %66 = vector.broadcast %cst_33 : f32 to vector<8x128xf32>
    %67 = arith.addf %66, %65 : vector<8x128xf32>
    %68 = arith.divf %66, %67 : vector<8x128xf32>
    %69 = vector.extract_strided_slice %68 {offsets = [0, 0], sizes = [8, 32], strides = [1, 1]} : vector<8x128xf32> to vector<8x32xf32>
    %70 = vector.extract_strided_slice %68 {offsets = [0, 32], sizes = [8, 32], strides = [1, 1]} : vector<8x128xf32> to vector<8x32xf32>
    %71 = vector.extract_strided_slice %68 {offsets = [0, 64], sizes = [8, 32], strides = [1, 1]} : vector<8x128xf32> to vector<8x32xf32>
    %cst_34 = arith.constant 2.000000e+00 : f32
    %72 = vector.broadcast %cst_34 : f32 to vector<8x32xf32>
    %73 = arith.mulf %71, %72 : vector<8x32xf32>
    %cst_35 = arith.constant 1.000000e+00 : f32
    %74 = vector.broadcast %cst_35 : f32 to vector<8x32xf32>
    %75 = arith.subf %73, %74 : vector<8x32xf32>
    %76 = vector.extract_strided_slice %68 {offsets = [0, 96], sizes = [8, 32], strides = [1, 1]} : vector<8x128xf32> to vector<8x32xf32>
    %77 = arith.mulf %70, %59 : vector<8x32xf32>
    %78 = arith.mulf %69, %75 : vector<8x32xf32>
    %79 = arith.addf %77, %78 : vector<8x32xf32>
    %80 = math.tanh %79 : vector<8x32xf32>
    %81 = arith.mulf %76, %80 : vector<8x32xf32>
    %82 = vector.extract_strided_slice %57 {offsets = [1, 0, 0], sizes = [1, 8, 128], strides = [1, 1, 1]} : vector<8x8x128xf32> to vector<1x8x128xf32>
    %83 = vector.shape_cast %82 : vector<1x8x128xf32> to vector<8x128xf32>
    %cst_36 = arith.constant dense<0.000000e+00> : vector<8x128xf32>
    %84 = tpu.matmul %81, %18, %cst_36 {dimension_numbers = #tpu.dot_dimension_numbers<[1], [0], [0], [1], [0, 0, 1, 1], [], []>} : vector<8x32xf32>, vector<32x128xf32>, vector<8x128xf32> -> vector<8x128xf32>
    %85 = arith.addf %83, %84 : vector<8x128xf32>
    %86 = arith.negf %85 : vector<8x128xf32>
    %87 = math.exp %86 : vector<8x128xf32>
    %cst_37 = arith.constant 1.000000e+00 : f32
    %88 = vector.broadcast %cst_37 : f32 to vector<8x128xf32>
    %89 = arith.addf %88, %87 : vector<8x128xf32>
    %90 = arith.divf %88, %89 : vector<8x128xf32>
    %91 = vector.extract_strided_slice %90 {offsets = [0, 0], sizes = [8, 32], strides = [1, 1]} : vector<8x128xf32> to vector<8x32xf32>
    %92 = vector.extract_strided_slice %90 {offsets = [0, 32], sizes = [8, 32], strides = [1, 1]} : vector<8x128xf32> to vector<8x32xf32>
    %93 = vector.extract_strided_slice %90 {offsets = [0, 64], sizes = [8, 32], strides = [1, 1]} : vector<8x128xf32> to vector<8x32xf32>
    %cst_38 = arith.constant 2.000000e+00 : f32
    %94 = vector.broadcast %cst_38 : f32 to vector<8x32xf32>
    %95 = arith.mulf %93, %94 : vector<8x32xf32>
    %cst_39 = arith.constant 1.000000e+00 : f32
    %96 = vector.broadcast %cst_39 : f32 to vector<8x32xf32>
    %97 = arith.subf %95, %96 : vector<8x32xf32>
    %98 = vector.extract_strided_slice %90 {offsets = [0, 96], sizes = [8, 32], strides = [1, 1]} : vector<8x128xf32> to vector<8x32xf32>
    %99 = arith.mulf %92, %79 : vector<8x32xf32>
    %100 = arith.mulf %91, %97 : vector<8x32xf32>
    %101 = arith.addf %99, %100 : vector<8x32xf32>
    %102 = math.tanh %101 : vector<8x32xf32>
    %103 = arith.mulf %98, %102 : vector<8x32xf32>
    %104 = vector.extract_strided_slice %57 {offsets = [2, 0, 0], sizes = [1, 8, 128], strides = [1, 1, 1]} : vector<8x8x128xf32> to vector<1x8x128xf32>
    %105 = vector.shape_cast %104 : vector<1x8x128xf32> to vector<8x128xf32>
    %cst_40 = arith.constant dense<0.000000e+00> : vector<8x128xf32>
    %106 = tpu.matmul %103, %18, %cst_40 {dimension_numbers = #tpu.dot_dimension_numbers<[1], [0], [0], [1], [0, 0, 1, 1], [], []>} : vector<8x32xf32>, vector<32x128xf32>, vector<8x128xf32> -> vector<8x128xf32>
    %107 = arith.addf %105, %106 : vector<8x128xf32>
    %108 = arith.negf %107 : vector<8x128xf32>
    %109 = math.exp %108 : vector<8x128xf32>
    %cst_41 = arith.constant 1.000000e+00 : f32
    %110 = vector.broadcast %cst_41 : f32 to vector<8x128xf32>
    %111 = arith.addf %110, %109 : vector<8x128xf32>
    %112 = arith.divf %110, %111 : vector<8x128xf32>
    %113 = vector.extract_strided_slice %112 {offsets = [0, 0], sizes = [8, 32], strides = [1, 1]} : vector<8x128xf32> to vector<8x32xf32>
    %114 = vector.extract_strided_slice %112 {offsets = [0, 32], sizes = [8, 32], strides = [1, 1]} : vector<8x128xf32> to vector<8x32xf32>
    %115 = vector.extract_strided_slice %112 {offsets = [0, 64], sizes = [8, 32], strides = [1, 1]} : vector<8x128xf32> to vector<8x32xf32>
    %cst_42 = arith.constant 2.000000e+00 : f32
    %116 = vector.broadcast %cst_42 : f32 to vector<8x32xf32>
    %117 = arith.mulf %115, %116 : vector<8x32xf32>
    %cst_43 = arith.constant 1.000000e+00 : f32
    %118 = vector.broadcast %cst_43 : f32 to vector<8x32xf32>
    %119 = arith.subf %117, %118 : vector<8x32xf32>
    %120 = vector.extract_strided_slice %112 {offsets = [0, 96], sizes = [8, 32], strides = [1, 1]} : vector<8x128xf32> to vector<8x32xf32>
    %121 = arith.mulf %114, %101 : vector<8x32xf32>
    %122 = arith.mulf %113, %119 : vector<8x32xf32>
    %123 = arith.addf %121, %122 : vector<8x32xf32>
    %124 = math.tanh %123 : vector<8x32xf32>
    %125 = arith.mulf %120, %124 : vector<8x32xf32>
    %126 = vector.extract_strided_slice %57 {offsets = [3, 0, 0], sizes = [1, 8, 128], strides = [1, 1, 1]} : vector<8x8x128xf32> to vector<1x8x128xf32>
    %127 = vector.shape_cast %126 : vector<1x8x128xf32> to vector<8x128xf32>
    %cst_44 = arith.constant dense<0.000000e+00> : vector<8x128xf32>
    %128 = tpu.matmul %125, %18, %cst_44 {dimension_numbers = #tpu.dot_dimension_numbers<[1], [0], [0], [1], [0, 0, 1, 1], [], []>} : vector<8x32xf32>, vector<32x128xf32>, vector<8x128xf32> -> vector<8x128xf32>
    %129 = arith.addf %127, %128 : vector<8x128xf32>
    %130 = arith.negf %129 : vector<8x128xf32>
    %131 = math.exp %130 : vector<8x128xf32>
    %cst_45 = arith.constant 1.000000e+00 : f32
    %132 = vector.broadcast %cst_45 : f32 to vector<8x128xf32>
    %133 = arith.addf %132, %131 : vector<8x128xf32>
    %134 = arith.divf %132, %133 : vector<8x128xf32>
    %135 = vector.extract_strided_slice %134 {offsets = [0, 0], sizes = [8, 32], strides = [1, 1]} : vector<8x128xf32> to vector<8x32xf32>
    %136 = vector.extract_strided_slice %134 {offsets = [0, 32], sizes = [8, 32], strides = [1, 1]} : vector<8x128xf32> to vector<8x32xf32>
    %137 = vector.extract_strided_slice %134 {offsets = [0, 64], sizes = [8, 32], strides = [1, 1]} : vector<8x128xf32> to vector<8x32xf32>
    %cst_46 = arith.constant 2.000000e+00 : f32
    %138 = vector.broadcast %cst_46 : f32 to vector<8x32xf32>
    %139 = arith.mulf %137, %138 : vector<8x32xf32>
    %cst_47 = arith.constant 1.000000e+00 : f32
    %140 = vector.broadcast %cst_47 : f32 to vector<8x32xf32>
    %141 = arith.subf %139, %140 : vector<8x32xf32>
    %142 = vector.extract_strided_slice %134 {offsets = [0, 96], sizes = [8, 32], strides = [1, 1]} : vector<8x128xf32> to vector<8x32xf32>
    %143 = arith.mulf %136, %123 : vector<8x32xf32>
    %144 = arith.mulf %135, %141 : vector<8x32xf32>
    %145 = arith.addf %143, %144 : vector<8x32xf32>
    %146 = math.tanh %145 : vector<8x32xf32>
    %147 = arith.mulf %142, %146 : vector<8x32xf32>
    %148 = vector.extract_strided_slice %57 {offsets = [4, 0, 0], sizes = [1, 8, 128], strides = [1, 1, 1]} : vector<8x8x128xf32> to vector<1x8x128xf32>
    %149 = vector.shape_cast %148 : vector<1x8x128xf32> to vector<8x128xf32>
    %cst_48 = arith.constant dense<0.000000e+00> : vector<8x128xf32>
    %150 = tpu.matmul %147, %18, %cst_48 {dimension_numbers = #tpu.dot_dimension_numbers<[1], [0], [0], [1], [0, 0, 1, 1], [], []>} : vector<8x32xf32>, vector<32x128xf32>, vector<8x128xf32> -> vector<8x128xf32>
    %151 = arith.addf %149, %150 : vector<8x128xf32>
    %152 = arith.negf %151 : vector<8x128xf32>
    %153 = math.exp %152 : vector<8x128xf32>
    %cst_49 = arith.constant 1.000000e+00 : f32
    %154 = vector.broadcast %cst_49 : f32 to vector<8x128xf32>
    %155 = arith.addf %154, %153 : vector<8x128xf32>
    %156 = arith.divf %154, %155 : vector<8x128xf32>
    %157 = vector.extract_strided_slice %156 {offsets = [0, 0], sizes = [8, 32], strides = [1, 1]} : vector<8x128xf32> to vector<8x32xf32>
    %158 = vector.extract_strided_slice %156 {offsets = [0, 32], sizes = [8, 32], strides = [1, 1]} : vector<8x128xf32> to vector<8x32xf32>
    %159 = vector.extract_strided_slice %156 {offsets = [0, 64], sizes = [8, 32], strides = [1, 1]} : vector<8x128xf32> to vector<8x32xf32>
    %cst_50 = arith.constant 2.000000e+00 : f32
    %160 = vector.broadcast %cst_50 : f32 to vector<8x32xf32>
    %161 = arith.mulf %159, %160 : vector<8x32xf32>
    %cst_51 = arith.constant 1.000000e+00 : f32
    %162 = vector.broadcast %cst_51 : f32 to vector<8x32xf32>
    %163 = arith.subf %161, %162 : vector<8x32xf32>
    %164 = vector.extract_strided_slice %156 {offsets = [0, 96], sizes = [8, 32], strides = [1, 1]} : vector<8x128xf32> to vector<8x32xf32>
    %165 = arith.mulf %158, %145 : vector<8x32xf32>
    %166 = arith.mulf %157, %163 : vector<8x32xf32>
    %167 = arith.addf %165, %166 : vector<8x32xf32>
    %168 = math.tanh %167 : vector<8x32xf32>
    %169 = arith.mulf %164, %168 : vector<8x32xf32>
    %170 = vector.extract_strided_slice %57 {offsets = [5, 0, 0], sizes = [1, 8, 128], strides = [1, 1, 1]} : vector<8x8x128xf32> to vector<1x8x128xf32>
    %171 = vector.shape_cast %170 : vector<1x8x128xf32> to vector<8x128xf32>
    %cst_52 = arith.constant dense<0.000000e+00> : vector<8x128xf32>
    %172 = tpu.matmul %169, %18, %cst_52 {dimension_numbers = #tpu.dot_dimension_numbers<[1], [0], [0], [1], [0, 0, 1, 1], [], []>} : vector<8x32xf32>, vector<32x128xf32>, vector<8x128xf32> -> vector<8x128xf32>
    %173 = arith.addf %171, %172 : vector<8x128xf32>
    %174 = arith.negf %173 : vector<8x128xf32>
    %175 = math.exp %174 : vector<8x128xf32>
    %cst_53 = arith.constant 1.000000e+00 : f32
    %176 = vector.broadcast %cst_53 : f32 to vector<8x128xf32>
    %177 = arith.addf %176, %175 : vector<8x128xf32>
    %178 = arith.divf %176, %177 : vector<8x128xf32>
    %179 = vector.extract_strided_slice %178 {offsets = [0, 0], sizes = [8, 32], strides = [1, 1]} : vector<8x128xf32> to vector<8x32xf32>
    %180 = vector.extract_strided_slice %178 {offsets = [0, 32], sizes = [8, 32], strides = [1, 1]} : vector<8x128xf32> to vector<8x32xf32>
    %181 = vector.extract_strided_slice %178 {offsets = [0, 64], sizes = [8, 32], strides = [1, 1]} : vector<8x128xf32> to vector<8x32xf32>
    %cst_54 = arith.constant 2.000000e+00 : f32
    %182 = vector.broadcast %cst_54 : f32 to vector<8x32xf32>
    %183 = arith.mulf %181, %182 : vector<8x32xf32>
    %cst_55 = arith.constant 1.000000e+00 : f32
    %184 = vector.broadcast %cst_55 : f32 to vector<8x32xf32>
    %185 = arith.subf %183, %184 : vector<8x32xf32>
    %186 = vector.extract_strided_slice %178 {offsets = [0, 96], sizes = [8, 32], strides = [1, 1]} : vector<8x128xf32> to vector<8x32xf32>
    %187 = arith.mulf %180, %167 : vector<8x32xf32>
    %188 = arith.mulf %179, %185 : vector<8x32xf32>
    %189 = arith.addf %187, %188 : vector<8x32xf32>
    %190 = math.tanh %189 : vector<8x32xf32>
    %191 = arith.mulf %186, %190 : vector<8x32xf32>
    %192 = vector.extract_strided_slice %57 {offsets = [6, 0, 0], sizes = [1, 8, 128], strides = [1, 1, 1]} : vector<8x8x128xf32> to vector<1x8x128xf32>
    %193 = vector.shape_cast %192 : vector<1x8x128xf32> to vector<8x128xf32>
    %cst_56 = arith.constant dense<0.000000e+00> : vector<8x128xf32>
    %194 = tpu.matmul %191, %18, %cst_56 {dimension_numbers = #tpu.dot_dimension_numbers<[1], [0], [0], [1], [0, 0, 1, 1], [], []>} : vector<8x32xf32>, vector<32x128xf32>, vector<8x128xf32> -> vector<8x128xf32>
    %195 = arith.addf %193, %194 : vector<8x128xf32>
    %196 = arith.negf %195 : vector<8x128xf32>
    %197 = math.exp %196 : vector<8x128xf32>
    %cst_57 = arith.constant 1.000000e+00 : f32
    %198 = vector.broadcast %cst_57 : f32 to vector<8x128xf32>
    %199 = arith.addf %198, %197 : vector<8x128xf32>
    %200 = arith.divf %198, %199 : vector<8x128xf32>
    %201 = vector.extract_strided_slice %200 {offsets = [0, 0], sizes = [8, 32], strides = [1, 1]} : vector<8x128xf32> to vector<8x32xf32>
    %202 = vector.extract_strided_slice %200 {offsets = [0, 32], sizes = [8, 32], strides = [1, 1]} : vector<8x128xf32> to vector<8x32xf32>
    %203 = vector.extract_strided_slice %200 {offsets = [0, 64], sizes = [8, 32], strides = [1, 1]} : vector<8x128xf32> to vector<8x32xf32>
    %cst_58 = arith.constant 2.000000e+00 : f32
    %204 = vector.broadcast %cst_58 : f32 to vector<8x32xf32>
    %205 = arith.mulf %203, %204 : vector<8x32xf32>
    %cst_59 = arith.constant 1.000000e+00 : f32
    %206 = vector.broadcast %cst_59 : f32 to vector<8x32xf32>
    %207 = arith.subf %205, %206 : vector<8x32xf32>
    %208 = vector.extract_strided_slice %200 {offsets = [0, 96], sizes = [8, 32], strides = [1, 1]} : vector<8x128xf32> to vector<8x32xf32>
    %209 = arith.mulf %202, %189 : vector<8x32xf32>
    %210 = arith.mulf %201, %207 : vector<8x32xf32>
    %211 = arith.addf %209, %210 : vector<8x32xf32>
    %212 = math.tanh %211 : vector<8x32xf32>
    %213 = arith.mulf %208, %212 : vector<8x32xf32>
    %214 = vector.extract_strided_slice %57 {offsets = [7, 0, 0], sizes = [1, 8, 128], strides = [1, 1, 1]} : vector<8x8x128xf32> to vector<1x8x128xf32>
    %215 = vector.shape_cast %214 : vector<1x8x128xf32> to vector<8x128xf32>
    %cst_60 = arith.constant dense<0.000000e+00> : vector<8x128xf32>
    %216 = tpu.matmul %213, %18, %cst_60 {dimension_numbers = #tpu.dot_dimension_numbers<[1], [0], [0], [1], [0, 0, 1, 1], [], []>} : vector<8x32xf32>, vector<32x128xf32>, vector<8x128xf32> -> vector<8x128xf32>
    %217 = arith.addf %215, %216 : vector<8x128xf32>
    %218 = arith.negf %217 : vector<8x128xf32>
    %219 = math.exp %218 : vector<8x128xf32>
    %cst_61 = arith.constant 1.000000e+00 : f32
    %220 = vector.broadcast %cst_61 : f32 to vector<8x128xf32>
    %221 = arith.addf %220, %219 : vector<8x128xf32>
    %222 = arith.divf %220, %221 : vector<8x128xf32>
    %223 = vector.extract_strided_slice %222 {offsets = [0, 0], sizes = [8, 32], strides = [1, 1]} : vector<8x128xf32> to vector<8x32xf32>
    %224 = vector.extract_strided_slice %222 {offsets = [0, 32], sizes = [8, 32], strides = [1, 1]} : vector<8x128xf32> to vector<8x32xf32>
    %225 = vector.extract_strided_slice %222 {offsets = [0, 64], sizes = [8, 32], strides = [1, 1]} : vector<8x128xf32> to vector<8x32xf32>
    %cst_62 = arith.constant 2.000000e+00 : f32
    %226 = vector.broadcast %cst_62 : f32 to vector<8x32xf32>
    %227 = arith.mulf %225, %226 : vector<8x32xf32>
    %cst_63 = arith.constant 1.000000e+00 : f32
    %228 = vector.broadcast %cst_63 : f32 to vector<8x32xf32>
    %229 = arith.subf %227, %228 : vector<8x32xf32>
    %230 = vector.extract_strided_slice %222 {offsets = [0, 96], sizes = [8, 32], strides = [1, 1]} : vector<8x128xf32> to vector<8x32xf32>
    %231 = arith.mulf %224, %211 : vector<8x32xf32>
    %232 = arith.mulf %223, %229 : vector<8x32xf32>
    %233 = arith.addf %231, %232 : vector<8x32xf32>
    %234 = math.tanh %233 : vector<8x32xf32>
    %235 = arith.mulf %230, %234 : vector<8x32xf32>
    %cst_64 = arith.constant dense<0.000000e+00> : vector<8x8xf32>
    %236 = tpu.matmul %235, %2, %cst_64 {dimension_numbers = #tpu.dot_dimension_numbers<[1], [0], [0], [1], [0, 0, 1, 1], [], []>} : vector<8x32xf32>, vector<32x8xf32>, vector<8x8xf32> -> vector<8x8xf32>
    %237 = vector.broadcast %3 : vector<1x8xf32> to vector<8x8xf32>
    %238 = arith.addf %236, %237 : vector<8x8xf32>
    %c0_65 = arith.constant 0 : index
    %c0_66 = arith.constant 0 : index
    %c0_67 = arith.constant 0 : index
    %239 = vector.load %arg10[%c0_65, %c0_66, %c0_67] : memref<2x8x8xf32, #tpu.memory_space<vmem>>, vector<1x8x8xf32>
    %240 = vector.shape_cast %239 : vector<1x8x8xf32> to vector<8x8xf32>
    %241 = vector.shape_cast %238 : vector<8x8xf32> to vector<1x8x8xf32>
    tpu.vector_store %arg10[%c0_65, %c0_66, %c0_67], %241 {strides = array<i32>} : memref<2x8x8xf32, #tpu.memory_space<vmem>>, vector<1x8x8xf32>,
    %242 = vector.extract_strided_slice %22 {offsets = [0, 1, 0, 0], sizes = [8, 1, 8, 8], strides = [1, 1, 1, 1]} : vector<8x2x8x8xf32> to vector<8x1x8x8xf32>
    %243 = vector.shape_cast %242 : vector<8x1x8x8xf32> to vector<8x8x8xf32>
    %244 = vector.extract_strided_slice %21 {offsets = [1, 0, 0, 0], sizes = [1, 8, 8, 16], strides = [1, 1, 1, 1]} : vector<2x8x8x16xf32> to vector<1x8x8x16xf32>
    %245 = vector.shape_cast %244 : vector<1x8x8x16xf32> to vector<8x8x16xf32>
    %246 = tpu.iota {dimensions = array<i32: 1>} : vector<8x8x8xi32>
    %247 = tpu.iota {dimensions = array<i32: 2>} : vector<8x8x8xi32>
    %cst_68 = arith.constant 0.000000e+00 : f32
    %248 = vector.broadcast %cst_68 : f32 to vector<8x8x8xf32>
    %249 = arith.cmpf one, %243, %248 : vector<8x8x8xf32>
    %cst_69 = arith.constant 1.000000e+00 : f32
    %cst_70 = arith.constant 0.000000e+00 : f32
    %250 = vector.broadcast %cst_69 : f32 to vector<8x8x8xf32>
    %251 = vector.broadcast %cst_70 : f32 to vector<8x8x8xf32>
    %252 = arith.select %249, %250, %251 : vector<8x8x8xi1>, vector<8x8x8xf32>
    %253 = arith.cmpi eq, %246, %247 : vector<8x8x8xi32>
    %cst_71 = arith.constant 1.000000e+00 : f32
    %254 = vector.broadcast %cst_71 : f32 to vector<8x8x8xf32>
    %255 = arith.select %253, %254, %252 : vector<8x8x8xi1>, vector<8x8x8xf32>
    %cst_72 = arith.constant dense<0.000000e+00> : vector<8x8xf32>
    %256 = vector.multi_reduction <add>, %255, %cst_72 [1] : vector<8x8x8xf32> to vector<8x8xf32>
    %257 = vector.shape_cast %256 : vector<8x8xf32> to vector<8x1x8xf32>
    %258 = math.rsqrt %257 : vector<8x1x8xf32>
    %259 = tpu.transpose %258, [0, 2, 1] : vector<8x1x8xf32> -> vector<8x8x1xf32>
    %260 = vector.shape_cast %245 : vector<8x8x16xf32> to vector<64x16xf32>
    %cst_73 = arith.constant dense<0.000000e+00> : vector<64x32xf32>
    %261 = tpu.matmul %260, %0, %cst_73 {dimension_numbers = #tpu.dot_dimension_numbers<[1], [0], [0], [1], [0, 0, 1, 1], [], []>} : vector<64x16xf32>, vector<16x32xf32>, vector<64x32xf32> -> vector<64x32xf32>
    %262 = vector.shape_cast %261 : vector<64x32xf32> to vector<8x8x32xf32>
    %263 = vector.broadcast %259 : vector<8x8x1xf32> to vector<8x8x32xf32>
    %264 = arith.mulf %262, %263 : vector<8x8x32xf32>
    %cst_74 = arith.constant dense<0.000000e+00> : vector<8x8x32xf32>
    %265 = tpu.matmul %255, %264, %cst_74 {dimension_numbers = #tpu.dot_dimension_numbers<[1], [1], [2], [2], [0, 0, 0, 2, 1, 2], [0], [0]>} : vector<8x8x8xf32>, vector<8x8x32xf32>, vector<8x8x32xf32> -> vector<8x8x32xf32>
    %266 = vector.broadcast %259 : vector<8x8x1xf32> to vector<8x8x32xf32>
    %267 = arith.mulf %265, %266 : vector<8x8x32xf32>
    %268 = vector.shape_cast %1 : vector<1x32xf32> to vector<1x1x32xf32>
    %269 = vector.broadcast %268 : vector<1x1x32xf32> to vector<8x8x32xf32>
    %270 = arith.addf %267, %269 : vector<8x8x32xf32>
    %271 = vector.shape_cast %270 : vector<8x8x32xf32> to vector<64x32xf32>
    %cst_75 = arith.constant dense<0.000000e+00> : vector<64x128xf32>
    %272 = tpu.matmul %271, %15, %cst_75 {dimension_numbers = #tpu.dot_dimension_numbers<[1], [0], [0], [1], [0, 0, 1, 1], [], []>} : vector<64x32xf32>, vector<32x128xf32>, vector<64x128xf32> -> vector<64x128xf32>
    %273 = vector.shape_cast %272 : vector<64x128xf32> to vector<8x8x128xf32>
    %274 = vector.shape_cast %20 : vector<1x128xf32> to vector<1x1x128xf32>
    %275 = vector.broadcast %274 : vector<1x1x128xf32> to vector<8x8x128xf32>
    %276 = arith.addf %273, %275 : vector<8x8x128xf32>
    %cst_76 = arith.constant 0.000000e+00 : f32
    %277 = vector.broadcast %cst_76 : f32 to vector<8x32xf32>
    %cst_77 = arith.constant 0.000000e+00 : f32
    %278 = vector.broadcast %cst_77 : f32 to vector<8x32xf32>
    %279 = vector.extract_strided_slice %276 {offsets = [0, 0, 0], sizes = [1, 8, 128], strides = [1, 1, 1]} : vector<8x8x128xf32> to vector<1x8x128xf32>
    %280 = vector.shape_cast %279 : vector<1x8x128xf32> to vector<8x128xf32>
    %cst_78 = arith.constant dense<0.000000e+00> : vector<8x128xf32>
    %281 = tpu.matmul %277, %18, %cst_78 {dimension_numbers = #tpu.dot_dimension_numbers<[1], [0], [0], [1], [0, 0, 1, 1], [], []>} : vector<8x32xf32>, vector<32x128xf32>, vector<8x128xf32> -> vector<8x128xf32>
    %282 = arith.addf %280, %281 : vector<8x128xf32>
    %283 = arith.negf %282 : vector<8x128xf32>
    %284 = math.exp %283 : vector<8x128xf32>
    %cst_79 = arith.constant 1.000000e+00 : f32
    %285 = vector.broadcast %cst_79 : f32 to vector<8x128xf32>
    %286 = arith.addf %285, %284 : vector<8x128xf32>
    %287 = arith.divf %285, %286 : vector<8x128xf32>
    %288 = vector.extract_strided_slice %287 {offsets = [0, 0], sizes = [8, 32], strides = [1, 1]} : vector<8x128xf32> to vector<8x32xf32>
    %289 = vector.extract_strided_slice %287 {offsets = [0, 32], sizes = [8, 32], strides = [1, 1]} : vector<8x128xf32> to vector<8x32xf32>
    %290 = vector.extract_strided_slice %287 {offsets = [0, 64], sizes = [8, 32], strides = [1, 1]} : vector<8x128xf32> to vector<8x32xf32>
    %cst_80 = arith.constant 2.000000e+00 : f32
    %291 = vector.broadcast %cst_80 : f32 to vector<8x32xf32>
    %292 = arith.mulf %290, %291 : vector<8x32xf32>
    %cst_81 = arith.constant 1.000000e+00 : f32
    %293 = vector.broadcast %cst_81 : f32 to vector<8x32xf32>
    %294 = arith.subf %292, %293 : vector<8x32xf32>
    %295 = vector.extract_strided_slice %287 {offsets = [0, 96], sizes = [8, 32], strides = [1, 1]} : vector<8x128xf32> to vector<8x32xf32>
    %296 = arith.mulf %289, %278 : vector<8x32xf32>
    %297 = arith.mulf %288, %294 : vector<8x32xf32>
    %298 = arith.addf %296, %297 : vector<8x32xf32>
    %299 = math.tanh %298 : vector<8x32xf32>
    %300 = arith.mulf %295, %299 : vector<8x32xf32>
    %301 = vector.extract_strided_slice %276 {offsets = [1, 0, 0], sizes = [1, 8, 128], strides = [1, 1, 1]} : vector<8x8x128xf32> to vector<1x8x128xf32>
    %302 = vector.shape_cast %301 : vector<1x8x128xf32> to vector<8x128xf32>
    %cst_82 = arith.constant dense<0.000000e+00> : vector<8x128xf32>
    %303 = tpu.matmul %300, %18, %cst_82 {dimension_numbers = #tpu.dot_dimension_numbers<[1], [0], [0], [1], [0, 0, 1, 1], [], []>} : vector<8x32xf32>, vector<32x128xf32>, vector<8x128xf32> -> vector<8x128xf32>
    %304 = arith.addf %302, %303 : vector<8x128xf32>
    %305 = arith.negf %304 : vector<8x128xf32>
    %306 = math.exp %305 : vector<8x128xf32>
    %cst_83 = arith.constant 1.000000e+00 : f32
    %307 = vector.broadcast %cst_83 : f32 to vector<8x128xf32>
    %308 = arith.addf %307, %306 : vector<8x128xf32>
    %309 = arith.divf %307, %308 : vector<8x128xf32>
    %310 = vector.extract_strided_slice %309 {offsets = [0, 0], sizes = [8, 32], strides = [1, 1]} : vector<8x128xf32> to vector<8x32xf32>
    %311 = vector.extract_strided_slice %309 {offsets = [0, 32], sizes = [8, 32], strides = [1, 1]} : vector<8x128xf32> to vector<8x32xf32>
    %312 = vector.extract_strided_slice %309 {offsets = [0, 64], sizes = [8, 32], strides = [1, 1]} : vector<8x128xf32> to vector<8x32xf32>
    %cst_84 = arith.constant 2.000000e+00 : f32
    %313 = vector.broadcast %cst_84 : f32 to vector<8x32xf32>
    %314 = arith.mulf %312, %313 : vector<8x32xf32>
    %cst_85 = arith.constant 1.000000e+00 : f32
    %315 = vector.broadcast %cst_85 : f32 to vector<8x32xf32>
    %316 = arith.subf %314, %315 : vector<8x32xf32>
    %317 = vector.extract_strided_slice %309 {offsets = [0, 96], sizes = [8, 32], strides = [1, 1]} : vector<8x128xf32> to vector<8x32xf32>
    %318 = arith.mulf %311, %298 : vector<8x32xf32>
    %319 = arith.mulf %310, %316 : vector<8x32xf32>
    %320 = arith.addf %318, %319 : vector<8x32xf32>
    %321 = math.tanh %320 : vector<8x32xf32>
    %322 = arith.mulf %317, %321 : vector<8x32xf32>
    %323 = vector.extract_strided_slice %276 {offsets = [2, 0, 0], sizes = [1, 8, 128], strides = [1, 1, 1]} : vector<8x8x128xf32> to vector<1x8x128xf32>
    %324 = vector.shape_cast %323 : vector<1x8x128xf32> to vector<8x128xf32>
    %cst_86 = arith.constant dense<0.000000e+00> : vector<8x128xf32>
    %325 = tpu.matmul %322, %18, %cst_86 {dimension_numbers = #tpu.dot_dimension_numbers<[1], [0], [0], [1], [0, 0, 1, 1], [], []>} : vector<8x32xf32>, vector<32x128xf32>, vector<8x128xf32> -> vector<8x128xf32>
    %326 = arith.addf %324, %325 : vector<8x128xf32>
    %327 = arith.negf %326 : vector<8x128xf32>
    %328 = math.exp %327 : vector<8x128xf32>
    %cst_87 = arith.constant 1.000000e+00 : f32
    %329 = vector.broadcast %cst_87 : f32 to vector<8x128xf32>
    %330 = arith.addf %329, %328 : vector<8x128xf32>
    %331 = arith.divf %329, %330 : vector<8x128xf32>
    %332 = vector.extract_strided_slice %331 {offsets = [0, 0], sizes = [8, 32], strides = [1, 1]} : vector<8x128xf32> to vector<8x32xf32>
    %333 = vector.extract_strided_slice %331 {offsets = [0, 32], sizes = [8, 32], strides = [1, 1]} : vector<8x128xf32> to vector<8x32xf32>
    %334 = vector.extract_strided_slice %331 {offsets = [0, 64], sizes = [8, 32], strides = [1, 1]} : vector<8x128xf32> to vector<8x32xf32>
    %cst_88 = arith.constant 2.000000e+00 : f32
    %335 = vector.broadcast %cst_88 : f32 to vector<8x32xf32>
    %336 = arith.mulf %334, %335 : vector<8x32xf32>
    %cst_89 = arith.constant 1.000000e+00 : f32
    %337 = vector.broadcast %cst_89 : f32 to vector<8x32xf32>
    %338 = arith.subf %336, %337 : vector<8x32xf32>
    %339 = vector.extract_strided_slice %331 {offsets = [0, 96], sizes = [8, 32], strides = [1, 1]} : vector<8x128xf32> to vector<8x32xf32>
    %340 = arith.mulf %333, %320 : vector<8x32xf32>
    %341 = arith.mulf %332, %338 : vector<8x32xf32>
    %342 = arith.addf %340, %341 : vector<8x32xf32>
    %343 = math.tanh %342 : vector<8x32xf32>
    %344 = arith.mulf %339, %343 : vector<8x32xf32>
    %345 = vector.extract_strided_slice %276 {offsets = [3, 0, 0], sizes = [1, 8, 128], strides = [1, 1, 1]} : vector<8x8x128xf32> to vector<1x8x128xf32>
    %346 = vector.shape_cast %345 : vector<1x8x128xf32> to vector<8x128xf32>
    %cst_90 = arith.constant dense<0.000000e+00> : vector<8x128xf32>
    %347 = tpu.matmul %344, %18, %cst_90 {dimension_numbers = #tpu.dot_dimension_numbers<[1], [0], [0], [1], [0, 0, 1, 1], [], []>} : vector<8x32xf32>, vector<32x128xf32>, vector<8x128xf32> -> vector<8x128xf32>
    %348 = arith.addf %346, %347 : vector<8x128xf32>
    %349 = arith.negf %348 : vector<8x128xf32>
    %350 = math.exp %349 : vector<8x128xf32>
    %cst_91 = arith.constant 1.000000e+00 : f32
    %351 = vector.broadcast %cst_91 : f32 to vector<8x128xf32>
    %352 = arith.addf %351, %350 : vector<8x128xf32>
    %353 = arith.divf %351, %352 : vector<8x128xf32>
    %354 = vector.extract_strided_slice %353 {offsets = [0, 0], sizes = [8, 32], strides = [1, 1]} : vector<8x128xf32> to vector<8x32xf32>
    %355 = vector.extract_strided_slice %353 {offsets = [0, 32], sizes = [8, 32], strides = [1, 1]} : vector<8x128xf32> to vector<8x32xf32>
    %356 = vector.extract_strided_slice %353 {offsets = [0, 64], sizes = [8, 32], strides = [1, 1]} : vector<8x128xf32> to vector<8x32xf32>
    %cst_92 = arith.constant 2.000000e+00 : f32
    %357 = vector.broadcast %cst_92 : f32 to vector<8x32xf32>
    %358 = arith.mulf %356, %357 : vector<8x32xf32>
    %cst_93 = arith.constant 1.000000e+00 : f32
    %359 = vector.broadcast %cst_93 : f32 to vector<8x32xf32>
    %360 = arith.subf %358, %359 : vector<8x32xf32>
    %361 = vector.extract_strided_slice %353 {offsets = [0, 96], sizes = [8, 32], strides = [1, 1]} : vector<8x128xf32> to vector<8x32xf32>
    %362 = arith.mulf %355, %342 : vector<8x32xf32>
    %363 = arith.mulf %354, %360 : vector<8x32xf32>
    %364 = arith.addf %362, %363 : vector<8x32xf32>
    %365 = math.tanh %364 : vector<8x32xf32>
    %366 = arith.mulf %361, %365 : vector<8x32xf32>
    %367 = vector.extract_strided_slice %276 {offsets = [4, 0, 0], sizes = [1, 8, 128], strides = [1, 1, 1]} : vector<8x8x128xf32> to vector<1x8x128xf32>
    %368 = vector.shape_cast %367 : vector<1x8x128xf32> to vector<8x128xf32>
    %cst_94 = arith.constant dense<0.000000e+00> : vector<8x128xf32>
    %369 = tpu.matmul %366, %18, %cst_94 {dimension_numbers = #tpu.dot_dimension_numbers<[1], [0], [0], [1], [0, 0, 1, 1], [], []>} : vector<8x32xf32>, vector<32x128xf32>, vector<8x128xf32> -> vector<8x128xf32>
    %370 = arith.addf %368, %369 : vector<8x128xf32>
    %371 = arith.negf %370 : vector<8x128xf32>
    %372 = math.exp %371 : vector<8x128xf32>
    %cst_95 = arith.constant 1.000000e+00 : f32
    %373 = vector.broadcast %cst_95 : f32 to vector<8x128xf32>
    %374 = arith.addf %373, %372 : vector<8x128xf32>
    %375 = arith.divf %373, %374 : vector<8x128xf32>
    %376 = vector.extract_strided_slice %375 {offsets = [0, 0], sizes = [8, 32], strides = [1, 1]} : vector<8x128xf32> to vector<8x32xf32>
    %377 = vector.extract_strided_slice %375 {offsets = [0, 32], sizes = [8, 32], strides = [1, 1]} : vector<8x128xf32> to vector<8x32xf32>
    %378 = vector.extract_strided_slice %375 {offsets = [0, 64], sizes = [8, 32], strides = [1, 1]} : vector<8x128xf32> to vector<8x32xf32>
    %cst_96 = arith.constant 2.000000e+00 : f32
    %379 = vector.broadcast %cst_96 : f32 to vector<8x32xf32>
    %380 = arith.mulf %378, %379 : vector<8x32xf32>
    %cst_97 = arith.constant 1.000000e+00 : f32
    %381 = vector.broadcast %cst_97 : f32 to vector<8x32xf32>
    %382 = arith.subf %380, %381 : vector<8x32xf32>
    %383 = vector.extract_strided_slice %375 {offsets = [0, 96], sizes = [8, 32], strides = [1, 1]} : vector<8x128xf32> to vector<8x32xf32>
    %384 = arith.mulf %377, %364 : vector<8x32xf32>
    %385 = arith.mulf %376, %382 : vector<8x32xf32>
    %386 = arith.addf %384, %385 : vector<8x32xf32>
    %387 = math.tanh %386 : vector<8x32xf32>
    %388 = arith.mulf %383, %387 : vector<8x32xf32>
    %389 = vector.extract_strided_slice %276 {offsets = [5, 0, 0], sizes = [1, 8, 128], strides = [1, 1, 1]} : vector<8x8x128xf32> to vector<1x8x128xf32>
    %390 = vector.shape_cast %389 : vector<1x8x128xf32> to vector<8x128xf32>
    %cst_98 = arith.constant dense<0.000000e+00> : vector<8x128xf32>
    %391 = tpu.matmul %388, %18, %cst_98 {dimension_numbers = #tpu.dot_dimension_numbers<[1], [0], [0], [1], [0, 0, 1, 1], [], []>} : vector<8x32xf32>, vector<32x128xf32>, vector<8x128xf32> -> vector<8x128xf32>
    %392 = arith.addf %390, %391 : vector<8x128xf32>
    %393 = arith.negf %392 : vector<8x128xf32>
    %394 = math.exp %393 : vector<8x128xf32>
    %cst_99 = arith.constant 1.000000e+00 : f32
    %395 = vector.broadcast %cst_99 : f32 to vector<8x128xf32>
    %396 = arith.addf %395, %394 : vector<8x128xf32>
    %397 = arith.divf %395, %396 : vector<8x128xf32>
    %398 = vector.extract_strided_slice %397 {offsets = [0, 0], sizes = [8, 32], strides = [1, 1]} : vector<8x128xf32> to vector<8x32xf32>
    %399 = vector.extract_strided_slice %397 {offsets = [0, 32], sizes = [8, 32], strides = [1, 1]} : vector<8x128xf32> to vector<8x32xf32>
    %400 = vector.extract_strided_slice %397 {offsets = [0, 64], sizes = [8, 32], strides = [1, 1]} : vector<8x128xf32> to vector<8x32xf32>
    %cst_100 = arith.constant 2.000000e+00 : f32
    %401 = vector.broadcast %cst_100 : f32 to vector<8x32xf32>
    %402 = arith.mulf %400, %401 : vector<8x32xf32>
    %cst_101 = arith.constant 1.000000e+00 : f32
    %403 = vector.broadcast %cst_101 : f32 to vector<8x32xf32>
    %404 = arith.subf %402, %403 : vector<8x32xf32>
    %405 = vector.extract_strided_slice %397 {offsets = [0, 96], sizes = [8, 32], strides = [1, 1]} : vector<8x128xf32> to vector<8x32xf32>
    %406 = arith.mulf %399, %386 : vector<8x32xf32>
    %407 = arith.mulf %398, %404 : vector<8x32xf32>
    %408 = arith.addf %406, %407 : vector<8x32xf32>
    %409 = math.tanh %408 : vector<8x32xf32>
    %410 = arith.mulf %405, %409 : vector<8x32xf32>
    %411 = vector.extract_strided_slice %276 {offsets = [6, 0, 0], sizes = [1, 8, 128], strides = [1, 1, 1]} : vector<8x8x128xf32> to vector<1x8x128xf32>
    %412 = vector.shape_cast %411 : vector<1x8x128xf32> to vector<8x128xf32>
    %cst_102 = arith.constant dense<0.000000e+00> : vector<8x128xf32>
    %413 = tpu.matmul %410, %18, %cst_102 {dimension_numbers = #tpu.dot_dimension_numbers<[1], [0], [0], [1], [0, 0, 1, 1], [], []>} : vector<8x32xf32>, vector<32x128xf32>, vector<8x128xf32> -> vector<8x128xf32>
    %414 = arith.addf %412, %413 : vector<8x128xf32>
    %415 = arith.negf %414 : vector<8x128xf32>
    %416 = math.exp %415 : vector<8x128xf32>
    %cst_103 = arith.constant 1.000000e+00 : f32
    %417 = vector.broadcast %cst_103 : f32 to vector<8x128xf32>
    %418 = arith.addf %417, %416 : vector<8x128xf32>
    %419 = arith.divf %417, %418 : vector<8x128xf32>
    %420 = vector.extract_strided_slice %419 {offsets = [0, 0], sizes = [8, 32], strides = [1, 1]} : vector<8x128xf32> to vector<8x32xf32>
    %421 = vector.extract_strided_slice %419 {offsets = [0, 32], sizes = [8, 32], strides = [1, 1]} : vector<8x128xf32> to vector<8x32xf32>
    %422 = vector.extract_strided_slice %419 {offsets = [0, 64], sizes = [8, 32], strides = [1, 1]} : vector<8x128xf32> to vector<8x32xf32>
    %cst_104 = arith.constant 2.000000e+00 : f32
    %423 = vector.broadcast %cst_104 : f32 to vector<8x32xf32>
    %424 = arith.mulf %422, %423 : vector<8x32xf32>
    %cst_105 = arith.constant 1.000000e+00 : f32
    %425 = vector.broadcast %cst_105 : f32 to vector<8x32xf32>
    %426 = arith.subf %424, %425 : vector<8x32xf32>
    %427 = vector.extract_strided_slice %419 {offsets = [0, 96], sizes = [8, 32], strides = [1, 1]} : vector<8x128xf32> to vector<8x32xf32>
    %428 = arith.mulf %421, %408 : vector<8x32xf32>
    %429 = arith.mulf %420, %426 : vector<8x32xf32>
    %430 = arith.addf %428, %429 : vector<8x32xf32>
    %431 = math.tanh %430 : vector<8x32xf32>
    %432 = arith.mulf %427, %431 : vector<8x32xf32>
    %433 = vector.extract_strided_slice %276 {offsets = [7, 0, 0], sizes = [1, 8, 128], strides = [1, 1, 1]} : vector<8x8x128xf32> to vector<1x8x128xf32>
    %434 = vector.shape_cast %433 : vector<1x8x128xf32> to vector<8x128xf32>
    %cst_106 = arith.constant dense<0.000000e+00> : vector<8x128xf32>
    %435 = tpu.matmul %432, %18, %cst_106 {dimension_numbers = #tpu.dot_dimension_numbers<[1], [0], [0], [1], [0, 0, 1, 1], [], []>} : vector<8x32xf32>, vector<32x128xf32>, vector<8x128xf32> -> vector<8x128xf32>
    %436 = arith.addf %434, %435 : vector<8x128xf32>
    %437 = arith.negf %436 : vector<8x128xf32>
    %438 = math.exp %437 : vector<8x128xf32>
    %cst_107 = arith.constant 1.000000e+00 : f32
    %439 = vector.broadcast %cst_107 : f32 to vector<8x128xf32>
    %440 = arith.addf %439, %438 : vector<8x128xf32>
    %441 = arith.divf %439, %440 : vector<8x128xf32>
    %442 = vector.extract_strided_slice %441 {offsets = [0, 0], sizes = [8, 32], strides = [1, 1]} : vector<8x128xf32> to vector<8x32xf32>
    %443 = vector.extract_strided_slice %441 {offsets = [0, 32], sizes = [8, 32], strides = [1, 1]} : vector<8x128xf32> to vector<8x32xf32>
    %444 = vector.extract_strided_slice %441 {offsets = [0, 64], sizes = [8, 32], strides = [1, 1]} : vector<8x128xf32> to vector<8x32xf32>
    %cst_108 = arith.constant 2.000000e+00 : f32
    %445 = vector.broadcast %cst_108 : f32 to vector<8x32xf32>
    %446 = arith.mulf %444, %445 : vector<8x32xf32>
    %cst_109 = arith.constant 1.000000e+00 : f32
    %447 = vector.broadcast %cst_109 : f32 to vector<8x32xf32>
    %448 = arith.subf %446, %447 : vector<8x32xf32>
    %449 = vector.extract_strided_slice %441 {offsets = [0, 96], sizes = [8, 32], strides = [1, 1]} : vector<8x128xf32> to vector<8x32xf32>
    %450 = arith.mulf %443, %430 : vector<8x32xf32>
    %451 = arith.mulf %442, %448 : vector<8x32xf32>
    %452 = arith.addf %450, %451 : vector<8x32xf32>
    %453 = math.tanh %452 : vector<8x32xf32>
    %454 = arith.mulf %449, %453 : vector<8x32xf32>
    %cst_110 = arith.constant dense<0.000000e+00> : vector<8x8xf32>
    %455 = tpu.matmul %454, %2, %cst_110 {dimension_numbers = #tpu.dot_dimension_numbers<[1], [0], [0], [1], [0, 0, 1, 1], [], []>} : vector<8x32xf32>, vector<32x8xf32>, vector<8x8xf32> -> vector<8x8xf32>
    %456 = vector.broadcast %3 : vector<1x8xf32> to vector<8x8xf32>
    %457 = arith.addf %455, %456 : vector<8x8xf32>
    %c1 = arith.constant 1 : index
    %c0_111 = arith.constant 0 : index
    %c0_112 = arith.constant 0 : index
    %458 = vector.load %arg10[%c1, %c0_111, %c0_112] : memref<2x8x8xf32, #tpu.memory_space<vmem>>, vector<1x8x8xf32>
    %459 = vector.shape_cast %458 : vector<1x8x8xf32> to vector<8x8xf32>
    %460 = vector.shape_cast %457 : vector<8x8xf32> to vector<1x8x8xf32>
    tpu.vector_store %arg10[%c1, %c0_111, %c0_112], %460 {strides = array<i32>} : memref<2x8x8xf32, #tpu.memory_space<vmem>>, vector<1x8x8xf32>,
    return
  }
  func.func @transform_0(%arg0: i32) -> (i32, i32, i32, i32) {
    %c0_i32 = arith.constant 0 : i32
    %c0_i32_0 = arith.constant 0 : i32
    %c0_i32_1 = arith.constant 0 : i32
    %c0_i32_2 = arith.constant 0 : i32
    return %arg0, %c0_i32, %c0_i32_0, %c0_i32_1 : i32, i32, i32, i32
  }
  func.func @transform_1(%arg0: i32) -> (i32, i32, i32, i32) {
    %c0_i32 = arith.constant 0 : i32
    %c0_i32_0 = arith.constant 0 : i32
    %c0_i32_1 = arith.constant 0 : i32
    %c0_i32_2 = arith.constant 0 : i32
    return %c0_i32, %arg0, %c0_i32_0, %c0_i32_1 : i32, i32, i32, i32
  }
  func.func @transform_2(%arg0: i32) -> (i32, i32) {
    %c0_i32 = arith.constant 0 : i32
    %c0_i32_0 = arith.constant 0 : i32
    %c0_i32_1 = arith.constant 0 : i32
    return %c0_i32, %c0_i32_0 : i32, i32
  }
  func.func @transform_3(%arg0: i32) -> (i32, i32) {
    %c0_i32 = arith.constant 0 : i32
    %c0_i32_0 = arith.constant 0 : i32
    %c0_i32_1 = arith.constant 0 : i32
    return %c0_i32, %c0_i32_0 : i32, i32
  }
  func.func @transform_4(%arg0: i32) -> (i32, i32) {
    %c0_i32 = arith.constant 0 : i32
    %c0_i32_0 = arith.constant 0 : i32
    %c0_i32_1 = arith.constant 0 : i32
    return %c0_i32, %c0_i32_0 : i32, i32
  }
  func.func @transform_5(%arg0: i32) -> (i32, i32) {
    %c0_i32 = arith.constant 0 : i32
    %c0_i32_0 = arith.constant 0 : i32
    %c0_i32_1 = arith.constant 0 : i32
    return %c0_i32, %c0_i32_0 : i32, i32
  }
  func.func @transform_6(%arg0: i32) -> (i32, i32) {
    %c0_i32 = arith.constant 0 : i32
    %c0_i32_0 = arith.constant 0 : i32
    %c0_i32_1 = arith.constant 0 : i32
    return %c0_i32, %c0_i32_0 : i32, i32
  }
  func.func @transform_7(%arg0: i32) -> (i32, i32) {
    %c0_i32 = arith.constant 0 : i32
    %c0_i32_0 = arith.constant 0 : i32
    %c0_i32_1 = arith.constant 0 : i32
    return %c0_i32, %c0_i32_0 : i32, i32
  }
  func.func @transform_8(%arg0: i32) -> (i32, i32) {
    %c0_i32 = arith.constant 0 : i32
    %c0_i32_0 = arith.constant 0 : i32
    %c0_i32_1 = arith.constant 0 : i32
    return %c0_i32, %c0_i32_0 : i32, i32
  }
  func.func @transform_9(%arg0: i32) -> (i32, i32, i32) {
    %c0_i32 = arith.constant 0 : i32
    %c0_i32_0 = arith.constant 0 : i32
    %c0_i32_1 = arith.constant 0 : i32
    return %arg0, %c0_i32, %c0_i32_0 : i32, i32, i32
  }
}

</mosaic_0001>

<llo_original>
// kernel: tpu_custom_call.1
$region0: #{tpu_custom_call.1}
  #allocation0 [shape = 'u32[]', space=smem, size = 0x4, offset = 0x4, fixed_abs, tag = 'smem constant byte address 0x4 - core index']
  #allocation1 [shape = 'u32[144,128]{1,0:T(1,128)}', space=vmem, size = 0x12000, scoped, tag = 'internal scratch']
  %s0 = inlined_call_operand.hbm [shape: f32[2,8,8,16], index: 0, kind: input, shape index: {}]
  %s1 = inlined_call_operand.hbm [shape: f32[8,2,8,8], index: 1, kind: input, shape index: {}]
  %s2 = inlined_call_operand.vmem [shape: f32[16,32], index: 2, kind: input, shape index: {}]
  %s3 = inlined_call_operand.vmem [shape: f32[1,32], index: 3, kind: input, shape index: {}]
  %s4 = inlined_call_operand.vmem [shape: f32[32,128], index: 4, kind: input, shape index: {}]
  %s5 = inlined_call_operand.hbm [shape: f32[32,128], index: 5, kind: input, shape index: {}]
  %s6 = inlined_call_operand.vmem [shape: f32[1,128], index: 6, kind: input, shape index: {}]
  %s7 = inlined_call_operand.vmem [shape: f32[32,8], index: 7, kind: input, shape index: {}]
  %s8 = inlined_call_operand.vmem [shape: f32[1,8], index: 8, kind: input, shape index: {}]
  %s9 = inlined_call_operand.hbm [shape: f32[2,8,8], index: 9, kind: output, shape index: {}]
  %s10 = sld [smem:[#allocation0]]
  $region58: #{tpu_custom_call.1} parent=0
    _
  %s12 = ssub.s32 1, %s10
  %s13 = scalar_select 0, %s12, %s10
  $region1: #{tpu_custom_call.1} parent=0
    #allocation2 [shape = 'u8[65536]{0}', space=vmem, size = 0x10000, scoped, tag = 'input window, operand 0, single buffered']
    #allocation3 [shape = 's32[1]{0}', space=sflag, size = 0x4, scoped, tag = 'scoped memory for tpu_custom_call.1']
    #allocation4 [shape = 's32[1]{0}', space=sflag, size = 0x4, scoped, tag = 'scoped memory for tpu_custom_call.1']
    #allocation5 [shape = 'u8[65536]{0}', space=vmem, size = 0x10000, scoped, tag = 'input window, operand 1, single buffered']
    #allocation6 [shape = 's32[1]{0}', space=sflag, size = 0x4, scoped, tag = 'scoped memory for tpu_custom_call.1']
    #allocation7 [shape = 'u8[16384]{0}', space=vmem, size = 0x4000, scoped, tag = 'input window, operand 5, single buffered']
    #allocation8 [shape = 'u8[8192]{0}', space=vmem, size = 0x2000, scoped, tag = 'output window, operand 0, single buffered']
    %14 = vsyncpa [#allocation3], 0
    %15 = vsyncpa [#allocation6], 0
    %16 = vsyncpa [#allocation4], 0
    // Predicated region
    $region2: #{tpu_custom_call.1} parent=1 // pred_check
      _
    $region3: #{tpu_custom_call.1} parent=1 // pred_check_branch
      %18 = sbr.rel (0) target = $region5
    $region4: #{tpu_custom_call.1} parent=1 // pred_region
      %s20 = ssub.s32 2048, 2048
      %21 = vsyncadd [#allocation3], %s20
      %s22 = sshll.u32 [#allocation2], 4
      %s23 = int_to_ptr.vmem [resolvable:$true] %s22
      %28 = dma.hbm_to_vmem [thread:$0]  %s0, 2048, %s23, [#allocation3], 128, 128, 8
    $region5: #{tpu_custom_call.1} parent=1 // pred_fallthru
      _
    // Predicated region
    $region6: #{tpu_custom_call.1} parent=1 // pred_check
      _
    $region7: #{tpu_custom_call.1} parent=1 // pred_check_branch
      %30 = sbr.rel (0) target = $region9
    $region8: #{tpu_custom_call.1} parent=1 // pred_region
      %s32 = ssub.s32 2048, 2048
      %33 = vsyncadd [#allocation6], %s32
      %s34 = sshll.u32 [#allocation5], 4
      %s35 = int_to_ptr.vmem [resolvable:$true] %s34
      %40 = dma.hbm_to_vmem [thread:$0]  %s1, 2048, %s35, [#allocation6], 128, 128, 8
    $region9: #{tpu_custom_call.1} parent=1 // pred_fallthru
      _
    // Predicated region
    $region10: #{tpu_custom_call.1} parent=1 // pred_check
      _
    $region11: #{tpu_custom_call.1} parent=1 // pred_check_branch
      %42 = sbr.rel (0) target = $region13
    $region12: #{tpu_custom_call.1} parent=1 // pred_region
      _
    $region13: #{tpu_custom_call.1} parent=1 // pred_fallthru
      _
    // Predicated region
    $region14: #{tpu_custom_call.1} parent=1 // pred_check
      _
    $region15: #{tpu_custom_call.1} parent=1 // pred_check_branch
      %44 = sbr.rel (0) target = $region17
    $region16: #{tpu_custom_call.1} parent=1 // pred_region
      _
    $region17: #{tpu_custom_call.1} parent=1 // pred_fallthru
      _
    // Predicated region
    $region18: #{tpu_custom_call.1} parent=1 // pred_check
      _
    $region19: #{tpu_custom_call.1} parent=1 // pred_check_branch
      %46 = sbr.rel (0) target = $region21
    $region20: #{tpu_custom_call.1} parent=1 // pred_region
      _
    $region21: #{tpu_custom_call.1} parent=1 // pred_fallthru
      _
    // Predicated region
    $region22: #{tpu_custom_call.1} parent=1 // pred_check
      _
    $region23: #{tpu_custom_call.1} parent=1 // pred_check_branch
      %48 = sbr.rel (0) target = $region25
    $region24: #{tpu_custom_call.1} parent=1 // pred_region
      %s50 = ssub.s32 512, 512
      %51 = vsyncadd [#allocation6], %s50
      %s52 = sshll.u32 [#allocation7], 4
      %s53 = int_to_ptr.vmem [resolvable:$true] %s52
      %58 = dma.hbm_to_vmem [thread:$0]  %s5, 512, %s53, [#allocation6], 128, 128, 8
    $region25: #{tpu_custom_call.1} parent=1 // pred_fallthru
      _
    // Predicated region
    $region26: #{tpu_custom_call.1} parent=1 // pred_check
      _
    $region27: #{tpu_custom_call.1} parent=1 // pred_check_branch
      %60 = sbr.rel (0) target = $region29
    $region28: #{tpu_custom_call.1} parent=1 // pred_region
      _
    $region29: #{tpu_custom_call.1} parent=1 // pred_fallthru
      _
    // Predicated region
    $region30: #{tpu_custom_call.1} parent=1 // pred_check
      _
    $region31: #{tpu_custom_call.1} parent=1 // pred_check_branch
      %62 = sbr.rel (0) target = $region33
    $region32: #{tpu_custom_call.1} parent=1 // pred_region
      _
    $region33: #{tpu_custom_call.1} parent=1 // pred_fallthru
      _
    // Predicated region
    $region34: #{tpu_custom_call.1} parent=1 // pred_check
      _
    $region35: #{tpu_custom_call.1} parent=1 // pred_check_branch
      %64 = sbr.rel (0) target = $region37
    $region36: #{tpu_custom_call.1} parent=1 // pred_region
      _
    $region37: #{tpu_custom_call.1} parent=1 // pred_fallthru
      _
    // Predicated region
    $region38: #{tpu_custom_call.1} parent=1 // pred_check
      _
    $region39: #{tpu_custom_call.1} parent=1 // pred_check_branch
      %66 = sbr.rel (0) target = $region41
    $region40: #{tpu_custom_call.1} parent=1 // pred_region
      %67 = dma.done [#allocation3], 2048
    $region41: #{tpu_custom_call.1} parent=1 // pred_fallthru
      _
    // Predicated region
    $region42: #{tpu_custom_call.1} parent=1 // pred_check
      _
    $region43: #{tpu_custom_call.1} parent=1 // pred_check_branch
      %69 = sbr.rel (0) target = $region45
    $region44: #{tpu_custom_call.1} parent=1 // pred_region
      %70 = dma.done [#allocation6], 2048
    $region45: #{tpu_custom_call.1} parent=1 // pred_fallthru
      _
    // Predicated region
    $region46: #{tpu_custom_call.1} parent=1 // pred_check
      _
    $region47: #{tpu_custom_call.1} parent=1 // pred_check_branch
      %72 = sbr.rel (0) target = $region49
    $region48: #{tpu_custom_call.1} parent=1 // pred_region
      %73 = dma.done [#allocation6], 512
    $region49: #{tpu_custom_call.1} parent=1 // pred_fallthru
      _
    %v74 = vld [vmem:[%s2] sm:$0xff]
    %v75 = vld [vmem:[%s2 + $0x8] sm:$0xff]
    %v76 = vld [vmem:[%s3] sm:$0x1]
    %v77 = vld [vmem:[%s7] sm:$0xff]
    %v78 = vld [vmem:[%s7 + $0x8] sm:$0xff]
    %v79 = vld [vmem:[%s7 + $0x10] sm:$0xff]
    %v80 = vld [vmem:[%s7 + $0x18] sm:$0xff]
    %v81 = vld [vmem:[%s8] sm:$0x1]
    %v82 = vlaneseq
    %v83 = vand.u32 %v82, 127
    %vm84 = vcmp.ge.s32.totalorder %v83, 64
    %vm85 = vcmp.lt.s32.totalorder %v83, 96
    %vm86 = vmand %vm84, %vm85
    %v87 = vsel %vm86, 2.0, 1.0
    %v88 = vld [vmem:[%s4] sm:$0xff]
    %v89 = vld [vmem:[%s4 + $0x8] sm:$0xff]
    %v90 = vld [vmem:[%s4 + $0x10] sm:$0xff]
    %v91 = vld [vmem:[%s4 + $0x18] sm:$0xff]
    %v92 = vmul.f32 %v88, %v87
    %v93 = vmul.f32 %v89, %v87
    %v94 = vmul.f32 %v90, %v87
    %v95 = vmul.f32 %v91, %v87
    %v96 = vld [vmem:[#allocation7] sm:$0xff]
    %v97 = vld [vmem:[#allocation7 + $0x8] sm:$0xff]
    %v98 = vld [vmem:[#allocation7 + $0x10] sm:$0xff]
    %v99 = vld [vmem:[#allocation7 + $0x18] sm:$0xff]
    %v100 = vmul.f32 %v96, %v87
    %v101 = vmul.f32 %v97, %v87
    %v102 = vmul.f32 %v98, %v87
    %v103 = vmul.f32 %v99, %v87
    %v104 = vld [vmem:[%s6] sm:$0x1]
    %v105 = vmul.f32 %v104, %v87
    %v106 = vld [vmem:[#allocation2] sm:$0xff]
    %v107 = vld [vmem:[#allocation2 + $0x8] sm:$0xff]
    %v108 = vld [vmem:[#allocation2 + $0x10] sm:$0xff]
    %v109 = vld [vmem:[#allocation2 + $0x18] sm:$0xff]
    %v110 = vld [vmem:[#allocation2 + $0x20] sm:$0xff]
    %v111 = vld [vmem:[#allocation2 + $0x28] sm:$0xff]
    %v112 = vld [vmem:[#allocation2 + $0x30] sm:$0xff]
    %v113 = vld [vmem:[#allocation2 + $0x38] sm:$0xff]
    %v114 = vld [vmem:[#allocation2 + $0x40] sm:$0xff]
    %v115 = vld [vmem:[#allocation2 + $0x48] sm:$0xff]
    %v116 = vld [vmem:[#allocation2 + $0x50] sm:$0xff]
    %v117 = vld [vmem:[#allocation2 + $0x58] sm:$0xff]
    %v118 = vld [vmem:[#allocation2 + $0x60] sm:$0xff]
    %v119 = vld [vmem:[#allocation2 + $0x68] sm:$0xff]
    %v120 = vld [vmem:[#allocation2 + $0x70] sm:$0xff]
    %v121 = vld [vmem:[#allocation2 + $0x78] sm:$0xff]
    %v122 = vld [vmem:[#allocation5] sm:$0xff]
    %v123 = vld [vmem:[#allocation5 + $0x8] sm:$0xff]
    %v124 = vld [vmem:[#allocation5 + $0x10] sm:$0xff]
    %v125 = vld [vmem:[#allocation5 + $0x18] sm:$0xff]
    %v126 = vld [vmem:[#allocation5 + $0x20] sm:$0xff]
    %v127 = vld [vmem:[#allocation5 + $0x28] sm:$0xff]
    %v128 = vld [vmem:[#allocation5 + $0x30] sm:$0xff]
    %v129 = vld [vmem:[#allocation5 + $0x38] sm:$0xff]
    %v130 = vld [vmem:[#allocation5 + $0x40] sm:$0xff]
    %v131 = vld [vmem:[#allocation5 + $0x48] sm:$0xff]
    %v132 = vld [vmem:[#allocation5 + $0x50] sm:$0xff]
    %v133 = vld [vmem:[#allocation5 + $0x58] sm:$0xff]
    %v134 = vld [vmem:[#allocation5 + $0x60] sm:$0xff]
    %v135 = vld [vmem:[#allocation5 + $0x68] sm:$0xff]
    %v136 = vld [vmem:[#allocation5 + $0x70] sm:$0xff]
    %v137 = vld [vmem:[#allocation5 + $0x78] sm:$0xff]
    %v138 = vlaneseq
    %v139 = vshrl.u32 %v138, 7
    %vm140 = vcmp.ne.f32.partialorder %v122, 0.0
    %vm141 = vcmp.ne.f32.partialorder %v124, 0.0
    %vm142 = vcmp.ne.f32.partialorder %v126, 0.0
    %vm143 = vcmp.ne.f32.partialorder %v128, 0.0
    %vm144 = vcmp.ne.f32.partialorder %v130, 0.0
    %vm145 = vcmp.ne.f32.partialorder %v132, 0.0
    %vm146 = vcmp.ne.f32.partialorder %v134, 0.0
    %vm147 = vcmp.ne.f32.partialorder %v136, 0.0
    %v148 = vsel %vm140, 1.0, 0.0
    %v149 = vsel %vm141, 1.0, 0.0
    %v150 = vsel %vm142, 1.0, 0.0
    %v151 = vsel %vm143, 1.0, 0.0
    %v152 = vsel %vm144, 1.0, 0.0
    %v153 = vsel %vm145, 1.0, 0.0
    %v154 = vsel %vm146, 1.0, 0.0
    %v155 = vsel %vm147, 1.0, 0.0
    %vm156 = vcmp.eq.s32.totalorder %v139, %v83
    %v157 = vsel %vm156, 1.0, %v148
    %v158 = vsel %vm156, 1.0, %v149
    %v159 = vsel %vm156, 1.0, %v150
    %v160 = vsel %vm156, 1.0, %v151
    %v161 = vsel %vm156, 1.0, %v152
    %v162 = vsel %vm156, 1.0, %v153
    %v163 = vsel %vm156, 1.0, %v154
    %v164 = vsel %vm156, 1.0, %v155
    %vm165 = vcmask 64512
    %v166 = vsel %vm165, %v157, 0.0
    %v167 = vrot.slane %v166, 4
    %v168 = vadd.f32 %v166, %v167
    %v169 = vrot.slane %v168, 2
    %v170 = vadd.f32 %v168, %v169
    %v171 = vrot.slane %v170, 1
    %v172 = vadd.f32 %v170, %v171
    %v173 = vsel %vm165, %v158, 0.0
    %v174 = vrot.slane %v173, 4
    %v175 = vadd.f32 %v173, %v174
    %v176 = vrot.slane %v175, 2
    %v177 = vadd.f32 %v175, %v176
    %v178 = vrot.slane %v177, 1
    %v179 = vadd.f32 %v177, %v178
    %v180 = vsel %vm165, %v159, 0.0
    %v181 = vrot.slane %v180, 4
    %v182 = vadd.f32 %v180, %v181
    %v183 = vrot.slane %v182, 2
    %v184 = vadd.f32 %v182, %v183
    %v185 = vrot.slane %v184, 1
    %v186 = vadd.f32 %v184, %v185
    %v187 = vsel %vm165, %v160, 0.0
    %v188 = vrot.slane %v187, 4
    %v189 = vadd.f32 %v187, %v188
    %v190 = vrot.slane %v189, 2
    %v191 = vadd.f32 %v189, %v190
    %v192 = vrot.slane %v191, 1
    %v193 = vadd.f32 %v191, %v192
    %v194 = vsel %vm165, %v161, 0.0
    %v195 = vrot.slane %v194, 4
    %v196 = vadd.f32 %v194, %v195
    %v197 = vrot.slane %v196, 2
    %v198 = vadd.f32 %v196, %v197
    %v199 = vrot.slane %v198, 1
    %v200 = vadd.f32 %v198, %v199
    %v201 = vsel %vm165, %v162, 0.0
    %v202 = vrot.slane %v201, 4
    %v203 = vadd.f32 %v201, %v202
    %v204 = vrot.slane %v203, 2
    %v205 = vadd.f32 %v203, %v204
    %v206 = vrot.slane %v205, 1
    %v207 = vadd.f32 %v205, %v206
    %v208 = vsel %vm165, %v163, 0.0
    %v209 = vrot.slane %v208, 4
    %v210 = vadd.f32 %v208, %v209
    %v211 = vrot.slane %v210, 2
    %v212 = vadd.f32 %v210, %v211
    %v213 = vrot.slane %v212, 1
    %v214 = vadd.f32 %v212, %v213
    %v215 = vsel %vm165, %v164, 0.0
    %v216 = vrot.slane %v215, 4
    %v217 = vadd.f32 %v215, %v216
    %v218 = vrot.slane %v217, 2
    %v219 = vadd.f32 %v217, %v218
    %v220 = vrot.slane %v219, 1
    %v221 = vadd.f32 %v219, %v220
    %v222 = vrsqrt.pop %v172
    %v223 = vrsqrt.pop %v179
    %v224 = vrsqrt.pop %v186
    %v225 = vrsqrt.pop %v193
    %v226 = vrsqrt.pop %v200
    %v227 = vrsqrt.pop %v207
    %v228 = vrsqrt.pop %v214
    %v229 = vrsqrt.pop %v221
    %230 = vxpose.xlu0.b32.start [1/16] %v222, 128
    %231 = vxpose.xlu0.b32.cont [2/16] 0.0, 128
    %232 = vxpose.xlu0.b32.cont [3/16] 0.0, 128
    %233 = vxpose.xlu0.b32.cont [4/16] 0.0, 128
    %234 = vxpose.xlu0.b32.cont [5/16] 0.0, 128
    %235 = vxpose.xlu0.b32.cont [6/16] 0.0, 128
    %236 = vxpose.xlu0.b32.cont [7/16] 0.0, 128
    %237 = vxpose.xlu0.b32.cont [8/16] 0.0, 128
    %238 = vxpose.xlu0.b32.cont [9/16] 0.0, 128
    %239 = vxpose.xlu0.b32.cont [10/16] 0.0, 128
    %240 = vxpose.xlu0.b32.cont [11/16] 0.0, 128
    %241 = vxpose.xlu0.b32.cont [12/16] 0.0, 128
    %242 = vxpose.xlu0.b32.cont [13/16] 0.0, 128
    %243 = vxpose.xlu0.b32.cont [14/16] 0.0, 128
    %244 = vxpose.xlu0.b32.cont [15/16] 0.0, 128
    %245 = vxpose.xlu0.b32.end [16/16] 0.0, 128
    %v246 = vpop.trf.xlu0
    %v247 = vpop.trf.xlu0
    %v248 = vpop.trf.xlu0
    %v249 = vpop.trf.xlu0
    %v250 = vpop.trf.xlu0
    %v251 = vpop.trf.xlu0
    %v252 = vpop.trf.xlu0
    %v253 = vpop.trf.xlu0
    %v254 = vpop.trf.xlu0
    %v255 = vpop.trf.xlu0
    %v256 = vpop.trf.xlu0
    %v257 = vpop.trf.xlu0
    %v258 = vpop.trf.xlu0
    %v259 = vpop.trf.xlu0
    %v260 = vpop.trf.xlu0
    %v261 = vpop.trf.xlu0
    %262 = vxpose.xlu0.b32.start [1/16] %v223, 128
    %263 = vxpose.xlu0.b32.cont [2/16] 0.0, 128
    %264 = vxpose.xlu0.b32.cont [3/16] 0.0, 128
    %265 = vxpose.xlu0.b32.cont [4/16] 0.0, 128
    %266 = vxpose.xlu0.b32.cont [5/16] 0.0, 128
    %267 = vxpose.xlu0.b32.cont [6/16] 0.0, 128
    %268 = vxpose.xlu0.b32.cont [7/16] 0.0, 128
    %269 = vxpose.xlu0.b32.cont [8/16] 0.0, 128
    %270 = vxpose.xlu0.b32.cont [9/16] 0.0, 128
    %271 = vxpose.xlu0.b32.cont [10/16] 0.0, 128
    %272 = vxpose.xlu0.b32.cont [11/16] 0.0, 128
    %273 = vxpose.xlu0.b32.cont [12/16] 0.0, 128
    %274 = vxpose.xlu0.b32.cont [13/16] 0.0, 128
    %275 = vxpose.xlu0.b32.cont [14/16] 0.0, 128
    %276 = vxpose.xlu0.b32.cont [15/16] 0.0, 128
    %277 = vxpose.xlu0.b32.end [16/16] 0.0, 128
    %v278 = vpop.trf.xlu0
    %v279 = vpop.trf.xlu0
    %v280 = vpop.trf.xlu0
    %v281 = vpop.trf.xlu0
    %v282 = vpop.trf.xlu0
    %v283 = vpop.trf.xlu0
    %v284 = vpop.trf.xlu0
    %v285 = vpop.trf.xlu0
    %v286 = vpop.trf.xlu0
    %v287 = vpop.trf.xlu0
    %v288 = vpop.trf.xlu0
    %v289 = vpop.trf.xlu0
    %v290 = vpop.trf.xlu0
    %v291 = vpop.trf.xlu0
    %v292 = vpop.trf.xlu0
    %v293 = vpop.trf.xlu0
    %294 = vxpose.xlu0.b32.start [1/16] %v224, 128
    %295 = vxpose.xlu0.b32.cont [2/16] 0.0, 128
    %296 = vxpose.xlu0.b32.cont [3/16] 0.0, 128
    %297 = vxpose.xlu0.b32.cont [4/16] 0.0, 128
    %298 = vxpose.xlu0.b32.cont [5/16] 0.0, 128
    %299 = vxpose.xlu0.b32.cont [6/16] 0.0, 128
    %300 = vxpose.xlu0.b32.cont [7/16] 0.0, 128
    %301 = vxpose.xlu0.b32.cont [8/16] 0.0, 128
    %302 = vxpose.xlu0.b32.cont [9/16] 0.0, 128
    %303 = vxpose.xlu0.b32.cont [10/16] 0.0, 128
    %304 = vxpose.xlu0.b32.cont [11/16] 0.0, 128
    %305 = vxpose.xlu0.b32.cont [12/16] 0.0, 128
    %306 = vxpose.xlu0.b32.cont [13/16] 0.0, 128
    %307 = vxpose.xlu0.b32.cont [14/16] 0.0, 128
    %308 = vxpose.xlu0.b32.cont [15/16] 0.0, 128
    %309 = vxpose.xlu0.b32.end [16/16] 0.0, 128
    %v310 = vpop.trf.xlu0
    %v311 = vpop.trf.xlu0
    %v312 = vpop.trf.xlu0
    %v313 = vpop.trf.xlu0
    %v314 = vpop.trf.xlu0
    %v315 = vpop.trf.xlu0
    %v316 = vpop.trf.xlu0
    %v317 = vpop.trf.xlu0
    %v318 = vpop.trf.xlu0
    %v319 = vpop.trf.xlu0
    %v320 = vpop.trf.xlu0
    %v321 = vpop.trf.xlu0
    %v322 = vpop.trf.xlu0
    %v323 = vpop.trf.xlu0
    %v324 = vpop.trf.xlu0
    %v325 = vpop.trf.xlu0
    %326 = vxpose.xlu0.b32.start [1/16] %v225, 128
    %327 = vxpose.xlu0.b32.cont [2/16] 0.0, 128
    %328 = vxpose.xlu0.b32.cont [3/16] 0.0, 128
    %329 = vxpose.xlu0.b32.cont [4/16] 0.0, 128
    %330 = vxpose.xlu0.b32.cont [5/16] 0.0, 128
    %331 = vxpose.xlu0.b32.cont [6/16] 0.0, 128
    %332 = vxpose.xlu0.b32.cont [7/16] 0.0, 128
    %333 = vxpose.xlu0.b32.cont [8/16] 0.0, 128
    %334 = vxpose.xlu0.b32.cont [9/16] 0.0, 128
    %335 = vxpose.xlu0.b32.cont [10/16] 0.0, 128
    %336 = vxpose.xlu0.b32.cont [11/16] 0.0, 128
    %337 = vxpose.xlu0.b32.cont [12/16] 0.0, 128
    %338 = vxpose.xlu0.b32.cont [13/16] 0.0, 128
    %339 = vxpose.xlu0.b32.cont [14/16] 0.0, 128
    %340 = vxpose.xlu0.b32.cont [15/16] 0.0, 128
    %341 = vxpose.xlu0.b32.end [16/16] 0.0, 128
    %v342 = vpop.trf.xlu0
    %v343 = vpop.trf.xlu0
    %v344 = vpop.trf.xlu0
    %v345 = vpop.trf.xlu0
    %v346 = vpop.trf.xlu0
    %v347 = vpop.trf.xlu0
    %v348 = vpop.trf.xlu0
    %v349 = vpop.trf.xlu0
    %v350 = vpop.trf.xlu0
    %v351 = vpop.trf.xlu0
    %v352 = vpop.trf.xlu0
    %v353 = vpop.trf.xlu0
    %v354 = vpop.trf.xlu0
    %v355 = vpop.trf.xlu0
    %v356 = vpop.trf.xlu0
    %v357 = vpop.trf.xlu0
    %358 = vxpose.xlu0.b32.start [1/16] %v226, 128
    %359 = vxpose.xlu0.b32.cont [2/16] 0.0, 128
    %360 = vxpose.xlu0.b32.cont [3/16] 0.0, 128
    %361 = vxpose.xlu0.b32.cont [4/16] 0.0, 128
    %362 = vxpose.xlu0.b32.cont [5/16] 0.0, 128
    %363 = vxpose.xlu0.b32.cont [6/16] 0.0, 128
    %364 = vxpose.xlu0.b32.cont [7/16] 0.0, 128
    %365 = vxpose.xlu0.b32.cont [8/16] 0.0, 128
    %366 = vxpose.xlu0.b32.cont [9/16] 0.0, 128
    %367 = vxpose.xlu0.b32.cont [10/16] 0.0, 128
    %368 = vxpose.xlu0.b32.cont [11/16] 0.0, 128
    %369 = vxpose.xlu0.b32.cont [12/16] 0.0, 128
    %370 = vxpose.xlu0.b32.cont [13/16] 0.0, 128
    %371 = vxpose.xlu0.b32.cont [14/16] 0.0, 128
    %372 = vxpose.xlu0.b32.cont [15/16] 0.0, 128
    %373 = vxpose.xlu0.b32.end [16/16] 0.0, 128
    %v374 = vpop.trf.xlu0
    %v375 = vpop.trf.xlu0
    %v376 = vpop.trf.xlu0
    %v377 = vpop.trf.xlu0
    %v378 = vpop.trf.xlu0
    %v379 = vpop.trf.xlu0
    %v380 = vpop.trf.xlu0
    %v381 = vpop.trf.xlu0
    %v382 = vpop.trf.xlu0
    %v383 = vpop.trf.xlu0
    %v384 = vpop.trf.xlu0
    %v385 = vpop.trf.xlu0
    %v386 = vpop.trf.xlu0
    %v387 = vpop.trf.xlu0
    %v388 = vpop.trf.xlu0
    %v389 = vpop.trf.xlu0
    %390 = vxpose.xlu0.b32.start [1/16] %v227, 128
    %391 = vxpose.xlu0.b32.cont [2/16] 0.0, 128
    %392 = vxpose.xlu0.b32.cont [3/16] 0.0, 128
    %393 = vxpose.xlu0.b32.cont [4/16] 0.0, 128
    %394 = vxpose.xlu0.b32.cont [5/16] 0.0, 128
    %395 = vxpose.xlu0.b32.cont [6/16] 0.0, 128
    %396 = vxpose.xlu0.b32.cont [7/16] 0.0, 128
    %397 = vxpose.xlu0.b32.cont [8/16] 0.0, 128
    %398 = vxpose.xlu0.b32.cont [9/16] 0.0, 128
    %399 = vxpose.xlu0.b32.cont [10/16] 0.0, 128
    %400 = vxpose.xlu0.b32.cont [11/16] 0.0, 128
    %401 = vxpose.xlu0.b32.cont [12/16] 0.0, 128
    %402 = vxpose.xlu0.b32.cont [13/16] 0.0, 128
    %403 = vxpose.xlu0.b32.cont [14/16] 0.0, 128
    %404 = vxpose.xlu0.b32.cont [15/16] 0.0, 128
    %405 = vxpose.xlu0.b32.end [16/16] 0.0, 128
    %v406 = vpop.trf.xlu0
    %v407 = vpop.trf.xlu0
    %v408 = vpop.trf.xlu0
    %v409 = vpop.trf.xlu0
    %v410 = vpop.trf.xlu0
    %v411 = vpop.trf.xlu0
    %v412 = vpop.trf.xlu0
    %v413 = vpop.trf.xlu0
    %v414 = vpop.trf.xlu0
    %v415 = vpop.trf.xlu0
    %v416 = vpop.trf.xlu0
    %v417 = vpop.trf.xlu0
    %v418 = vpop.trf.xlu0
    %v419 = vpop.trf.xlu0
    %v420 = vpop.trf.xlu0
    %v421 = vpop.trf.xlu0
    %422 = vxpose.xlu0.b32.start [1/16] %v228, 128
    %423 = vxpose.xlu0.b32.cont [2/16] 0.0, 128
    %424 = vxpose.xlu0.b32.cont [3/16] 0.0, 128
    %425 = vxpose.xlu0.b32.cont [4/16] 0.0, 128
    %426 = vxpose.xlu0.b32.cont [5/16] 0.0, 128
    %427 = vxpose.xlu0.b32.cont [6/16] 0.0, 128
    %428 = vxpose.xlu0.b32.cont [7/16] 0.0, 128
    %429 = vxpose.xlu0.b32.cont [8/16] 0.0, 128
    %430 = vxpose.xlu0.b32.cont [9/16] 0.0, 128
    %431 = vxpose.xlu0.b32.cont [10/16] 0.0, 128
    %432 = vxpose.xlu0.b32.cont [11/16] 0.0, 128
    %433 = vxpose.xlu0.b32.cont [12/16] 0.0, 128
    %434 = vxpose.xlu0.b32.cont [13/16] 0.0, 128
    %435 = vxpose.xlu0.b32.cont [14/16] 0.0, 128
    %436 = vxpose.xlu0.b32.cont [15/16] 0.0, 128
    %437 = vxpose.xlu0.b32.end [16/16] 0.0, 128
    %v438 = vpop.trf.xlu0
    %v439 = vpop.trf.xlu0
    %v440 = vpop.trf.xlu0
    %v441 = vpop.trf.xlu0
    %v442 = vpop.trf.xlu0
    %v443 = vpop.trf.xlu0
    %v444 = vpop.trf.xlu0
    %v445 = vpop.trf.xlu0
    %v446 = vpop.trf.xlu0
    %v447 = vpop.trf.xlu0
    %v448 = vpop.trf.xlu0
    %v449 = vpop.trf.xlu0
    %v450 = vpop.trf.xlu0
    %v451 = vpop.trf.xlu0
    %v452 = vpop.trf.xlu0
    %v453 = vpop.trf.xlu0
    %454 = vxpose.xlu0.b32.start [1/16] %v229, 128
    %455 = vxpose.xlu0.b32.cont [2/16] 0.0, 128
    %456 = vxpose.xlu0.b32.cont [3/16] 0.0, 128
    %457 = vxpose.xlu0.b32.cont [4/16] 0.0, 128
    %458 = vxpose.xlu0.b32.cont [5/16] 0.0, 128
    %459 = vxpose.xlu0.b32.cont [6/16] 0.0, 128
    %460 = vxpose.xlu0.b32.cont [7/16] 0.0, 128
    %461 = vxpose.xlu0.b32.cont [8/16] 0.0, 128
    %462 = vxpose.xlu0.b32.cont [9/16] 0.0, 128
    %463 = vxpose.xlu0.b32.cont [10/16] 0.0, 128
    %464 = vxpose.xlu0.b32.cont [11/16] 0.0, 128
    %465 = vxpose.xlu0.b32.cont [12/16] 0.0, 128
    %466 = vxpose.xlu0.b32.cont [13/16] 0.0, 128
    %467 = vxpose.xlu0.b32.cont [14/16] 0.0, 128
    %468 = vxpose.xlu0.b32.cont [15/16] 0.0, 128
    %469 = vxpose.xlu0.b32.end [16/16] 0.0, 128
    %v470 = vpop.trf.xlu0
    %v471 = vpop.trf.xlu0
    %v472 = vpop.trf.xlu0
    %v473 = vpop.trf.xlu0
    %v474 = vpop.trf.xlu0
    %v475 = vpop.trf.xlu0
    %v476 = vpop.trf.xlu0
    %v477 = vpop.trf.xlu0
    %v478 = vpop.trf.xlu0
    %v479 = vpop.trf.xlu0
    %v480 = vpop.trf.xlu0
    %v481 = vpop.trf.xlu0
    %v482 = vpop.trf.xlu0
    %v483 = vpop.trf.xlu0
    %v484 = vpop.trf.xlu0
    %v485 = vpop.trf.xlu0
    %vm486 = vcmask 130048
    %v488 = vsel %vm486, %v106, 0
    %v491 = vsel %vm486, %v107, 0
    %v494 = vsel %vm486, %v108, 0
    %v497 = vsel %vm486, %v109, 0
    %v500 = vsel %vm486, %v110, 0
    %v503 = vsel %vm486, %v111, 0
    %v506 = vsel %vm486, %v112, 0
    %v509 = vsel %vm486, %v113, 0
    %511 = vmatprep.subr.mxu0 0.0
    %512 = vmatpush1.msra.mxu0 %v74
    %513 = vmatprep.subr.mxu0 0.0
    %514 = vmatpush1.msra.mxu0 %v75
    %515 = vmatprep.subr.mxu0 0.0
    %516 = vmatpush1.msra.mxu0 0.0
    %517 = vmatprep.subr.mxu0 0.0
    %518 = vmatpush1.msra.mxu0 0.0
    %519 = vmatprep.subr.mxu0 0.0
    %520 = vmatpush1.msra.mxu0 0.0
    %521 = vmatprep.subr.mxu0 0.0
    %522 = vmatpush1.msra.mxu0 0.0
    %523 = vmatprep.subr.mxu0 0.0
    %524 = vmatpush1.msra.mxu0 0.0
    %525 = vmatprep.subr.mxu0 0.0
    %526 = vmatpush1.msra.mxu0 0.0
    %527 = vmatprep.subr.mxu0 0.0
    %528 = vmatpush1.msra.mxu0 0.0
    %529 = vmatprep.subr.mxu0 0.0
    %530 = vmatpush1.msra.mxu0 0.0
    %531 = vmatprep.subr.mxu0 0.0
    %532 = vmatpush1.msra.mxu0 0.0
    %533 = vmatprep.subr.mxu0 0.0
    %534 = vmatpush1.msra.mxu0 0.0
    %535 = vmatprep.subr.mxu0 0.0
    %536 = vmatpush1.msra.mxu0 0.0
    %537 = vmatprep.subr.mxu0 0.0
    %538 = vmatpush1.msra.mxu0 0.0
    %539 = vmatprep.subr.mxu0 0.0
    %540 = vmatpush1.msra.mxu0 0.0
    %541 = vmatprep.subr.mxu0 0.0
    %542 = vmatpush1.msra.mxu0 0.0
    %543 = vmatprep.subr.mxu0 0.0
    %544 = vmatpush1.msra.mxu0 0.0
    %545 = vmatprep.subr.mxu0 0.0
    %546 = vmatpush1.msra.mxu0 0.0
    %547 = vmatprep.subr.mxu0 0.0
    %548 = vmatpush1.msra.mxu0 0.0
    %549 = vmatprep.subr.mxu0 0.0
    %550 = vmatpush1.msra.mxu0 0.0
    %551 = vmatprep.subr.mxu0 0.0
    %552 = vmatpush1.msra.mxu0 0.0
    %553 = vmatprep.subr.mxu0 0.0
    %554 = vmatpush1.msra.mxu0 0.0
    %555 = vmatprep.subr.mxu0 0.0
    %556 = vmatpush1.msra.mxu0 0.0
    %557 = vmatprep.subr.mxu0 0.0
    %558 = vmatpush1.msra.mxu0 0.0
    %559 = vmatprep.subr.mxu0 0.0
    %560 = vmatpush1.msra.mxu0 0.0
    %561 = vmatprep.subr.mxu0 0.0
    %562 = vmatpush1.msra.mxu0 0.0
    %563 = vmatprep.subr.mxu0 0.0
    %564 = vmatpush1.msra.mxu0 0.0
    %565 = vmatprep.subr.mxu0 0.0
    %566 = vmatpush1.msra.mxu0 0.0
    %567 = vmatprep.subr.mxu0 0.0
    %568 = vmatpush1.msra.mxu0 0.0
    %569 = vmatprep.subr.mxu0 0.0
    %570 = vmatpush1.msra.mxu0 0.0
    %571 = vmatprep.subr.mxu0 0.0
    %572 = vmatpush1.msra.mxu0 0.0
    %573 = vmatprep.subr.mxu0 0.0
    %574 = vmatpush1.msra.mxu0 0.0
    %575 = vmatprep.mubr.f32.mxu0 0.0
    %576 = vmatmul.mubr.f32.gmra.mrb[0].mxu0 %v488
    %v577 = vpop.f32.mrb[0].mxu0
    %v578 = vadd.f32 0.0, %v577
    %v579 = vpop.f32.mrb[0].mxu0
    %580 = vmatprep.mubr.f32.mxu0 0.0
    %581 = vmatmul.mubr.f32.gmra.mrb[0].mxu0 %v491
    %v582 = vpop.f32.mrb[0].mxu0
    %v583 = vadd.f32 0.0, %v582
    %v584 = vpop.f32.mrb[0].mxu0
    %585 = vmatprep.mubr.f32.mxu0 0.0
    %586 = vmatmul.mubr.f32.gmra.mrb[0].mxu0 %v494
    %v587 = vpop.f32.mrb[0].mxu0
    %v588 = vadd.f32 0.0, %v587
    %v589 = vpop.f32.mrb[0].mxu0
    %590 = vmatprep.mubr.f32.mxu0 0.0
    %591 = vmatmul.mubr.f32.gmra.mrb[0].mxu0 %v497
    %v592 = vpop.f32.mrb[0].mxu0
    %v593 = vadd.f32 0.0, %v592
    %v594 = vpop.f32.mrb[0].mxu0
    %595 = vmatprep.mubr.f32.mxu0 0.0
    %596 = vmatmul.mubr.f32.gmra.mrb[0].mxu0 %v500
    %v597 = vpop.f32.mrb[0].mxu0
    %v598 = vadd.f32 0.0, %v597
    %v599 = vpop.f32.mrb[0].mxu0
    %600 = vmatprep.mubr.f32.mxu0 0.0
    %601 = vmatmul.mubr.f32.gmra.mrb[0].mxu0 %v503
    %v602 = vpop.f32.mrb[0].mxu0
    %v603 = vadd.f32 0.0, %v602
    %v604 = vpop.f32.mrb[0].mxu0
    %605 = vmatprep.mubr.f32.mxu0 0.0
    %606 = vmatmul.mubr.f32.gmra.mrb[0].mxu0 %v506
    %v607 = vpop.f32.mrb[0].mxu0
    %v608 = vadd.f32 0.0, %v607
    %v609 = vpop.f32.mrb[0].mxu0
    %610 = vmatprep.mubr.f32.mxu0 0.0
    %611 = vmatmul.mubr.f32.gmra.mrb[0].mxu0 %v509
    %v612 = vpop.f32.mrb[0].mxu0
    %v613 = vadd.f32 0.0, %v612
    %v614 = vpop.f32.mrb[0].mxu0
    %615 = vdwg.mxu0
    %617 = vset.pattern.permute.xlu0 0
    %618 = vperm.xlu0 %617, %v246
    %v619 = vpop.permute.xlu0 %618
    %622 = vset.pattern.permute.xlu0 0
    %623 = vperm.xlu0 %622, %v278
    %v624 = vpop.permute.xlu0 %623
    %627 = vset.pattern.permute.xlu0 0
    %628 = vperm.xlu0 %627, %v310
    %v629 = vpop.permute.xlu0 %628
    %632 = vset.pattern.permute.xlu0 0
    %633 = vperm.xlu0 %632, %v342
    %v634 = vpop.permute.xlu0 %633
    %637 = vset.pattern.permute.xlu0 0
    %638 = vperm.xlu0 %637, %v374
    %v639 = vpop.permute.xlu0 %638
    %642 = vset.pattern.permute.xlu0 0
    %643 = vperm.xlu0 %642, %v406
    %v644 = vpop.permute.xlu0 %643
    %647 = vset.pattern.permute.xlu0 0
    %648 = vperm.xlu0 %647, %v438
    %v649 = vpop.permute.xlu0 %648
    %652 = vset.pattern.permute.xlu0 0
    %653 = vperm.xlu0 %652, %v470
    %v654 = vpop.permute.xlu0 %653
    %v656 = vmul.f32 %v578, %v619
    %v657 = vmul.f32 %v583, %v624
    %v658 = vmul.f32 %v588, %v629
    %v659 = vmul.f32 %v593, %v634
    %v660 = vmul.f32 %v598, %v639
    %v661 = vmul.f32 %v603, %v644
    %v662 = vmul.f32 %v608, %v649
    %v663 = vmul.f32 %v613, %v654
    %664 = vxpose.xlu0.b32.start [1/16] %v157, 128
    %665 = vxpose.xlu0.b32.cont [2/16] 0.0, 128
    %666 = vxpose.xlu0.b32.cont [3/16] 0.0, 128
    %667 = vxpose.xlu0.b32.cont [4/16] 0.0, 128
    %668 = vxpose.xlu0.b32.cont [5/16] 0.0, 128
    %669 = vxpose.xlu0.b32.cont [6/16] 0.0, 128
    %670 = vxpose.xlu0.b32.cont [7/16] 0.0, 128
    %671 = vxpose.xlu0.b32.cont [8/16] 0.0, 128
    %672 = vxpose.xlu0.b32.cont [9/16] 0.0, 128
    %673 = vxpose.xlu0.b32.cont [10/16] 0.0, 128
    %674 = vxpose.xlu0.b32.cont [11/16] 0.0, 128
    %675 = vxpose.xlu0.b32.cont [12/16] 0.0, 128
    %676 = vxpose.xlu0.b32.cont [13/16] 0.0, 128
    %677 = vxpose.xlu0.b32.cont [14/16] 0.0, 128
    %678 = vxpose.xlu0.b32.cont [15/16] 0.0, 128
    %679 = vxpose.xlu0.b32.end [16/16] 0.0, 128
    %v680 = vpop.trf.xlu0
    %v681 = vpop.trf.xlu0
    %v682 = vpop.trf.xlu0
    %v683 = vpop.trf.xlu0
    %v684 = vpop.trf.xlu0
    %v685 = vpop.trf.xlu0
    %v686 = vpop.trf.xlu0
    %v687 = vpop.trf.xlu0
    %v688 = vpop.trf.xlu0
    %v689 = vpop.trf.xlu0
    %v690 = vpop.trf.xlu0
    %v691 = vpop.trf.xlu0
    %v692 = vpop.trf.xlu0
    %v693 = vpop.trf.xlu0
    %v694 = vpop.trf.xlu0
    %v695 = vpop.trf.xlu0
    %v697 = vsel %vm165, %v680, 0
    %699 = vmatprep.subr.mxu0 0.0
    %700 = vmatpush1.msra.mxu0 %v656
    %701 = vmatprep.subr.mxu0 0.0
    %702 = vmatpush1.msra.mxu0 0.0
    %703 = vmatprep.subr.mxu0 0.0
    %704 = vmatpush1.msra.mxu0 0.0
    %705 = vmatprep.subr.mxu0 0.0
    %706 = vmatpush1.msra.mxu0 0.0
    %707 = vmatprep.subr.mxu0 0.0
    %708 = vmatpush1.msra.mxu0 0.0
    %709 = vmatprep.subr.mxu0 0.0
    %710 = vmatpush1.msra.mxu0 0.0
    %711 = vmatprep.subr.mxu0 0.0
    %712 = vmatpush1.msra.mxu0 0.0
    %713 = vmatprep.subr.mxu0 0.0
    %714 = vmatpush1.msra.mxu0 0.0
    %715 = vmatprep.subr.mxu0 0.0
    %716 = vmatpush1.msra.mxu0 0.0
    %717 = vmatprep.subr.mxu0 0.0
    %718 = vmatpush1.msra.mxu0 0.0
    %719 = vmatprep.subr.mxu0 0.0
    %720 = vmatpush1.msra.mxu0 0.0
    %721 = vmatprep.subr.mxu0 0.0
    %722 = vmatpush1.msra.mxu0 0.0
    %723 = vmatprep.subr.mxu0 0.0
    %724 = vmatpush1.msra.mxu0 0.0
    %725 = vmatprep.subr.mxu0 0.0
    %726 = vmatpush1.msra.mxu0 0.0
    %727 = vmatprep.subr.mxu0 0.0
    %728 = vmatpush1.msra.mxu0 0.0
    %729 = vmatprep.subr.mxu0 0.0
    %730 = vmatpush1.msra.mxu0 0.0
    %731 = vmatprep.subr.mxu0 0.0
    %732 = vmatpush1.msra.mxu0 0.0
    %733 = vmatprep.subr.mxu0 0.0
    %734 = vmatpush1.msra.mxu0 0.0
    %735 = vmatprep.subr.mxu0 0.0
    %736 = vmatpush1.msra.mxu0 0.0
    %737 = vmatprep.subr.mxu0 0.0
    %738 = vmatpush1.msra.mxu0 0.0
    %739 = vmatprep.subr.mxu0 0.0
    %740 = vmatpush1.msra.mxu0 0.0
    %741 = vmatprep.subr.mxu0 0.0
    %742 = vmatpush1.msra.mxu0 0.0
    %743 = vmatprep.subr.mxu0 0.0
    %744 = vmatpush1.msra.mxu0 0.0
    %745 = vmatprep.subr.mxu0 0.0
    %746 = vmatpush1.msra.mxu0 0.0
    %747 = vmatprep.subr.mxu0 0.0
    %748 = vmatpush1.msra.mxu0 0.0
    %749 = vmatprep.subr.mxu0 0.0
    %750 = vmatpush1.msra.mxu0 0.0
    %751 = vmatprep.subr.mxu0 0.0
    %752 = vmatpush1.msra.mxu0 0.0
    %753 = vmatprep.subr.mxu0 0.0
    %754 = vmatpush1.msra.mxu0 0.0
    %755 = vmatprep.subr.mxu0 0.0
    %756 = vmatpush1.msra.mxu0 0.0
    %757 = vmatprep.subr.mxu0 0.0
    %758 = vmatpush1.msra.mxu0 0.0
    %759 = vmatprep.subr.mxu0 0.0
    %760 = vmatpush1.msra.mxu0 0.0
    %761 = vmatprep.subr.mxu0 0.0
    %762 = vmatpush1.msra.mxu0 0.0
    %763 = vmatprep.mubr.f32.mxu0 0.0
    %764 = vmatmul.mubr.f32.gmra.mrb[0].mxu0 %v697
    %v765 = vpop.f32.mrb[0].mxu0
    %v766 = vadd.f32 0.0, %v765
    %v767 = vpop.f32.mrb[0].mxu0
    %768 = vdwg.mxu0
    %769 = vxpose.xlu0.b32.start [1/16] %v158, 128
    %770 = vxpose.xlu0.b32.cont [2/16] 0.0, 128
    %771 = vxpose.xlu0.b32.cont [3/16] 0.0, 128
    %772 = vxpose.xlu0.b32.cont [4/16] 0.0, 128
    %773 = vxpose.xlu0.b32.cont [5/16] 0.0, 128
    %774 = vxpose.xlu0.b32.cont [6/16] 0.0, 128
    %775 = vxpose.xlu0.b32.cont [7/16] 0.0, 128
    %776 = vxpose.xlu0.b32.cont [8/16] 0.0, 128
    %777 = vxpose.xlu0.b32.cont [9/16] 0.0, 128
    %778 = vxpose.xlu0.b32.cont [10/16] 0.0, 128
    %779 = vxpose.xlu0.b32.cont [11/16] 0.0, 128
    %780 = vxpose.xlu0.b32.cont [12/16] 0.0, 128
    %781 = vxpose.xlu0.b32.cont [13/16] 0.0, 128
    %782 = vxpose.xlu0.b32.cont [14/16] 0.0, 128
    %783 = vxpose.xlu0.b32.cont [15/16] 0.0, 128
    %784 = vxpose.xlu0.b32.end [16/16] 0.0, 128
    %v785 = vpop.trf.xlu0
    %v786 = vpop.trf.xlu0
    %v787 = vpop.trf.xlu0
    %v788 = vpop.trf.xlu0
    %v789 = vpop.trf.xlu0
    %v790 = vpop.trf.xlu0
    %v791 = vpop.trf.xlu0
    %v792 = vpop.trf.xlu0
    %v793 = vpop.trf.xlu0
    %v794 = vpop.trf.xlu0
    %v795 = vpop.trf.xlu0
    %v796 = vpop.trf.xlu0
    %v797 = vpop.trf.xlu0
    %v798 = vpop.trf.xlu0
    %v799 = vpop.trf.xlu0
    %v800 = vpop.trf.xlu0
    %v802 = vsel %vm165, %v785, 0
    %804 = vmatprep.subr.mxu0 0.0
    %805 = vmatpush1.msra.mxu0 %v657
    %806 = vmatprep.subr.mxu0 0.0
    %807 = vmatpush1.msra.mxu0 0.0
    %808 = vmatprep.subr.mxu0 0.0
    %809 = vmatpush1.msra.mxu0 0.0
    %810 = vmatprep.subr.mxu0 0.0
    %811 = vmatpush1.msra.mxu0 0.0
    %812 = vmatprep.subr.mxu0 0.0
    %813 = vmatpush1.msra.mxu0 0.0
    %814 = vmatprep.subr.mxu0 0.0
    %815 = vmatpush1.msra.mxu0 0.0
    %816 = vmatprep.subr.mxu0 0.0
    %817 = vmatpush1.msra.mxu0 0.0
    %818 = vmatprep.subr.mxu0 0.0
    %819 = vmatpush1.msra.mxu0 0.0
    %820 = vmatprep.subr.mxu0 0.0
    %821 = vmatpush1.msra.mxu0 0.0
    %822 = vmatprep.subr.mxu0 0.0
    %823 = vmatpush1.msra.mxu0 0.0
    %824 = vmatprep.subr.mxu0 0.0
    %825 = vmatpush1.msra.mxu0 0.0
    %826 = vmatprep.subr.mxu0 0.0
    %827 = vmatpush1.msra.mxu0 0.0
    %828 = vmatprep.subr.mxu0 0.0
    %829 = vmatpush1.msra.mxu0 0.0
    %830 = vmatprep.subr.mxu0 0.0
    %831 = vmatpush1.msra.mxu0 0.0
    %832 = vmatprep.subr.mxu0 0.0
    %833 = vmatpush1.msra.mxu0 0.0
    %834 = vmatprep.subr.mxu0 0.0
    %835 = vmatpush1.msra.mxu0 0.0
    %836 = vmatprep.subr.mxu0 0.0
    %837 = vmatpush1.msra.mxu0 0.0
    %838 = vmatprep.subr.mxu0 0.0
    %839 = vmatpush1.msra.mxu0 0.0
    %840 = vmatprep.subr.mxu0 0.0
    %841 = vmatpush1.msra.mxu0 0.0
    %842 = vmatprep.subr.mxu0 0.0
    %843 = vmatpush1.msra.mxu0 0.0
    %844 = vmatprep.subr.mxu0 0.0
    %845 = vmatpush1.msra.mxu0 0.0
    %846 = vmatprep.subr.mxu0 0.0
    %847 = vmatpush1.msra.mxu0 0.0
    %848 = vmatprep.subr.mxu0 0.0
    %849 = vmatpush1.msra.mxu0 0.0
    %850 = vmatprep.subr.mxu0 0.0
    %851 = vmatpush1.msra.mxu0 0.0
    %852 = vmatprep.subr.mxu0 0.0
    %853 = vmatpush1.msra.mxu0 0.0
    %854 = vmatprep.subr.mxu0 0.0
    %855 = vmatpush1.msra.mxu0 0.0
    %856 = vmatprep.subr.mxu0 0.0
    %857 = vmatpush1.msra.mxu0 0.0
    %858 = vmatprep.subr.mxu0 0.0
    %859 = vmatpush1.msra.mxu0 0.0
    %860 = vmatprep.subr.mxu0 0.0
    %861 = vmatpush1.msra.mxu0 0.0
    %862 = vmatprep.subr.mxu0 0.0
    %863 = vmatpush1.msra.mxu0 0.0
    %864 = vmatprep.subr.mxu0 0.0
    %865 = vmatpush1.msra.mxu0 0.0
    %866 = vmatprep.subr.mxu0 0.0
    %867 = vmatpush1.msra.mxu0 0.0
    %868 = vmatprep.mubr.f32.mxu0 0.0
    %869 = vmatmul.mubr.f32.gmra.mrb[0].mxu0 %v802
    %v870 = vpop.f32.mrb[0].mxu0
    %v871 = vadd.f32 0.0, %v870
    %v872 = vpop.f32.mrb[0].mxu0
    %873 = vdwg.mxu0
    %874 = vxpose.xlu0.b32.start [1/16] %v159, 128
    %875 = vxpose.xlu0.b32.cont [2/16] 0.0, 128
    %876 = vxpose.xlu0.b32.cont [3/16] 0.0, 128
    %877 = vxpose.xlu0.b32.cont [4/16] 0.0, 128
    %878 = vxpose.xlu0.b32.cont [5/16] 0.0, 128
    %879 = vxpose.xlu0.b32.cont [6/16] 0.0, 128
    %880 = vxpose.xlu0.b32.cont [7/16] 0.0, 128
    %881 = vxpose.xlu0.b32.cont [8/16] 0.0, 128
    %882 = vxpose.xlu0.b32.cont [9/16] 0.0, 128
    %883 = vxpose.xlu0.b32.cont [10/16] 0.0, 128
    %884 = vxpose.xlu0.b32.cont [11/16] 0.0, 128
    %885 = vxpose.xlu0.b32.cont [12/16] 0.0, 128
    %886 = vxpose.xlu0.b32.cont [13/16] 0.0, 128
    %887 = vxpose.xlu0.b32.cont [14/16] 0.0, 128
    %888 = vxpose.xlu0.b32.cont [15/16] 0.0, 128
    %889 = vxpose.xlu0.b32.end [16/16] 0.0, 128
    %v890 = vpop.trf.xlu0
    %v891 = vpop.trf.xlu0
    %v892 = vpop.trf.xlu0
    %v893 = vpop.trf.xlu0
    %v894 = vpop.trf.xlu0
    %v895 = vpop.trf.xlu0
    %v896 = vpop.trf.xlu0
    %v897 = vpop.trf.xlu0
    %v898 = vpop.trf.xlu0
    %v899 = vpop.trf.xlu0
    %v900 = vpop.trf.xlu0
    %v901 = vpop.trf.xlu0
    %v902 = vpop.trf.xlu0
    %v903 = vpop.trf.xlu0
    %v904 = vpop.trf.xlu0
    %v905 = vpop.trf.xlu0
    %v907 = vsel %vm165, %v890, 0
    %909 = vmatprep.subr.mxu0 0.0
    %910 = vmatpush1.msra.mxu0 %v658
    %911 = vmatprep.subr.mxu0 0.0
    %912 = vmatpush1.msra.mxu0 0.0
    %913 = vmatprep.subr.mxu0 0.0
    %914 = vmatpush1.msra.mxu0 0.0
    %915 = vmatprep.subr.mxu0 0.0
    %916 = vmatpush1.msra.mxu0 0.0
    %917 = vmatprep.subr.mxu0 0.0
    %918 = vmatpush1.msra.mxu0 0.0
    %919 = vmatprep.subr.mxu0 0.0
    %920 = vmatpush1.msra.mxu0 0.0
    %921 = vmatprep.subr.mxu0 0.0
    %922 = vmatpush1.msra.mxu0 0.0
    %923 = vmatprep.subr.mxu0 0.0
    %924 = vmatpush1.msra.mxu0 0.0
    %925 = vmatprep.subr.mxu0 0.0
    %926 = vmatpush1.msra.mxu0 0.0
    %927 = vmatprep.subr.mxu0 0.0
    %928 = vmatpush1.msra.mxu0 0.0
    %929 = vmatprep.subr.mxu0 0.0
    %930 = vmatpush1.msra.mxu0 0.0
    %931 = vmatprep.subr.mxu0 0.0
    %932 = vmatpush1.msra.mxu0 0.0
    %933 = vmatprep.subr.mxu0 0.0
    %934 = vmatpush1.msra.mxu0 0.0
    %935 = vmatprep.subr.mxu0 0.0
    %936 = vmatpush1.msra.mxu0 0.0
    %937 = vmatprep.subr.mxu0 0.0
    %938 = vmatpush1.msra.mxu0 0.0
    %939 = vmatprep.subr.mxu0 0.0
    %940 = vmatpush1.msra.mxu0 0.0
    %941 = vmatprep.subr.mxu0 0.0
    %942 = vmatpush1.msra.mxu0 0.0
    %943 = vmatprep.subr.mxu0 0.0
    %944 = vmatpush1.msra.mxu0 0.0
    %945 = vmatprep.subr.mxu0 0.0
    %946 = vmatpush1.msra.mxu0 0.0
    %947 = vmatprep.subr.mxu0 0.0
    %948 = vmatpush1.msra.mxu0 0.0
    %949 = vmatprep.subr.mxu0 0.0
    %950 = vmatpush1.msra.mxu0 0.0
    %951 = vmatprep.subr.mxu0 0.0
    %952 = vmatpush1.msra.mxu0 0.0
    %953 = vmatprep.subr.mxu0 0.0
    %954 = vmatpush1.msra.mxu0 0.0
    %955 = vmatprep.subr.mxu0 0.0
    %956 = vmatpush1.msra.mxu0 0.0
    %957 = vmatprep.subr.mxu0 0.0
    %958 = vmatpush1.msra.mxu0 0.0
    %959 = vmatprep.subr.mxu0 0.0
    %960 = vmatpush1.msra.mxu0 0.0
    %961 = vmatprep.subr.mxu0 0.0
    %962 = vmatpush1.msra.mxu0 0.0
    %963 = vmatprep.subr.mxu0 0.0
    %964 = vmatpush1.msra.mxu0 0.0
    %965 = vmatprep.subr.mxu0 0.0
    %966 = vmatpush1.msra.mxu0 0.0
    %967 = vmatprep.subr.mxu0 0.0
    %968 = vmatpush1.msra.mxu0 0.0
    %969 = vmatprep.subr.mxu0 0.0
    %970 = vmatpush1.msra.mxu0 0.0
    %971 = vmatprep.subr.mxu0 0.0
    %972 = vmatpush1.msra.mxu0 0.0
    %973 = vmatprep.mubr.f32.mxu0 0.0
    %974 = vmatmul.mubr.f32.gmra.mrb[0].mxu0 %v907
    %v975 = vpop.f32.mrb[0].mxu0
    %v976 = vadd.f32 0.0, %v975
    %v977 = vpop.f32.mrb[0].mxu0
    %978 = vdwg.mxu0
    %979 = vxpose.xlu0.b32.start [1/16] %v160, 128
    %980 = vxpose.xlu0.b32.cont [2/16] 0.0, 128
    %981 = vxpose.xlu0.b32.cont [3/16] 0.0, 128
    %982 = vxpose.xlu0.b32.cont [4/16] 0.0, 128
    %983 = vxpose.xlu0.b32.cont [5/16] 0.0, 128
    %984 = vxpose.xlu0.b32.cont [6/16] 0.0, 128
    %985 = vxpose.xlu0.b32.cont [7/16] 0.0, 128
    %986 = vxpose.xlu0.b32.cont [8/16] 0.0, 128
    %987 = vxpose.xlu0.b32.cont [9/16] 0.0, 128
    %988 = vxpose.xlu0.b32.cont [10/16] 0.0, 128
    %989 = vxpose.xlu0.b32.cont [11/16] 0.0, 128
    %990 = vxpose.xlu0.b32.cont [12/16] 0.0, 128
    %991 = vxpose.xlu0.b32.cont [13/16] 0.0, 128
    %992 = vxpose.xlu0.b32.cont [14/16] 0.0, 128
    %993 = vxpose.xlu0.b32.cont [15/16] 0.0, 128
    %994 = vxpose.xlu0.b32.end [16/16] 0.0, 128
    %v995 = vpop.trf.xlu0
    %v996 = vpop.trf.xlu0
    %v997 = vpop.trf.xlu0
    %v998 = vpop.trf.xlu0
    %v999 = vpop.trf.xlu0
    %v1000 = vpop.trf.xlu0
    %v1001 = vpop.trf.xlu0
    %v1002 = vpop.trf.xlu0
    %v1003 = vpop.trf.xlu0
    %v1004 = vpop.trf.xlu0
    %v1005 = vpop.trf.xlu0
    %v1006 = vpop.trf.xlu0
    %v1007 = vpop.trf.xlu0
    %v1008 = vpop.trf.xlu0
    %v1009 = vpop.trf.xlu0
    %v1010 = vpop.trf.xlu0
    %v1012 = vsel %vm165, %v995, 0
    %1014 = vmatprep.subr.mxu0 0.0
    %1015 = vmatpush1.msra.mxu0 %v659
    %1016 = vmatprep.subr.mxu0 0.0
    %1017 = vmatpush1.msra.mxu0 0.0
    %1018 = vmatprep.subr.mxu0 0.0
    %1019 = vmatpush1.msra.mxu0 0.0
    %1020 = vmatprep.subr.mxu0 0.0
    %1021 = vmatpush1.msra.mxu0 0.0
    %1022 = vmatprep.subr.mxu0 0.0
    %1023 = vmatpush1.msra.mxu0 0.0
    %1024 = vmatprep.subr.mxu0 0.0
    %1025 = vmatpush1.msra.mxu0 0.0
    %1026 = vmatprep.subr.mxu0 0.0
    %1027 = vmatpush1.msra.mxu0 0.0
    %1028 = vmatprep.subr.mxu0 0.0
    %1029 = vmatpush1.msra.mxu0 0.0
    %1030 = vmatprep.subr.mxu0 0.0
    %1031 = vmatpush1.msra.mxu0 0.0
    %1032 = vmatprep.subr.mxu0 0.0
    %1033 = vmatpush1.msra.mxu0 0.0
    %1034 = vmatprep.subr.mxu0 0.0
    %1035 = vmatpush1.msra.mxu0 0.0
    %1036 = vmatprep.subr.mxu0 0.0
    %1037 = vmatpush1.msra.mxu0 0.0
    %1038 = vmatprep.subr.mxu0 0.0
    %1039 = vmatpush1.msra.mxu0 0.0
    %1040 = vmatprep.subr.mxu0 0.0
    %1041 = vmatpush1.msra.mxu0 0.0
    %1042 = vmatprep.subr.mxu0 0.0
    %1043 = vmatpush1.msra.mxu0 0.0
    %1044 = vmatprep.subr.mxu0 0.0
    %1045 = vmatpush1.msra.mxu0 0.0
    %1046 = vmatprep.subr.mxu0 0.0
    %1047 = vmatpush1.msra.mxu0 0.0
    %1048 = vmatprep.subr.mxu0 0.0
    %1049 = vmatpush1.msra.mxu0 0.0
    %1050 = vmatprep.subr.mxu0 0.0
    %1051 = vmatpush1.msra.mxu0 0.0
    %1052 = vmatprep.subr.mxu0 0.0
    %1053 = vmatpush1.msra.mxu0 0.0
    %1054 = vmatprep.subr.mxu0 0.0
    %1055 = vmatpush1.msra.mxu0 0.0
    %1056 = vmatprep.subr.mxu0 0.0
    %1057 = vmatpush1.msra.mxu0 0.0
    %1058 = vmatprep.subr.mxu0 0.0
    %1059 = vmatpush1.msra.mxu0 0.0
    %1060 = vmatprep.subr.mxu0 0.0
    %1061 = vmatpush1.msra.mxu0 0.0
    %1062 = vmatprep.subr.mxu0 0.0
    %1063 = vmatpush1.msra.mxu0 0.0
    %1064 = vmatprep.subr.mxu0 0.0
    %1065 = vmatpush1.msra.mxu0 0.0
    %1066 = vmatprep.subr.mxu0 0.0
    %1067 = vmatpush1.msra.mxu0 0.0
    %1068 = vmatprep.subr.mxu0 0.0
    %1069 = vmatpush1.msra.mxu0 0.0
    %1070 = vmatprep.subr.mxu0 0.0
    %1071 = vmatpush1.msra.mxu0 0.0
    %1072 = vmatprep.subr.mxu0 0.0
    %1073 = vmatpush1.msra.mxu0 0.0
    %1074 = vmatprep.subr.mxu0 0.0
    %1075 = vmatpush1.msra.mxu0 0.0
    %1076 = vmatprep.subr.mxu0 0.0
    %1077 = vmatpush1.msra.mxu0 0.0
    %1078 = vmatprep.mubr.f32.mxu0 0.0
    %1079 = vmatmul.mubr.f32.gmra.mrb[0].mxu0 %v1012
    %v1080 = vpop.f32.mrb[0].mxu0
    %v1081 = vadd.f32 0.0, %v1080
    %v1082 = vpop.f32.mrb[0].mxu0
    %1083 = vdwg.mxu0
    %1084 = vxpose.xlu0.b32.start [1/16] %v161, 128
    %1085 = vxpose.xlu0.b32.cont [2/16] 0.0, 128
    %1086 = vxpose.xlu0.b32.cont [3/16] 0.0, 128
    %1087 = vxpose.xlu0.b32.cont [4/16] 0.0, 128
    %1088 = vxpose.xlu0.b32.cont [5/16] 0.0, 128
    %1089 = vxpose.xlu0.b32.cont [6/16] 0.0, 128
    %1090 = vxpose.xlu0.b32.cont [7/16] 0.0, 128
    %1091 = vxpose.xlu0.b32.cont [8/16] 0.0, 128
    %1092 = vxpose.xlu0.b32.cont [9/16] 0.0, 128
    %1093 = vxpose.xlu0.b32.cont [10/16] 0.0, 128
    %1094 = vxpose.xlu0.b32.cont [11/16] 0.0, 128
    %1095 = vxpose.xlu0.b32.cont [12/16] 0.0, 128
    %1096 = vxpose.xlu0.b32.cont [13/16] 0.0, 128
    %1097 = vxpose.xlu0.b32.cont [14/16] 0.0, 128
    %1098 = vxpose.xlu0.b32.cont [15/16] 0.0, 128
    %1099 = vxpose.xlu0.b32.end [16/16] 0.0, 128
    %v1100 = vpop.trf.xlu0
    %v1101 = vpop.trf.xlu0
    %v1102 = vpop.trf.xlu0
    %v1103 = vpop.trf.xlu0
    %v1104 = vpop.trf.xlu0
    %v1105 = vpop.trf.xlu0
    %v1106 = vpop.trf.xlu0
    %v1107 = vpop.trf.xlu0
    %v1108 = vpop.trf.xlu0
    %v1109 = vpop.trf.xlu0
    %v1110 = vpop.trf.xlu0
    %v1111 = vpop.trf.xlu0
    %v1112 = vpop.trf.xlu0
    %v1113 = vpop.trf.xlu0
    %v1114 = vpop.trf.xlu0
    %v1115 = vpop.trf.xlu0
    %v1117 = vsel %vm165, %v1100, 0
    %1119 = vmatprep.subr.mxu0 0.0
    %1120 = vmatpush1.msra.mxu0 %v660
    %1121 = vmatprep.subr.mxu0 0.0
    %1122 = vmatpush1.msra.mxu0 0.0
    %1123 = vmatprep.subr.mxu0 0.0
    %1124 = vmatpush1.msra.mxu0 0.0
    %1125 = vmatprep.subr.mxu0 0.0
    %1126 = vmatpush1.msra.mxu0 0.0
    %1127 = vmatprep.subr.mxu0 0.0
    %1128 = vmatpush1.msra.mxu0 0.0
    %1129 = vmatprep.subr.mxu0 0.0
    %1130 = vmatpush1.msra.mxu0 0.0
    %1131 = vmatprep.subr.mxu0 0.0
    %1132 = vmatpush1.msra.mxu0 0.0
    %1133 = vmatprep.subr.mxu0 0.0
    %1134 = vmatpush1.msra.mxu0 0.0
    %1135 = vmatprep.subr.mxu0 0.0
    %1136 = vmatpush1.msra.mxu0 0.0
    %1137 = vmatprep.subr.mxu0 0.0
    %1138 = vmatpush1.msra.mxu0 0.0
    %1139 = vmatprep.subr.mxu0 0.0
    %1140 = vmatpush1.msra.mxu0 0.0
    %1141 = vmatprep.subr.mxu0 0.0
    %1142 = vmatpush1.msra.mxu0 0.0
    %1143 = vmatprep.subr.mxu0 0.0
    %1144 = vmatpush1.msra.mxu0 0.0
    %1145 = vmatprep.subr.mxu0 0.0
    %1146 = vmatpush1.msra.mxu0 0.0
    %1147 = vmatprep.subr.mxu0 0.0
    %1148 = vmatpush1.msra.mxu0 0.0
    %1149 = vmatprep.subr.mxu0 0.0
    %1150 = vmatpush1.msra.mxu0 0.0
    %1151 = vmatprep.subr.mxu0 0.0
    %1152 = vmatpush1.msra.mxu0 0.0
    %1153 = vmatprep.subr.mxu0 0.0
    %1154 = vmatpush1.msra.mxu0 0.0
    %1155 = vmatprep.subr.mxu0 0.0
    %1156 = vmatpush1.msra.mxu0 0.0
    %1157 = vmatprep.subr.mxu0 0.0
    %1158 = vmatpush1.msra.mxu0 0.0
    %1159 = vmatprep.subr.mxu0 0.0
    %1160 = vmatpush1.msra.mxu0 0.0
    %1161 = vmatprep.subr.mxu0 0.0
    %1162 = vmatpush1.msra.mxu0 0.0
    %1163 = vmatprep.subr.mxu0 0.0
    %1164 = vmatpush1.msra.mxu0 0.0
    %1165 = vmatprep.subr.mxu0 0.0
    %1166 = vmatpush1.msra.mxu0 0.0
    %1167 = vmatprep.subr.mxu0 0.0
    %1168 = vmatpush1.msra.mxu0 0.0
    %1169 = vmatprep.subr.mxu0 0.0
    %1170 = vmatpush1.msra.mxu0 0.0
    %1171 = vmatprep.subr.mxu0 0.0
    %1172 = vmatpush1.msra.mxu0 0.0
    %1173 = vmatprep.subr.mxu0 0.0
    %1174 = vmatpush1.msra.mxu0 0.0
    %1175 = vmatprep.subr.mxu0 0.0
    %1176 = vmatpush1.msra.mxu0 0.0
    %1177 = vmatprep.subr.mxu0 0.0
    %1178 = vmatpush1.msra.mxu0 0.0
    %1179 = vmatprep.subr.mxu0 0.0
    %1180 = vmatpush1.msra.mxu0 0.0
    %1181 = vmatprep.subr.mxu0 0.0
    %1182 = vmatpush1.msra.mxu0 0.0
    %1183 = vmatprep.mubr.f32.mxu0 0.0
    %1184 = vmatmul.mubr.f32.gmra.mrb[0].mxu0 %v1117
    %v1185 = vpop.f32.mrb[0].mxu0
    %v1186 = vadd.f32 0.0, %v1185
    %v1187 = vpop.f32.mrb[0].mxu0
    %1188 = vdwg.mxu0
    %1189 = vxpose.xlu0.b32.start [1/16] %v162, 128
    %1190 = vxpose.xlu0.b32.cont [2/16] 0.0, 128
    %1191 = vxpose.xlu0.b32.cont [3/16] 0.0, 128
    %1192 = vxpose.xlu0.b32.cont [4/16] 0.0, 128
    %1193 = vxpose.xlu0.b32.cont [5/16] 0.0, 128
    %1194 = vxpose.xlu0.b32.cont [6/16] 0.0, 128
    %1195 = vxpose.xlu0.b32.cont [7/16] 0.0, 128
    %1196 = vxpose.xlu0.b32.cont [8/16] 0.0, 128
    %1197 = vxpose.xlu0.b32.cont [9/16] 0.0, 128
    %1198 = vxpose.xlu0.b32.cont [10/16] 0.0, 128
    %1199 = vxpose.xlu0.b32.cont [11/16] 0.0, 128
    %1200 = vxpose.xlu0.b32.cont [12/16] 0.0, 128
    %1201 = vxpose.xlu0.b32.cont [13/16] 0.0, 128
    %1202 = vxpose.xlu0.b32.cont [14/16] 0.0, 128
    %1203 = vxpose.xlu0.b32.cont [15/16] 0.0, 128
    %1204 = vxpose.xlu0.b32.end [16/16] 0.0, 128
    %v1205 = vpop.trf.xlu0
    %v1206 = vpop.trf.xlu0
    %v1207 = vpop.trf.xlu0
    %v1208 = vpop.trf.xlu0
    %v1209 = vpop.trf.xlu0
    %v1210 = vpop.trf.xlu0
    %v1211 = vpop.trf.xlu0
    %v1212 = vpop.trf.xlu0
    %v1213 = vpop.trf.xlu0
    %v1214 = vpop.trf.xlu0
    %v1215 = vpop.trf.xlu0
    %v1216 = vpop.trf.xlu0
    %v1217 = vpop.trf.xlu0
    %v1218 = vpop.trf.xlu0
    %v1219 = vpop.trf.xlu0
    %v1220 = vpop.trf.xlu0
    %v1222 = vsel %vm165, %v1205, 0
    %1224 = vmatprep.subr.mxu0 0.0
    %1225 = vmatpush1.msra.mxu0 %v661
    %1226 = vmatprep.subr.mxu0 0.0
    %1227 = vmatpush1.msra.mxu0 0.0
    %1228 = vmatprep.subr.mxu0 0.0
    %1229 = vmatpush1.msra.mxu0 0.0
    %1230 = vmatprep.subr.mxu0 0.0
    %1231 = vmatpush1.msra.mxu0 0.0
    %1232 = vmatprep.subr.mxu0 0.0
    %1233 = vmatpush1.msra.mxu0 0.0
    %1234 = vmatprep.subr.mxu0 0.0
    %1235 = vmatpush1.msra.mxu0 0.0
    %1236 = vmatprep.subr.mxu0 0.0
    %1237 = vmatpush1.msra.mxu0 0.0
    %1238 = vmatprep.subr.mxu0 0.0
    %1239 = vmatpush1.msra.mxu0 0.0
    %1240 = vmatprep.subr.mxu0 0.0
    %1241 = vmatpush1.msra.mxu0 0.0
    %1242 = vmatprep.subr.mxu0 0.0
    %1243 = vmatpush1.msra.mxu0 0.0
    %1244 = vmatprep.subr.mxu0 0.0
    %1245 = vmatpush1.msra.mxu0 0.0
    %1246 = vmatprep.subr.mxu0 0.0
    %1247 = vmatpush1.msra.mxu0 0.0
    %1248 = vmatprep.subr.mxu0 0.0
    %1249 = vmatpush1.msra.mxu0 0.0
    %1250 = vmatprep.subr.mxu0 0.0
    %1251 = vmatpush1.msra.mxu0 0.0
    %1252 = vmatprep.subr.mxu0 0.0
    %1253 = vmatpush1.msra.mxu0 0.0
    %1254 = vmatprep.subr.mxu0 0.0
    %1255 = vmatpush1.msra.mxu0 0.0
    %1256 = vmatprep.subr.mxu0 0.0
    %1257 = vmatpush1.msra.mxu0 0.0
    %1258 = vmatprep.subr.mxu0 0.0
    %1259 = vmatpush1.msra.mxu0 0.0
    %1260 = vmatprep.subr.mxu0 0.0
    %1261 = vmatpush1.msra.mxu0 0.0
    %1262 = vmatprep.subr.mxu0 0.0
    %1263 = vmatpush1.msra.mxu0 0.0
    %1264 = vmatprep.subr.mxu0 0.0
    %1265 = vmatpush1.msra.mxu0 0.0
    %1266 = vmatprep.subr.mxu0 0.0
    %1267 = vmatpush1.msra.mxu0 0.0
    %1268 = vmatprep.subr.mxu0 0.0
    %1269 = vmatpush1.msra.mxu0 0.0
    %1270 = vmatprep.subr.mxu0 0.0
    %1271 = vmatpush1.msra.mxu0 0.0
    %1272 = vmatprep.subr.mxu0 0.0
    %1273 = vmatpush1.msra.mxu0 0.0
    %1274 = vmatprep.subr.mxu0 0.0
    %1275 = vmatpush1.msra.mxu0 0.0
    %1276 = vmatprep.subr.mxu0 0.0
    %1277 = vmatpush1.msra.mxu0 0.0
    %1278 = vmatprep.subr.mxu0 0.0
    %1279 = vmatpush1.msra.mxu0 0.0
    %1280 = vmatprep.subr.mxu0 0.0
    %1281 = vmatpush1.msra.mxu0 0.0
    %1282 = vmatprep.subr.mxu0 0.0
    %1283 = vmatpush1.msra.mxu0 0.0
    %1284 = vmatprep.subr.mxu0 0.0
    %1285 = vmatpush1.msra.mxu0 0.0
    %1286 = vmatprep.subr.mxu0 0.0
    %1287 = vmatpush1.msra.mxu0 0.0
    %1288 = vmatprep.mubr.f32.mxu0 0.0
    %1289 = vmatmul.mubr.f32.gmra.mrb[0].mxu0 %v1222
    %v1290 = vpop.f32.mrb[0].mxu0
    %v1291 = vadd.f32 0.0, %v1290
    %v1292 = vpop.f32.mrb[0].mxu0
    %1293 = vdwg.mxu0
    %1294 = vxpose.xlu0.b32.start [1/16] %v163, 128
    %1295 = vxpose.xlu0.b32.cont [2/16] 0.0, 128
    %1296 = vxpose.xlu0.b32.cont [3/16] 0.0, 128
    %1297 = vxpose.xlu0.b32.cont [4/16] 0.0, 128
    %1298 = vxpose.xlu0.b32.cont [5/16] 0.0, 128
    %1299 = vxpose.xlu0.b32.cont [6/16] 0.0, 128
    %1300 = vxpose.xlu0.b32.cont [7/16] 0.0, 128
    %1301 = vxpose.xlu0.b32.cont [8/16] 0.0, 128
    %1302 = vxpose.xlu0.b32.cont [9/16] 0.0, 128
    %1303 = vxpose.xlu0.b32.cont [10/16] 0.0, 128
    %1304 = vxpose.xlu0.b32.cont [11/16] 0.0, 128
    %1305 = vxpose.xlu0.b32.cont [12/16] 0.0, 128
    %1306 = vxpose.xlu0.b32.cont [13/16] 0.0, 128
    %1307 = vxpose.xlu0.b32.cont [14/16] 0.0, 128
    %1308 = vxpose.xlu0.b32.cont [15/16] 0.0, 128
    %1309 = vxpose.xlu0.b32.end [16/16] 0.0, 128
    %v1310 = vpop.trf.xlu0
    %v1311 = vpop.trf.xlu0
    %v1312 = vpop.trf.xlu0
    %v1313 = vpop.trf.xlu0
    %v1314 = vpop.trf.xlu0
    %v1315 = vpop.trf.xlu0
    %v1316 = vpop.trf.xlu0
    %v1317 = vpop.trf.xlu0
    %v1318 = vpop.trf.xlu0
    %v1319 = vpop.trf.xlu0
    %v1320 = vpop.trf.xlu0
    %v1321 = vpop.trf.xlu0
    %v1322 = vpop.trf.xlu0
    %v1323 = vpop.trf.xlu0
    %v1324 = vpop.trf.xlu0
    %v1325 = vpop.trf.xlu0
    %v1327 = vsel %vm165, %v1310, 0
    %1329 = vmatprep.subr.mxu0 0.0
    %1330 = vmatpush1.msra.mxu0 %v662
    %1331 = vmatprep.subr.mxu0 0.0
    %1332 = vmatpush1.msra.mxu0 0.0
    %1333 = vmatprep.subr.mxu0 0.0
    %1334 = vmatpush1.msra.mxu0 0.0
    %1335 = vmatprep.subr.mxu0 0.0
    %1336 = vmatpush1.msra.mxu0 0.0
    %1337 = vmatprep.subr.mxu0 0.0
    %1338 = vmatpush1.msra.mxu0 0.0
    %1339 = vmatprep.subr.mxu0 0.0
    %1340 = vmatpush1.msra.mxu0 0.0
    %1341 = vmatprep.subr.mxu0 0.0
    %1342 = vmatpush1.msra.mxu0 0.0
    %1343 = vmatprep.subr.mxu0 0.0
    %1344 = vmatpush1.msra.mxu0 0.0
    %1345 = vmatprep.subr.mxu0 0.0
    %1346 = vmatpush1.msra.mxu0 0.0
    %1347 = vmatprep.subr.mxu0 0.0
    %1348 = vmatpush1.msra.mxu0 0.0
    %1349 = vmatprep.subr.mxu0 0.0
    %1350 = vmatpush1.msra.mxu0 0.0
    %1351 = vmatprep.subr.mxu0 0.0
    %1352 = vmatpush1.msra.mxu0 0.0
    %1353 = vmatprep.subr.mxu0 0.0
    %1354 = vmatpush1.msra.mxu0 0.0
    %1355 = vmatprep.subr.mxu0 0.0
    %1356 = vmatpush1.msra.mxu0 0.0
    %1357 = vmatprep.subr.mxu0 0.0
    %1358 = vmatpush1.msra.mxu0 0.0
    %1359 = vmatprep.subr.mxu0 0.0
    %1360 = vmatpush1.msra.mxu0 0.0
    %1361 = vmatprep.subr.mxu0 0.0
    %1362 = vmatpush1.msra.mxu0 0.0
    %1363 = vmatprep.subr.mxu0 0.0
    %1364 = vmatpush1.msra.mxu0 0.0
    %1365 = vmatprep.subr.mxu0 0.0
    %1366 = vmatpush1.msra.mxu0 0.0
    %1367 = vmatprep.subr.mxu0 0.0
    %1368 = vmatpush1.msra.mxu0 0.0
    %1369 = vmatprep.subr.mxu0 0.0
    %1370 = vmatpush1.msra.mxu0 0.0
    %1371 = vmatprep.subr.mxu0 0.0
    %1372 = vmatpush1.msra.mxu0 0.0
    %1373 = vmatprep.subr.mxu0 0.0
    %1374 = vmatpush1.msra.mxu0 0.0
    %1375 = vmatprep.subr.mxu0 0.0
    %1376 = vmatpush1.msra.mxu0 0.0
    %1377 = vmatprep.subr.mxu0 0.0
    %1378 = vmatpush1.msra.mxu0 0.0
    %1379 = vmatprep.subr.mxu0 0.0
    %1380 = vmatpush1.msra.mxu0 0.0
    %1381 = vmatprep.subr.mxu0 0.0
    %1382 = vmatpush1.msra.mxu0 0.0
    %1383 = vmatprep.subr.mxu0 0.0
    %1384 = vmatpush1.msra.mxu0 0.0
    %1385 = vmatprep.subr.mxu0 0.0
    %1386 = vmatpush1.msra.mxu0 0.0
    %1387 = vmatprep.subr.mxu0 0.0
    %1388 = vmatpush1.msra.mxu0 0.0
    %1389 = vmatprep.subr.mxu0 0.0
    %1390 = vmatpush1.msra.mxu0 0.0
    %1391 = vmatprep.subr.mxu0 0.0
    %1392 = vmatpush1.msra.mxu0 0.0
    %1393 = vmatprep.mubr.f32.mxu0 0.0
    %1394 = vmatmul.mubr.f32.gmra.mrb[0].mxu0 %v1327
    %v1395 = vpop.f32.mrb[0].mxu0
    %v1396 = vadd.f32 0.0, %v1395
    %v1397 = vpop.f32.mrb[0].mxu0
    %1398 = vdwg.mxu0
    %1399 = vxpose.xlu0.b32.start [1/16] %v164, 128
    %1400 = vxpose.xlu0.b32.cont [2/16] 0.0, 128
    %1401 = vxpose.xlu0.b32.cont [3/16] 0.0, 128
    %1402 = vxpose.xlu0.b32.cont [4/16] 0.0, 128
    %1403 = vxpose.xlu0.b32.cont [5/16] 0.0, 128
    %1404 = vxpose.xlu0.b32.cont [6/16] 0.0, 128
    %1405 = vxpose.xlu0.b32.cont [7/16] 0.0, 128
    %1406 = vxpose.xlu0.b32.cont [8/16] 0.0, 128
    %1407 = vxpose.xlu0.b32.cont [9/16] 0.0, 128
    %1408 = vxpose.xlu0.b32.cont [10/16] 0.0, 128
    %1409 = vxpose.xlu0.b32.cont [11/16] 0.0, 128
    %1410 = vxpose.xlu0.b32.cont [12/16] 0.0, 128
    %1411 = vxpose.xlu0.b32.cont [13/16] 0.0, 128
    %1412 = vxpose.xlu0.b32.cont [14/16] 0.0, 128
    %1413 = vxpose.xlu0.b32.cont [15/16] 0.0, 128
    %1414 = vxpose.xlu0.b32.end [16/16] 0.0, 128
    %v1415 = vpop.trf.xlu0
    %v1416 = vpop.trf.xlu0
    %v1417 = vpop.trf.xlu0
    %v1418 = vpop.trf.xlu0
    %v1419 = vpop.trf.xlu0
    %v1420 = vpop.trf.xlu0
    %v1421 = vpop.trf.xlu0
    %v1422 = vpop.trf.xlu0
    %v1423 = vpop.trf.xlu0
    %v1424 = vpop.trf.xlu0
    %v1425 = vpop.trf.xlu0
    %v1426 = vpop.trf.xlu0
    %v1427 = vpop.trf.xlu0
    %v1428 = vpop.trf.xlu0
    %v1429 = vpop.trf.xlu0
    %v1430 = vpop.trf.xlu0
    %v1432 = vsel %vm165, %v1415, 0
    %1434 = vmatprep.subr.mxu0 0.0
    %1435 = vmatpush1.msra.mxu0 %v663
    %1436 = vmatprep.subr.mxu0 0.0
    %1437 = vmatpush1.msra.mxu0 0.0
    %1438 = vmatprep.subr.mxu0 0.0
    %1439 = vmatpush1.msra.mxu0 0.0
    %1440 = vmatprep.subr.mxu0 0.0
    %1441 = vmatpush1.msra.mxu0 0.0
    %1442 = vmatprep.subr.mxu0 0.0
    %1443 = vmatpush1.msra.mxu0 0.0
    %1444 = vmatprep.subr.mxu0 0.0
    %1445 = vmatpush1.msra.mxu0 0.0
    %1446 = vmatprep.subr.mxu0 0.0
    %1447 = vmatpush1.msra.mxu0 0.0
    %1448 = vmatprep.subr.mxu0 0.0
    %1449 = vmatpush1.msra.mxu0 0.0
    %1450 = vmatprep.subr.mxu0 0.0
    %1451 = vmatpush1.msra.mxu0 0.0
    %1452 = vmatprep.subr.mxu0 0.0
    %1453 = vmatpush1.msra.mxu0 0.0
    %1454 = vmatprep.subr.mxu0 0.0
    %1455 = vmatpush1.msra.mxu0 0.0
    %1456 = vmatprep.subr.mxu0 0.0
    %1457 = vmatpush1.msra.mxu0 0.0
    %1458 = vmatprep.subr.mxu0 0.0
    %1459 = vmatpush1.msra.mxu0 0.0
    %1460 = vmatprep.subr.mxu0 0.0
    %1461 = vmatpush1.msra.mxu0 0.0
    %1462 = vmatprep.subr.mxu0 0.0
    %1463 = vmatpush1.msra.mxu0 0.0
    %1464 = vmatprep.subr.mxu0 0.0
    %1465 = vmatpush1.msra.mxu0 0.0
    %1466 = vmatprep.subr.mxu0 0.0
    %1467 = vmatpush1.msra.mxu0 0.0
    %1468 = vmatprep.subr.mxu0 0.0
    %1469 = vmatpush1.msra.mxu0 0.0
    %1470 = vmatprep.subr.mxu0 0.0
    %1471 = vmatpush1.msra.mxu0 0.0
    %1472 = vmatprep.subr.mxu0 0.0
    %1473 = vmatpush1.msra.mxu0 0.0
    %1474 = vmatprep.subr.mxu0 0.0
    %1475 = vmatpush1.msra.mxu0 0.0
    %1476 = vmatprep.subr.mxu0 0.0
    %1477 = vmatpush1.msra.mxu0 0.0
    %1478 = vmatprep.subr.mxu0 0.0
    %1479 = vmatpush1.msra.mxu0 0.0
    %1480 = vmatprep.subr.mxu0 0.0
    %1481 = vmatpush1.msra.mxu0 0.0
    %1482 = vmatprep.subr.mxu0 0.0
    %1483 = vmatpush1.msra.mxu0 0.0
    %1484 = vmatprep.subr.mxu0 0.0
    %1485 = vmatpush1.msra.mxu0 0.0
    %1486 = vmatprep.subr.mxu0 0.0
    %1487 = vmatpush1.msra.mxu0 0.0
    %1488 = vmatprep.subr.mxu0 0.0
    %1489 = vmatpush1.msra.mxu0 0.0
    %1490 = vmatprep.subr.mxu0 0.0
    %1491 = vmatpush1.msra.mxu0 0.0
    %1492 = vmatprep.subr.mxu0 0.0
    %1493 = vmatpush1.msra.mxu0 0.0
    %1494 = vmatprep.subr.mxu0 0.0
    %1495 = vmatpush1.msra.mxu0 0.0
    %1496 = vmatprep.subr.mxu0 0.0
    %1497 = vmatpush1.msra.mxu0 0.0
    %1498 = vmatprep.mubr.f32.mxu0 0.0
    %1499 = vmatmul.mubr.f32.gmra.mrb[0].mxu0 %v1432
    %v1500 = vpop.f32.mrb[0].mxu0
    %v1501 = vadd.f32 0.0, %v1500
    %v1502 = vpop.f32.mrb[0].mxu0
    %1503 = vdwg.mxu0
    %v1504 = vmul.f32 %v766, %v619
    %v1505 = vmul.f32 %v871, %v624
    %v1506 = vmul.f32 %v976, %v629
    %v1507 = vmul.f32 %v1081, %v634
    %v1508 = vmul.f32 %v1186, %v639
    %v1509 = vmul.f32 %v1291, %v644
    %v1510 = vmul.f32 %v1396, %v649
    %v1511 = vmul.f32 %v1501, %v654
    %v1513 = vlaneseq
    %v1514 = vshrl.u32 %v1513, 7
    %v1515 = vsub.s32 0, %v1514
    %v1516 = vrot.slane %v76, %v1515
    %v1518 = vadd.f32 %v1504, %v1516
    %v1519 = vadd.f32 %v1505, %v1516
    %v1520 = vadd.f32 %v1506, %v1516
    %v1521 = vadd.f32 %v1507, %v1516
    %v1522 = vadd.f32 %v1508, %v1516
    %v1523 = vadd.f32 %v1509, %v1516
    %v1524 = vadd.f32 %v1510, %v1516
    %v1525 = vadd.f32 %v1511, %v1516
    %vm1526 = vcmask 261120
    %v1528 = vsel %vm1526, %v1518, 0
    %v1531 = vsel %vm1526, %v1519, 0
    %v1534 = vsel %vm1526, %v1520, 0
    %v1537 = vsel %vm1526, %v1521, 0
    %v1540 = vsel %vm1526, %v1522, 0
    %v1543 = vsel %vm1526, %v1523, 0
    %v1546 = vsel %vm1526, %v1524, 0
    %v1549 = vsel %vm1526, %v1525, 0
    %1551 = vmatprep.subr.mxu0 0.0
    %1552 = vmatpush1.msra.mxu0 %v92
    %1553 = vmatprep.subr.mxu0 0.0
    %1554 = vmatpush1.msra.mxu0 %v93
    %1555 = vmatprep.subr.mxu0 0.0
    %1556 = vmatpush1.msra.mxu0 %v94
    %1557 = vmatprep.subr.mxu0 0.0
    %1558 = vmatpush1.msra.mxu0 %v95
    %1559 = vmatprep.subr.mxu0 0.0
    %1560 = vmatpush1.msra.mxu0 0.0
    %1561 = vmatprep.subr.mxu0 0.0
    %1562 = vmatpush1.msra.mxu0 0.0
    %1563 = vmatprep.subr.mxu0 0.0
    %1564 = vmatpush1.msra.mxu0 0.0
    %1565 = vmatprep.subr.mxu0 0.0
    %1566 = vmatpush1.msra.mxu0 0.0
    %1567 = vmatprep.subr.mxu0 0.0
    %1568 = vmatpush1.msra.mxu0 0.0
    %1569 = vmatprep.subr.mxu0 0.0
    %1570 = vmatpush1.msra.mxu0 0.0
    %1571 = vmatprep.subr.mxu0 0.0
    %1572 = vmatpush1.msra.mxu0 0.0
    %1573 = vmatprep.subr.mxu0 0.0
    %1574 = vmatpush1.msra.mxu0 0.0
    %1575 = vmatprep.subr.mxu0 0.0
    %1576 = vmatpush1.msra.mxu0 0.0
    %1577 = vmatprep.subr.mxu0 0.0
    %1578 = vmatpush1.msra.mxu0 0.0
    %1579 = vmatprep.subr.mxu0 0.0
    %1580 = vmatpush1.msra.mxu0 0.0
    %1581 = vmatprep.subr.mxu0 0.0
    %1582 = vmatpush1.msra.mxu0 0.0
    %1583 = vmatprep.subr.mxu0 0.0
    %1584 = vmatpush1.msra.mxu0 0.0
    %1585 = vmatprep.subr.mxu0 0.0
    %1586 = vmatpush1.msra.mxu0 0.0
    %1587 = vmatprep.subr.mxu0 0.0
    %1588 = vmatpush1.msra.mxu0 0.0
    %1589 = vmatprep.subr.mxu0 0.0
    %1590 = vmatpush1.msra.mxu0 0.0
    %1591 = vmatprep.subr.mxu0 0.0
    %1592 = vmatpush1.msra.mxu0 0.0
    %1593 = vmatprep.subr.mxu0 0.0
    %1594 = vmatpush1.msra.mxu0 0.0
    %1595 = vmatprep.subr.mxu0 0.0
    %1596 = vmatpush1.msra.mxu0 0.0
    %1597 = vmatprep.subr.mxu0 0.0
    %1598 = vmatpush1.msra.mxu0 0.0
    %1599 = vmatprep.subr.mxu0 0.0
    %1600 = vmatpush1.msra.mxu0 0.0
    %1601 = vmatprep.subr.mxu0 0.0
    %1602 = vmatpush1.msra.mxu0 0.0
    %1603 = vmatprep.subr.mxu0 0.0
    %1604 = vmatpush1.msra.mxu0 0.0
    %1605 = vmatprep.subr.mxu0 0.0
    %1606 = vmatpush1.msra.mxu0 0.0
    %1607 = vmatprep.subr.mxu0 0.0
    %1608 = vmatpush1.msra.mxu0 0.0
    %1609 = vmatprep.subr.mxu0 0.0
    %1610 = vmatpush1.msra.mxu0 0.0
    %1611 = vmatprep.subr.mxu0 0.0
    %1612 = vmatpush1.msra.mxu0 0.0
    %1613 = vmatprep.subr.mxu0 0.0
    %1614 = vmatpush1.msra.mxu0 0.0
    %1615 = vmatprep.mubr.f32.mxu0 0.0
    %1616 = vmatmul.mubr.f32.gmra.mrb[0].mxu0 %v1528
    %v1617 = vpop.f32.mrb[0].mxu0
    %v1618 = vadd.f32 0.0, %v1617
    %v1619 = vpop.f32.mrb[0].mxu0
    %1620 = vmatprep.mubr.f32.mxu0 0.0
    %1621 = vmatmul.mubr.f32.gmra.mrb[0].mxu0 %v1531
    %v1622 = vpop.f32.mrb[0].mxu0
    %v1623 = vadd.f32 0.0, %v1622
    %v1624 = vpop.f32.mrb[0].mxu0
    %1625 = vmatprep.mubr.f32.mxu0 0.0
    %1626 = vmatmul.mubr.f32.gmra.mrb[0].mxu0 %v1534
    %v1627 = vpop.f32.mrb[0].mxu0
    %v1628 = vadd.f32 0.0, %v1627
    %v1629 = vpop.f32.mrb[0].mxu0
    %1630 = vmatprep.mubr.f32.mxu0 0.0
    %1631 = vmatmul.mubr.f32.gmra.mrb[0].mxu0 %v1537
    %v1632 = vpop.f32.mrb[0].mxu0
    %v1633 = vadd.f32 0.0, %v1632
    %v1634 = vpop.f32.mrb[0].mxu0
    %1635 = vmatprep.mubr.f32.mxu0 0.0
    %1636 = vmatmul.mubr.f32.gmra.mrb[0].mxu0 %v1540
    %v1637 = vpop.f32.mrb[0].mxu0
    %v1638 = vadd.f32 0.0, %v1637
    %v1639 = vpop.f32.mrb[0].mxu0
    %1640 = vmatprep.mubr.f32.mxu0 0.0
    %1641 = vmatmul.mubr.f32.gmra.mrb[0].mxu0 %v1543
    %v1642 = vpop.f32.mrb[0].mxu0
    %v1643 = vadd.f32 0.0, %v1642
    %v1644 = vpop.f32.mrb[0].mxu0
    %1645 = vmatprep.mubr.f32.mxu0 0.0
    %1646 = vmatmul.mubr.f32.gmra.mrb[0].mxu0 %v1546
    %v1647 = vpop.f32.mrb[0].mxu0
    %v1648 = vadd.f32 0.0, %v1647
    %v1649 = vpop.f32.mrb[0].mxu0
    %1650 = vmatprep.mubr.f32.mxu0 0.0
    %1651 = vmatmul.mubr.f32.gmra.mrb[0].mxu0 %v1549
    %v1652 = vpop.f32.mrb[0].mxu0
    %v1653 = vadd.f32 0.0, %v1652
    %v1654 = vpop.f32.mrb[0].mxu0
    %1655 = vdwg.mxu0
    %v1657 = vlaneseq
    %v1658 = vshrl.u32 %v1657, 7
    %v1659 = vsub.s32 0, %v1658
    %v1660 = vrot.slane %v105, %v1659
    %v1662 = vadd.f32 %v1618, %v1660
    %v1663 = vadd.f32 %v1623, %v1660
    %v1664 = vadd.f32 %v1628, %v1660
    %v1665 = vadd.f32 %v1633, %v1660
    %v1666 = vadd.f32 %v1638, %v1660
    %v1667 = vadd.f32 %v1643, %v1660
    %v1668 = vadd.f32 %v1648, %v1660
    %v1669 = vadd.f32 %v1653, %v1660
    %v1671 = vsel %vm1526, 0.0, 0
    %1673 = vmatprep.subr.mxu0 0.0
    %1674 = vmatpush1.msra.mxu0 %v100
    %1675 = vmatprep.subr.mxu0 0.0
    %1676 = vmatpush1.msra.mxu0 %v101
    %1677 = vmatprep.subr.mxu0 0.0
    %1678 = vmatpush1.msra.mxu0 %v102
    %1679 = vmatprep.subr.mxu0 0.0
    %1680 = vmatpush1.msra.mxu0 %v103
    %1681 = vmatprep.subr.mxu0 0.0
    %1682 = vmatpush1.msra.mxu0 0.0
    %1683 = vmatprep.subr.mxu0 0.0
    %1684 = vmatpush1.msra.mxu0 0.0
    %1685 = vmatprep.subr.mxu0 0.0
    %1686 = vmatpush1.msra.mxu0 0.0
    %1687 = vmatprep.subr.mxu0 0.0
    %1688 = vmatpush1.msra.mxu0 0.0
    %1689 = vmatprep.subr.mxu0 0.0
    %1690 = vmatpush1.msra.mxu0 0.0
    %1691 = vmatprep.subr.mxu0 0.0
    %1692 = vmatpush1.msra.mxu0 0.0
    %1693 = vmatprep.subr.mxu0 0.0
    %1694 = vmatpush1.msra.mxu0 0.0
    %1695 = vmatprep.subr.mxu0 0.0
    %1696 = vmatpush1.msra.mxu0 0.0
    %1697 = vmatprep.subr.mxu0 0.0
    %1698 = vmatpush1.msra.mxu0 0.0
    %1699 = vmatprep.subr.mxu0 0.0
    %1700 = vmatpush1.msra.mxu0 0.0
    %1701 = vmatprep.subr.mxu0 0.0
    %1702 = vmatpush1.msra.mxu0 0.0
    %1703 = vmatprep.subr.mxu0 0.0
    %1704 = vmatpush1.msra.mxu0 0.0
    %1705 = vmatprep.subr.mxu0 0.0
    %1706 = vmatpush1.msra.mxu0 0.0
    %1707 = vmatprep.subr.mxu0 0.0
    %1708 = vmatpush1.msra.mxu0 0.0
    %1709 = vmatprep.subr.mxu0 0.0
    %1710 = vmatpush1.msra.mxu0 0.0
    %1711 = vmatprep.subr.mxu0 0.0
    %1712 = vmatpush1.msra.mxu0 0.0
    %1713 = vmatprep.subr.mxu0 0.0
    %1714 = vmatpush1.msra.mxu0 0.0
    %1715 = vmatprep.subr.mxu0 0.0
    %1716 = vmatpush1.msra.mxu0 0.0
    %1717 = vmatprep.subr.mxu0 0.0
    %1718 = vmatpush1.msra.mxu0 0.0
    %1719 = vmatprep.subr.mxu0 0.0
    %1720 = vmatpush1.msra.mxu0 0.0
    %1721 = vmatprep.subr.mxu0 0.0
    %1722 = vmatpush1.msra.mxu0 0.0
    %1723 = vmatprep.subr.mxu0 0.0
    %1724 = vmatpush1.msra.mxu0 0.0
    %1725 = vmatprep.subr.mxu0 0.0
    %1726 = vmatpush1.msra.mxu0 0.0
    %1727 = vmatprep.subr.mxu0 0.0
    %1728 = vmatpush1.msra.mxu0 0.0
    %1729 = vmatprep.subr.mxu0 0.0
    %1730 = vmatpush1.msra.mxu0 0.0
    %1731 = vmatprep.subr.mxu0 0.0
    %1732 = vmatpush1.msra.mxu0 0.0
    %1733 = vmatprep.subr.mxu0 0.0
    %1734 = vmatpush1.msra.mxu0 0.0
    %1735 = vmatprep.subr.mxu0 0.0
    %1736 = vmatpush1.msra.mxu0 0.0
    %1737 = vmatprep.mubr.f32.mxu0 0.0
    %1738 = vmatmul.mubr.f32.gmra.mrb[0].mxu0 %v1671
    %v1739 = vpop.f32.mrb[0].mxu0
    %v1740 = vadd.f32 0.0, %v1739
    %v1741 = vpop.f32.mrb[0].mxu0
    %1742 = vdwg.mxu0
    %v1743 = vadd.f32 %v1662, %v1740
    %v1744 = vxor.u32 %v1743, 2147483648
    %v1745 = vmul.f32 %v1744, 1.442695
    %v1746 = vpow.pop %v1745
    %v1747 = vadd.f32 %v1746, 1.0
    %v1748 = vrcp.pop %v1747
    %v1749 = vmul.f32 1.0, %v1748
    %v1750 = vmul.f32 %v1749, 2.0
    %v1751 = vsub.f32 %v1750, 1.0
    %v1752 = vmul.f32 %v1749, 0.0
    %1754 = vrot.lane.b32.xlu0 %v1751, 64
    %v1755 = vpop.permute.xlu0 %1754
    %v1757 = vmul.f32 %v1749, %v1755
    %1759 = vrot.lane.b32.xlu0 %v1757, 32
    %v1760 = vpop.permute.xlu0 %1759
    %v1762 = vadd.f32 %v1752, %v1760
    %v1763 = vtanh.pop %v1762
    %1765 = vrot.lane.b32.xlu0 %v1763, 64
    %v1766 = vpop.permute.xlu0 %1765
    %v1768 = vmul.f32 %v1749, %v1766
    %1770 = vrot.lane.b32.xlu0 %v1768, 32
    %v1771 = vpop.permute.xlu0 %1770
    %v1772 = vsel %vm1526, %v1771, 0
    %1774 = vmatprep.subr.mxu0 0.0
    %1775 = vmatpush1.msra.mxu0 %v100
    %1776 = vmatprep.subr.mxu0 0.0
    %1777 = vmatpush1.msra.mxu0 %v101
    %1778 = vmatprep.subr.mxu0 0.0
    %1779 = vmatpush1.msra.mxu0 %v102
    %1780 = vmatprep.subr.mxu0 0.0
    %1781 = vmatpush1.msra.mxu0 %v103
    %1782 = vmatprep.subr.mxu0 0.0
    %1783 = vmatpush1.msra.mxu0 0.0
    %1784 = vmatprep.subr.mxu0 0.0
    %1785 = vmatpush1.msra.mxu0 0.0
    %1786 = vmatprep.subr.mxu0 0.0
    %1787 = vmatpush1.msra.mxu0 0.0
    %1788 = vmatprep.subr.mxu0 0.0
    %1789 = vmatpush1.msra.mxu0 0.0
    %1790 = vmatprep.subr.mxu0 0.0
    %1791 = vmatpush1.msra.mxu0 0.0
    %1792 = vmatprep.subr.mxu0 0.0
    %1793 = vmatpush1.msra.mxu0 0.0
    %1794 = vmatprep.subr.mxu0 0.0
    %1795 = vmatpush1.msra.mxu0 0.0
    %1796 = vmatprep.subr.mxu0 0.0
    %1797 = vmatpush1.msra.mxu0 0.0
    %1798 = vmatprep.subr.mxu0 0.0
    %1799 = vmatpush1.msra.mxu0 0.0
    %1800 = vmatprep.subr.mxu0 0.0
    %1801 = vmatpush1.msra.mxu0 0.0
    %1802 = vmatprep.subr.mxu0 0.0
    %1803 = vmatpush1.msra.mxu0 0.0
    %1804 = vmatprep.subr.mxu0 0.0
    %1805 = vmatpush1.msra.mxu0 0.0
    %1806 = vmatprep.subr.mxu0 0.0
    %1807 = vmatpush1.msra.mxu0 0.0
    %1808 = vmatprep.subr.mxu0 0.0
    %1809 = vmatpush1.msra.mxu0 0.0
    %1810 = vmatprep.subr.mxu0 0.0
    %1811 = vmatpush1.msra.mxu0 0.0
    %1812 = vmatprep.subr.mxu0 0.0
    %1813 = vmatpush1.msra.mxu0 0.0
    %1814 = vmatprep.subr.mxu0 0.0
    %1815 = vmatpush1.msra.mxu0 0.0
    %1816 = vmatprep.subr.mxu0 0.0
    %1817 = vmatpush1.msra.mxu0 0.0
    %1818 = vmatprep.subr.mxu0 0.0
    %1819 = vmatpush1.msra.mxu0 0.0
    %1820 = vmatprep.subr.mxu0 0.0
    %1821 = vmatpush1.msra.mxu0 0.0
    %1822 = vmatprep.subr.mxu0 0.0
    %1823 = vmatpush1.msra.mxu0 0.0
    %1824 = vmatprep.subr.mxu0 0.0
    %1825 = vmatpush1.msra.mxu0 0.0
    %1826 = vmatprep.subr.mxu0 0.0
    %1827 = vmatpush1.msra.mxu0 0.0
    %1828 = vmatprep.subr.mxu0 0.0
    %1829 = vmatpush1.msra.mxu0 0.0
    %1830 = vmatprep.subr.mxu0 0.0
    %1831 = vmatpush1.msra.mxu0 0.0
    %1832 = vmatprep.subr.mxu0 0.0
    %1833 = vmatpush1.msra.mxu0 0.0
    %1834 = vmatprep.subr.mxu0 0.0
    %1835 = vmatpush1.msra.mxu0 0.0
    %1836 = vmatprep.subr.mxu0 0.0
    %1837 = vmatpush1.msra.mxu0 0.0
    %1838 = vmatprep.mubr.f32.mxu0 0.0
    %1839 = vmatmul.mubr.f32.gmra.mrb[0].mxu0 %v1772
    %v1840 = vpop.f32.mrb[0].mxu0
    %v1841 = vadd.f32 0.0, %v1840
    %v1842 = vpop.f32.mrb[0].mxu0
    %1843 = vdwg.mxu0
    %v1844 = vadd.f32 %v1663, %v1841
    %v1845 = vxor.u32 %v1844, 2147483648
    %v1846 = vmul.f32 %v1845, 1.442695
    %v1847 = vpow.pop %v1846
    %v1848 = vadd.f32 %v1847, 1.0
    %v1849 = vrcp.pop %v1848
    %v1850 = vmul.f32 1.0, %v1849
    %v1851 = vmul.f32 %v1850, 2.0
    %v1852 = vsub.f32 %v1851, 1.0
    %v1853 = vmul.f32 %v1850, %v1762
    %1855 = vrot.lane.b32.xlu0 %v1852, 64
    %v1856 = vpop.permute.xlu0 %1855
    %v1858 = vmul.f32 %v1850, %v1856
    %1860 = vrot.lane.b32.xlu0 %v1858, 32
    %v1861 = vpop.permute.xlu0 %1860
    %v1863 = vadd.f32 %v1853, %v1861
    %v1864 = vtanh.pop %v1863
    %1866 = vrot.lane.b32.xlu0 %v1864, 64
    %v1867 = vpop.permute.xlu0 %1866
    %v1869 = vmul.f32 %v1850, %v1867
    %1871 = vrot.lane.b32.xlu0 %v1869, 32
    %v1872 = vpop.permute.xlu0 %1871
    %v1873 = vsel %vm1526, %v1872, 0
    %1875 = vmatprep.subr.mxu0 0.0
    %1876 = vmatpush1.msra.mxu0 %v100
    %1877 = vmatprep.subr.mxu0 0.0
    %1878 = vmatpush1.msra.mxu0 %v101
    %1879 = vmatprep.subr.mxu0 0.0
    %1880 = vmatpush1.msra.mxu0 %v102
    %1881 = vmatprep.subr.mxu0 0.0
    %1882 = vmatpush1.msra.mxu0 %v103
    %1883 = vmatprep.subr.mxu0 0.0
    %1884 = vmatpush1.msra.mxu0 0.0
    %1885 = vmatprep.subr.mxu0 0.0
    %1886 = vmatpush1.msra.mxu0 0.0
    %1887 = vmatprep.subr.mxu0 0.0
    %1888 = vmatpush1.msra.mxu0 0.0
    %1889 = vmatprep.subr.mxu0 0.0
    %1890 = vmatpush1.msra.mxu0 0.0
    %1891 = vmatprep.subr.mxu0 0.0
    %1892 = vmatpush1.msra.mxu0 0.0
    %1893 = vmatprep.subr.mxu0 0.0
    %1894 = vmatpush1.msra.mxu0 0.0
    %1895 = vmatprep.subr.mxu0 0.0
    %1896 = vmatpush1.msra.mxu0 0.0
    %1897 = vmatprep.subr.mxu0 0.0
    %1898 = vmatpush1.msra.mxu0 0.0
    %1899 = vmatprep.subr.mxu0 0.0
    %1900 = vmatpush1.msra.mxu0 0.0
    %1901 = vmatprep.subr.mxu0 0.0
    %1902 = vmatpush1.msra.mxu0 0.0
    %1903 = vmatprep.subr.mxu0 0.0
    %1904 = vmatpush1.msra.mxu0 0.0
    %1905 = vmatprep.subr.mxu0 0.0
    %1906 = vmatpush1.msra.mxu0 0.0
    %1907 = vmatprep.subr.mxu0 0.0
    %1908 = vmatpush1.msra.mxu0 0.0
    %1909 = vmatprep.subr.mxu0 0.0
    %1910 = vmatpush1.msra.mxu0 0.0
    %1911 = vmatprep.subr.mxu0 0.0
    %1912 = vmatpush1.msra.mxu0 0.0
    %1913 = vmatprep.subr.mxu0 0.0
    %1914 = vmatpush1.msra.mxu0 0.0
    %1915 = vmatprep.subr.mxu0 0.0
    %1916 = vmatpush1.msra.mxu0 0.0
    %1917 = vmatprep.subr.mxu0 0.0
    %1918 = vmatpush1.msra.mxu0 0.0
    %1919 = vmatprep.subr.mxu0 0.0
    %1920 = vmatpush1.msra.mxu0 0.0
    %1921 = vmatprep.subr.mxu0 0.0
    %1922 = vmatpush1.msra.mxu0 0.0
    %1923 = vmatprep.subr.mxu0 0.0
    %1924 = vmatpush1.msra.mxu0 0.0
    %1925 = vmatprep.subr.mxu0 0.0
    %1926 = vmatpush1.msra.mxu0 0.0
    %1927 = vmatprep.subr.mxu0 0.0
    %1928 = vmatpush1.msra.mxu0 0.0
    %1929 = vmatprep.subr.mxu0 0.0
    %1930 = vmatpush1.msra.mxu0 0.0
    %1931 = vmatprep.subr.mxu0 0.0
    %1932 = vmatpush1.msra.mxu0 0.0
    %1933 = vmatprep.subr.mxu0 0.0
    %1934 = vmatpush1.msra.mxu0 0.0
    %1935 = vmatprep.subr.mxu0 0.0
    %1936 = vmatpush1.msra.mxu0 0.0
    %1937 = vmatprep.subr.mxu0 0.0
    %1938 = vmatpush1.msra.mxu0 0.0
    %1939 = vmatprep.mubr.f32.mxu0 0.0
    %1940 = vmatmul.mubr.f32.gmra.mrb[0].mxu0 %v1873
    %v1941 = vpop.f32.mrb[0].mxu0
    %v1942 = vadd.f32 0.0, %v1941
    %v1943 = vpop.f32.mrb[0].mxu0
    %1944 = vdwg.mxu0
    %v1945 = vadd.f32 %v1664, %v1942
    %v1946 = vxor.u32 %v1945, 2147483648
    %v1947 = vmul.f32 %v1946, 1.442695
    %v1948 = vpow.pop %v1947
    %v1949 = vadd.f32 %v1948, 1.0
    %v1950 = vrcp.pop %v1949
    %v1951 = vmul.f32 1.0, %v1950
    %v1952 = vmul.f32 %v1951, 2.0
    %v1953 = vsub.f32 %v1952, 1.0
    %v1954 = vmul.f32 %v1951, %v1863
    %1956 = vrot.lane.b32.xlu0 %v1953, 64
    %v1957 = vpop.permute.xlu0 %1956
    %v1959 = vmul.f32 %v1951, %v1957
    %1961 = vrot.lane.b32.xlu0 %v1959, 32
    %v1962 = vpop.permute.xlu0 %1961
    %v1964 = vadd.f32 %v1954, %v1962
    %v1965 = vtanh.pop %v1964
    %1967 = vrot.lane.b32.xlu0 %v1965, 64
    %v1968 = vpop.permute.xlu0 %1967
    %v1970 = vmul.f32 %v1951, %v1968
    %1972 = vrot.lane.b32.xlu0 %v1970, 32
    %v1973 = vpop.permute.xlu0 %1972
    %v1974 = vsel %vm1526, %v1973, 0
    %1976 = vmatprep.subr.mxu0 0.0
    %1977 = vmatpush1.msra.mxu0 %v100
    %1978 = vmatprep.subr.mxu0 0.0
    %1979 = vmatpush1.msra.mxu0 %v101
    %1980 = vmatprep.subr.mxu0 0.0
    %1981 = vmatpush1.msra.mxu0 %v102
    %1982 = vmatprep.subr.mxu0 0.0
    %1983 = vmatpush1.msra.mxu0 %v103
    %1984 = vmatprep.subr.mxu0 0.0
    %1985 = vmatpush1.msra.mxu0 0.0
    %1986 = vmatprep.subr.mxu0 0.0
    %1987 = vmatpush1.msra.mxu0 0.0
    %1988 = vmatprep.subr.mxu0 0.0
    %1989 = vmatpush1.msra.mxu0 0.0
    %1990 = vmatprep.subr.mxu0 0.0
    %1991 = vmatpush1.msra.mxu0 0.0
    %1992 = vmatprep.subr.mxu0 0.0
    %1993 = vmatpush1.msra.mxu0 0.0
    %1994 = vmatprep.subr.mxu0 0.0
    %1995 = vmatpush1.msra.mxu0 0.0
    %1996 = vmatprep.subr.mxu0 0.0
    %1997 = vmatpush1.msra.mxu0 0.0
    %1998 = vmatprep.subr.mxu0 0.0
    %1999 = vmatpush1.msra.mxu0 0.0
    %2000 = vmatprep.subr.mxu0 0.0
    %2001 = vmatpush1.msra.mxu0 0.0
    %2002 = vmatprep.subr.mxu0 0.0
    %2003 = vmatpush1.msra.mxu0 0.0
    %2004 = vmatprep.subr.mxu0 0.0
    %2005 = vmatpush1.msra.mxu0 0.0
    %2006 = vmatprep.subr.mxu0 0.0
    %2007 = vmatpush1.msra.mxu0 0.0
    %2008 = vmatprep.subr.mxu0 0.0
    %2009 = vmatpush1.msra.mxu0 0.0
    %2010 = vmatprep.subr.mxu0 0.0
    %2011 = vmatpush1.msra.mxu0 0.0
    %2012 = vmatprep.subr.mxu0 0.0
    %2013 = vmatpush1.msra.mxu0 0.0
    %2014 = vmatprep.subr.mxu0 0.0
    %2015 = vmatpush1.msra.mxu0 0.0
    %2016 = vmatprep.subr.mxu0 0.0
    %2017 = vmatpush1.msra.mxu0 0.0
    %2018 = vmatprep.subr.mxu0 0.0
    %2019 = vmatpush1.msra.mxu0 0.0
    %2020 = vmatprep.subr.mxu0 0.0
    %2021 = vmatpush1.msra.mxu0 0.0
    %2022 = vmatprep.subr.mxu0 0.0
    %2023 = vmatpush1.msra.mxu0 0.0
    %2024 = vmatprep.subr.mxu0 0.0
    %2025 = vmatpush1.msra.mxu0 0.0
    %2026 = vmatprep.subr.mxu0 0.0
    %2027 = vmatpush1.msra.mxu0 0.0
    %2028 = vmatprep.subr.mxu0 0.0
    %2029 = vmatpush1.msra.mxu0 0.0
    %2030 = vmatprep.subr.mxu0 0.0
    %2031 = vmatpush1.msra.mxu0 0.0
    %2032 = vmatprep.subr.mxu0 0.0
    %2033 = vmatpush1.msra.mxu0 0.0
    %2034 = vmatprep.subr.mxu0 0.0
    %2035 = vmatpush1.msra.mxu0 0.0
    %2036 = vmatprep.subr.mxu0 0.0
    %2037 = vmatpush1.msra.mxu0 0.0
    %2038 = vmatprep.subr.mxu0 0.0
    %2039 = vmatpush1.msra.mxu0 0.0
    %2040 = vmatprep.mubr.f32.mxu0 0.0
    %2041 = vmatmul.mubr.f32.gmra.mrb[0].mxu0 %v1974
    %v2042 = vpop.f32.mrb[0].mxu0
    %v2043 = vadd.f32 0.0, %v2042
    %v2044 = vpop.f32.mrb[0].mxu0
    %2045 = vdwg.mxu0
    %v2046 = vadd.f32 %v1665, %v2043
    %v2047 = vxor.u32 %v2046, 2147483648
    %v2048 = vmul.f32 %v2047, 1.442695
    %v2049 = vpow.pop %v2048
    %v2050 = vadd.f32 %v2049, 1.0
    %v2051 = vrcp.pop %v2050
    %v2052 = vmul.f32 1.0, %v2051
    %v2053 = vmul.f32 %v2052, 2.0
    %v2054 = vsub.f32 %v2053, 1.0
    %v2055 = vmul.f32 %v2052, %v1964
    %2057 = vrot.lane.b32.xlu0 %v2054, 64
    %v2058 = vpop.permute.xlu0 %2057
    %v2060 = vmul.f32 %v2052, %v2058
    %2062 = vrot.lane.b32.xlu0 %v2060, 32
    %v2063 = vpop.permute.xlu0 %2062
    %v2065 = vadd.f32 %v2055, %v2063
    %v2066 = vtanh.pop %v2065
    %2068 = vrot.lane.b32.xlu0 %v2066, 64
    %v2069 = vpop.permute.xlu0 %2068
    %v2071 = vmul.f32 %v2052, %v2069
    %2073 = vrot.lane.b32.xlu0 %v2071, 32
    %v2074 = vpop.permute.xlu0 %2073
    %v2075 = vsel %vm1526, %v2074, 0
    %2077 = vmatprep.subr.mxu0 0.0
    %2078 = vmatpush1.msra.mxu0 %v100
    %2079 = vmatprep.subr.mxu0 0.0
    %2080 = vmatpush1.msra.mxu0 %v101
    %2081 = vmatprep.subr.mxu0 0.0
    %2082 = vmatpush1.msra.mxu0 %v102
    %2083 = vmatprep.subr.mxu0 0.0
    %2084 = vmatpush1.msra.mxu0 %v103
    %2085 = vmatprep.subr.mxu0 0.0
    %2086 = vmatpush1.msra.mxu0 0.0
    %2087 = vmatprep.subr.mxu0 0.0
    %2088 = vmatpush1.msra.mxu0 0.0
    %2089 = vmatprep.subr.mxu0 0.0
    %2090 = vmatpush1.msra.mxu0 0.0
    %2091 = vmatprep.subr.mxu0 0.0
    %2092 = vmatpush1.msra.mxu0 0.0
    %2093 = vmatprep.subr.mxu0 0.0
    %2094 = vmatpush1.msra.mxu0 0.0
    %2095 = vmatprep.subr.mxu0 0.0
    %2096 = vmatpush1.msra.mxu0 0.0
    %2097 = vmatprep.subr.mxu0 0.0
    %2098 = vmatpush1.msra.mxu0 0.0
    %2099 = vmatprep.subr.mxu0 0.0
    %2100 = vmatpush1.msra.mxu0 0.0
    %2101 = vmatprep.subr.mxu0 0.0
    %2102 = vmatpush1.msra.mxu0 0.0
    %2103 = vmatprep.subr.mxu0 0.0
    %2104 = vmatpush1.msra.mxu0 0.0
    %2105 = vmatprep.subr.mxu0 0.0
    %2106 = vmatpush1.msra.mxu0 0.0
    %2107 = vmatprep.subr.mxu0 0.0
    %2108 = vmatpush1.msra.mxu0 0.0
    %2109 = vmatprep.subr.mxu0 0.0
    %2110 = vmatpush1.msra.mxu0 0.0
    %2111 = vmatprep.subr.mxu0 0.0
    %2112 = vmatpush1.msra.mxu0 0.0
    %2113 = vmatprep.subr.mxu0 0.0
    %2114 = vmatpush1.msra.mxu0 0.0
    %2115 = vmatprep.subr.mxu0 0.0
    %2116 = vmatpush1.msra.mxu0 0.0
    %2117 = vmatprep.subr.mxu0 0.0
    %2118 = vmatpush1.msra.mxu0 0.0
    %2119 = vmatprep.subr.mxu0 0.0
    %2120 = vmatpush1.msra.mxu0 0.0
    %2121 = vmatprep.subr.mxu0 0.0
    %2122 = vmatpush1.msra.mxu0 0.0
    %2123 = vmatprep.subr.mxu0 0.0
    %2124 = vmatpush1.msra.mxu0 0.0
    %2125 = vmatprep.subr.mxu0 0.0
    %2126 = vmatpush1.msra.mxu0 0.0
    %2127 = vmatprep.subr.mxu0 0.0
    %2128 = vmatpush1.msra.mxu0 0.0
    %2129 = vmatprep.subr.mxu0 0.0
    %2130 = vmatpush1.msra.mxu0 0.0
    %2131 = vmatprep.subr.mxu0 0.0
    %2132 = vmatpush1.msra.mxu0 0.0
    %2133 = vmatprep.subr.mxu0 0.0
    %2134 = vmatpush1.msra.mxu0 0.0
    %2135 = vmatprep.subr.mxu0 0.0
    %2136 = vmatpush1.msra.mxu0 0.0
    %2137 = vmatprep.subr.mxu0 0.0
    %2138 = vmatpush1.msra.mxu0 0.0
    %2139 = vmatprep.subr.mxu0 0.0
    %2140 = vmatpush1.msra.mxu0 0.0
    %2141 = vmatprep.mubr.f32.mxu0 0.0
    %2142 = vmatmul.mubr.f32.gmra.mrb[0].mxu0 %v2075
    %v2143 = vpop.f32.mrb[0].mxu0
    %v2144 = vadd.f32 0.0, %v2143
    %v2145 = vpop.f32.mrb[0].mxu0
    %2146 = vdwg.mxu0
    %v2147 = vadd.f32 %v1666, %v2144
    %v2148 = vxor.u32 %v2147, 2147483648
    %v2149 = vmul.f32 %v2148, 1.442695
    %v2150 = vpow.pop %v2149
    %v2151 = vadd.f32 %v2150, 1.0
    %v2152 = vrcp.pop %v2151
    %v2153 = vmul.f32 1.0, %v2152
    %v2154 = vmul.f32 %v2153, 2.0
    %v2155 = vsub.f32 %v2154, 1.0
    %v2156 = vmul.f32 %v2153, %v2065
    %2158 = vrot.lane.b32.xlu0 %v2155, 64
    %v2159 = vpop.permute.xlu0 %2158
    %v2161 = vmul.f32 %v2153, %v2159
    %2163 = vrot.lane.b32.xlu0 %v2161, 32
    %v2164 = vpop.permute.xlu0 %2163
    %v2166 = vadd.f32 %v2156, %v2164
    %v2167 = vtanh.pop %v2166
    %2169 = vrot.lane.b32.xlu0 %v2167, 64
    %v2170 = vpop.permute.xlu0 %2169
    %v2172 = vmul.f32 %v2153, %v2170
    %2174 = vrot.lane.b32.xlu0 %v2172, 32
    %v2175 = vpop.permute.xlu0 %2174
    %v2176 = vsel %vm1526, %v2175, 0
    %2178 = vmatprep.subr.mxu0 0.0
    %2179 = vmatpush1.msra.mxu0 %v100
    %2180 = vmatprep.subr.mxu0 0.0
    %2181 = vmatpush1.msra.mxu0 %v101
    %2182 = vmatprep.subr.mxu0 0.0
    %2183 = vmatpush1.msra.mxu0 %v102
    %2184 = vmatprep.subr.mxu0 0.0
    %2185 = vmatpush1.msra.mxu0 %v103
    %2186 = vmatprep.subr.mxu0 0.0
    %2187 = vmatpush1.msra.mxu0 0.0
    %2188 = vmatprep.subr.mxu0 0.0
    %2189 = vmatpush1.msra.mxu0 0.0
    %2190 = vmatprep.subr.mxu0 0.0
    %2191 = vmatpush1.msra.mxu0 0.0
    %2192 = vmatprep.subr.mxu0 0.0
    %2193 = vmatpush1.msra.mxu0 0.0
    %2194 = vmatprep.subr.mxu0 0.0
    %2195 = vmatpush1.msra.mxu0 0.0
    %2196 = vmatprep.subr.mxu0 0.0
    %2197 = vmatpush1.msra.mxu0 0.0
    %2198 = vmatprep.subr.mxu0 0.0
    %2199 = vmatpush1.msra.mxu0 0.0
    %2200 = vmatprep.subr.mxu0 0.0
    %2201 = vmatpush1.msra.mxu0 0.0
    %2202 = vmatprep.subr.mxu0 0.0
    %2203 = vmatpush1.msra.mxu0 0.0
    %2204 = vmatprep.subr.mxu0 0.0
    %2205 = vmatpush1.msra.mxu0 0.0
    %2206 = vmatprep.subr.mxu0 0.0
    %2207 = vmatpush1.msra.mxu0 0.0
    %2208 = vmatprep.subr.mxu0 0.0
    %2209 = vmatpush1.msra.mxu0 0.0
    %2210 = vmatprep.subr.mxu0 0.0
    %2211 = vmatpush1.msra.mxu0 0.0
    %2212 = vmatprep.subr.mxu0 0.0
    %2213 = vmatpush1.msra.mxu0 0.0
    %2214 = vmatprep.subr.mxu0 0.0
    %2215 = vmatpush1.msra.mxu0 0.0
    %2216 = vmatprep.subr.mxu0 0.0
    %2217 = vmatpush1.msra.mxu0 0.0
    %2218 = vmatprep.subr.mxu0 0.0
    %2219 = vmatpush1.msra.mxu0 0.0
    %2220 = vmatprep.subr.mxu0 0.0
    %2221 = vmatpush1.msra.mxu0 0.0
    %2222 = vmatprep.subr.mxu0 0.0
    %2223 = vmatpush1.msra.mxu0 0.0
    %2224 = vmatprep.subr.mxu0 0.0
    %2225 = vmatpush1.msra.mxu0 0.0
    %2226 = vmatprep.subr.mxu0 0.0
    %2227 = vmatpush1.msra.mxu0 0.0
    %2228 = vmatprep.subr.mxu0 0.0
    %2229 = vmatpush1.msra.mxu0 0.0
    %2230 = vmatprep.subr.mxu0 0.0
    %2231 = vmatpush1.msra.mxu0 0.0
    %2232 = vmatprep.subr.mxu0 0.0
    %2233 = vmatpush1.msra.mxu0 0.0
    %2234 = vmatprep.subr.mxu0 0.0
    %2235 = vmatpush1.msra.mxu0 0.0
    %2236 = vmatprep.subr.mxu0 0.0
    %2237 = vmatpush1.msra.mxu0 0.0
    %2238 = vmatprep.subr.mxu0 0.0
    %2239 = vmatpush1.msra.mxu0 0.0
    %2240 = vmatprep.subr.mxu0 0.0
    %2241 = vmatpush1.msra.mxu0 0.0
    %2242 = vmatprep.mubr.f32.mxu0 0.0
    %2243 = vmatmul.mubr.f32.gmra.mrb[0].mxu0 %v2176
    %v2244 = vpop.f32.mrb[0].mxu0
    %v2245 = vadd.f32 0.0, %v2244
    %v2246 = vpop.f32.mrb[0].mxu0
    %2247 = vdwg.mxu0
    %v2248 = vadd.f32 %v1667, %v2245
    %v2249 = vxor.u32 %v2248, 2147483648
    %v2250 = vmul.f32 %v2249, 1.442695
    %v2251 = vpow.pop %v2250
    %v2252 = vadd.f32 %v2251, 1.0
    %v2253 = vrcp.pop %v2252
    %v2254 = vmul.f32 1.0, %v2253
    %v2255 = vmul.f32 %v2254, 2.0
    %v2256 = vsub.f32 %v2255, 1.0
    %v2257 = vmul.f32 %v2254, %v2166
    %2259 = vrot.lane.b32.xlu0 %v2256, 64
    %v2260 = vpop.permute.xlu0 %2259
    %v2262 = vmul.f32 %v2254, %v2260
    %2264 = vrot.lane.b32.xlu0 %v2262, 32
    %v2265 = vpop.permute.xlu0 %2264
    %v2267 = vadd.f32 %v2257, %v2265
    %v2268 = vtanh.pop %v2267
    %2270 = vrot.lane.b32.xlu0 %v2268, 64
    %v2271 = vpop.permute.xlu0 %2270
    %v2273 = vmul.f32 %v2254, %v2271
    %2275 = vrot.lane.b32.xlu0 %v2273, 32
    %v2276 = vpop.permute.xlu0 %2275
    %v2277 = vsel %vm1526, %v2276, 0
    %2279 = vmatprep.subr.mxu0 0.0
    %2280 = vmatpush1.msra.mxu0 %v100
    %2281 = vmatprep.subr.mxu0 0.0
    %2282 = vmatpush1.msra.mxu0 %v101
    %2283 = vmatprep.subr.mxu0 0.0
    %2284 = vmatpush1.msra.mxu0 %v102
    %2285 = vmatprep.subr.mxu0 0.0
    %2286 = vmatpush1.msra.mxu0 %v103
    %2287 = vmatprep.subr.mxu0 0.0
    %2288 = vmatpush1.msra.mxu0 0.0
    %2289 = vmatprep.subr.mxu0 0.0
    %2290 = vmatpush1.msra.mxu0 0.0
    %2291 = vmatprep.subr.mxu0 0.0
    %2292 = vmatpush1.msra.mxu0 0.0
    %2293 = vmatprep.subr.mxu0 0.0
    %2294 = vmatpush1.msra.mxu0 0.0
    %2295 = vmatprep.subr.mxu0 0.0
    %2296 = vmatpush1.msra.mxu0 0.0
    %2297 = vmatprep.subr.mxu0 0.0
    %2298 = vmatpush1.msra.mxu0 0.0
    %2299 = vmatprep.subr.mxu0 0.0
    %2300 = vmatpush1.msra.mxu0 0.0
    %2301 = vmatprep.subr.mxu0 0.0
    %2302 = vmatpush1.msra.mxu0 0.0
    %2303 = vmatprep.subr.mxu0 0.0
    %2304 = vmatpush1.msra.mxu0 0.0
    %2305 = vmatprep.subr.mxu0 0.0
    %2306 = vmatpush1.msra.mxu0 0.0
    %2307 = vmatprep.subr.mxu0 0.0
    %2308 = vmatpush1.msra.mxu0 0.0
    %2309 = vmatprep.subr.mxu0 0.0
    %2310 = vmatpush1.msra.mxu0 0.0
    %2311 = vmatprep.subr.mxu0 0.0
    %2312 = vmatpush1.msra.mxu0 0.0
    %2313 = vmatprep.subr.mxu0 0.0
    %2314 = vmatpush1.msra.mxu0 0.0
    %2315 = vmatprep.subr.mxu0 0.0
    %2316 = vmatpush1.msra.mxu0 0.0
    %2317 = vmatprep.subr.mxu0 0.0
    %2318 = vmatpush1.msra.mxu0 0.0
    %2319 = vmatprep.subr.mxu0 0.0
    %2320 = vmatpush1.msra.mxu0 0.0
    %2321 = vmatprep.subr.mxu0 0.0
    %2322 = vmatpush1.msra.mxu0 0.0
    %2323 = vmatprep.subr.mxu0 0.0
    %2324 = vmatpush1.msra.mxu0 0.0
    %2325 = vmatprep.subr.mxu0 0.0
    %2326 = vmatpush1.msra.mxu0 0.0
    %2327 = vmatprep.subr.mxu0 0.0
    %2328 = vmatpush1.msra.mxu0 0.0
    %2329 = vmatprep.subr.mxu0 0.0
    %2330 = vmatpush1.msra.mxu0 0.0
    %2331 = vmatprep.subr.mxu0 0.0
    %2332 = vmatpush1.msra.mxu0 0.0
    %2333 = vmatprep.subr.mxu0 0.0
    %2334 = vmatpush1.msra.mxu0 0.0
    %2335 = vmatprep.subr.mxu0 0.0
    %2336 = vmatpush1.msra.mxu0 0.0
    %2337 = vmatprep.subr.mxu0 0.0
    %2338 = vmatpush1.msra.mxu0 0.0
    %2339 = vmatprep.subr.mxu0 0.0
    %2340 = vmatpush1.msra.mxu0 0.0
    %2341 = vmatprep.subr.mxu0 0.0
    %2342 = vmatpush1.msra.mxu0 0.0
    %2343 = vmatprep.mubr.f32.mxu0 0.0
    %2344 = vmatmul.mubr.f32.gmra.mrb[0].mxu0 %v2277
    %v2345 = vpop.f32.mrb[0].mxu0
    %v2346 = vadd.f32 0.0, %v2345
    %v2347 = vpop.f32.mrb[0].mxu0
    %2348 = vdwg.mxu0
    %v2349 = vadd.f32 %v1668, %v2346
    %v2350 = vxor.u32 %v2349, 2147483648
    %v2351 = vmul.f32 %v2350, 1.442695
    %v2352 = vpow.pop %v2351
    %v2353 = vadd.f32 %v2352, 1.0
    %v2354 = vrcp.pop %v2353
    %v2355 = vmul.f32 1.0, %v2354
    %v2356 = vmul.f32 %v2355, 2.0
    %v2357 = vsub.f32 %v2356, 1.0
    %v2358 = vmul.f32 %v2355, %v2267
    %2360 = vrot.lane.b32.xlu0 %v2357, 64
    %v2361 = vpop.permute.xlu0 %2360
    %v2363 = vmul.f32 %v2355, %v2361
    %2365 = vrot.lane.b32.xlu0 %v2363, 32
    %v2366 = vpop.permute.xlu0 %2365
    %v2368 = vadd.f32 %v2358, %v2366
    %v2369 = vtanh.pop %v2368
    %2371 = vrot.lane.b32.xlu0 %v2369, 64
    %v2372 = vpop.permute.xlu0 %2371
    %v2374 = vmul.f32 %v2355, %v2372
    %2376 = vrot.lane.b32.xlu0 %v2374, 32
    %v2377 = vpop.permute.xlu0 %2376
    %v2378 = vsel %vm1526, %v2377, 0
    %2380 = vmatprep.subr.mxu0 0.0
    %2381 = vmatpush1.msra.mxu0 %v100
    %2382 = vmatprep.subr.mxu0 0.0
    %2383 = vmatpush1.msra.mxu0 %v101
    %2384 = vmatprep.subr.mxu0 0.0
    %2385 = vmatpush1.msra.mxu0 %v102
    %2386 = vmatprep.subr.mxu0 0.0
    %2387 = vmatpush1.msra.mxu0 %v103
    %2388 = vmatprep.subr.mxu0 0.0
    %2389 = vmatpush1.msra.mxu0 0.0
    %2390 = vmatprep.subr.mxu0 0.0
    %2391 = vmatpush1.msra.mxu0 0.0
    %2392 = vmatprep.subr.mxu0 0.0
    %2393 = vmatpush1.msra.mxu0 0.0
    %2394 = vmatprep.subr.mxu0 0.0
    %2395 = vmatpush1.msra.mxu0 0.0
    %2396 = vmatprep.subr.mxu0 0.0
    %2397 = vmatpush1.msra.mxu0 0.0
    %2398 = vmatprep.subr.mxu0 0.0
    %2399 = vmatpush1.msra.mxu0 0.0
    %2400 = vmatprep.subr.mxu0 0.0
    %2401 = vmatpush1.msra.mxu0 0.0
    %2402 = vmatprep.subr.mxu0 0.0
    %2403 = vmatpush1.msra.mxu0 0.0
    %2404 = vmatprep.subr.mxu0 0.0
    %2405 = vmatpush1.msra.mxu0 0.0
    %2406 = vmatprep.subr.mxu0 0.0
    %2407 = vmatpush1.msra.mxu0 0.0
    %2408 = vmatprep.subr.mxu0 0.0
    %2409 = vmatpush1.msra.mxu0 0.0
    %2410 = vmatprep.subr.mxu0 0.0
    %2411 = vmatpush1.msra.mxu0 0.0
    %2412 = vmatprep.subr.mxu0 0.0
    %2413 = vmatpush1.msra.mxu0 0.0
    %2414 = vmatprep.subr.mxu0 0.0
    %2415 = vmatpush1.msra.mxu0 0.0
    %2416 = vmatprep.subr.mxu0 0.0
    %2417 = vmatpush1.msra.mxu0 0.0
    %2418 = vmatprep.subr.mxu0 0.0
    %2419 = vmatpush1.msra.mxu0 0.0
    %2420 = vmatprep.subr.mxu0 0.0
    %2421 = vmatpush1.msra.mxu0 0.0
    %2422 = vmatprep.subr.mxu0 0.0
    %2423 = vmatpush1.msra.mxu0 0.0
    %2424 = vmatprep.subr.mxu0 0.0
    %2425 = vmatpush1.msra.mxu0 0.0
    %2426 = vmatprep.subr.mxu0 0.0
    %2427 = vmatpush1.msra.mxu0 0.0
    %2428 = vmatprep.subr.mxu0 0.0
    %2429 = vmatpush1.msra.mxu0 0.0
    %2430 = vmatprep.subr.mxu0 0.0
    %2431 = vmatpush1.msra.mxu0 0.0
    %2432 = vmatprep.subr.mxu0 0.0
    %2433 = vmatpush1.msra.mxu0 0.0
    %2434 = vmatprep.subr.mxu0 0.0
    %2435 = vmatpush1.msra.mxu0 0.0
    %2436 = vmatprep.subr.mxu0 0.0
    %2437 = vmatpush1.msra.mxu0 0.0
    %2438 = vmatprep.subr.mxu0 0.0
    %2439 = vmatpush1.msra.mxu0 0.0
    %2440 = vmatprep.subr.mxu0 0.0
    %2441 = vmatpush1.msra.mxu0 0.0
    %2442 = vmatprep.subr.mxu0 0.0
    %2443 = vmatpush1.msra.mxu0 0.0
    %2444 = vmatprep.mubr.f32.mxu0 0.0
    %2445 = vmatmul.mubr.f32.gmra.mrb[0].mxu0 %v2378
    %v2446 = vpop.f32.mrb[0].mxu0
    %v2447 = vadd.f32 0.0, %v2446
    %v2448 = vpop.f32.mrb[0].mxu0
    %2449 = vdwg.mxu0
    %v2450 = vadd.f32 %v1669, %v2447
    %v2451 = vxor.u32 %v2450, 2147483648
    %v2452 = vmul.f32 %v2451, 1.442695
    %v2453 = vpow.pop %v2452
    %v2454 = vadd.f32 %v2453, 1.0
    %v2455 = vrcp.pop %v2454
    %v2456 = vmul.f32 1.0, %v2455
    %v2457 = vmul.f32 %v2456, 2.0
    %v2458 = vsub.f32 %v2457, 1.0
    %v2459 = vmul.f32 %v2456, %v2368
    %2461 = vrot.lane.b32.xlu0 %v2458, 64
    %v2462 = vpop.permute.xlu0 %2461
    %v2464 = vmul.f32 %v2456, %v2462
    %2466 = vrot.lane.b32.xlu0 %v2464, 32
    %v2467 = vpop.permute.xlu0 %2466
    %v2469 = vadd.f32 %v2459, %v2467
    %v2470 = vtanh.pop %v2469
    %2472 = vrot.lane.b32.xlu0 %v2470, 64
    %v2473 = vpop.permute.xlu0 %2472
    %v2475 = vmul.f32 %v2456, %v2473
    %v2477 = vlaneseq
    %v2478 = vshrl.u32 %v2477, 7
    %v2479 = vsub.s32 0, %v2478
    %v2480 = vrot.slane %v81, %v2479
    %2483 = vrot.lane.b32.xlu0 %v2475, 32
    %v2484 = vpop.permute.xlu0 %2483
    %v2485 = vsel %vm1526, %v2484, 0
    %2487 = vmatprep.subr.mxu0 0.0
    %2488 = vmatpush1.msra.mxu0 %v77
    %2489 = vmatprep.subr.mxu0 0.0
    %2490 = vmatpush1.msra.mxu0 %v78
    %2491 = vmatprep.subr.mxu0 0.0
    %2492 = vmatpush1.msra.mxu0 %v79
    %2493 = vmatprep.subr.mxu0 0.0
    %2494 = vmatpush1.msra.mxu0 %v80
    %2495 = vmatprep.subr.mxu0 0.0
    %2496 = vmatpush1.msra.mxu0 0.0
    %2497 = vmatprep.subr.mxu0 0.0
    %2498 = vmatpush1.msra.mxu0 0.0
    %2499 = vmatprep.subr.mxu0 0.0
    %2500 = vmatpush1.msra.mxu0 0.0
    %2501 = vmatprep.subr.mxu0 0.0
    %2502 = vmatpush1.msra.mxu0 0.0
    %2503 = vmatprep.subr.mxu0 0.0
    %2504 = vmatpush1.msra.mxu0 0.0
    %2505 = vmatprep.subr.mxu0 0.0
    %2506 = vmatpush1.msra.mxu0 0.0
    %2507 = vmatprep.subr.mxu0 0.0
    %2508 = vmatpush1.msra.mxu0 0.0
    %2509 = vmatprep.subr.mxu0 0.0
    %2510 = vmatpush1.msra.mxu0 0.0
    %2511 = vmatprep.subr.mxu0 0.0
    %2512 = vmatpush1.msra.mxu0 0.0
    %2513 = vmatprep.subr.mxu0 0.0
    %2514 = vmatpush1.msra.mxu0 0.0
    %2515 = vmatprep.subr.mxu0 0.0
    %2516 = vmatpush1.msra.mxu0 0.0
    %2517 = vmatprep.subr.mxu0 0.0
    %2518 = vmatpush1.msra.mxu0 0.0
    %2519 = vmatprep.subr.mxu0 0.0
    %2520 = vmatpush1.msra.mxu0 0.0
    %2521 = vmatprep.subr.mxu0 0.0
    %2522 = vmatpush1.msra.mxu0 0.0
    %2523 = vmatprep.subr.mxu0 0.0
    %2524 = vmatpush1.msra.mxu0 0.0
    %2525 = vmatprep.subr.mxu0 0.0
    %2526 = vmatpush1.msra.mxu0 0.0
    %2527 = vmatprep.subr.mxu0 0.0
    %2528 = vmatpush1.msra.mxu0 0.0
    %2529 = vmatprep.subr.mxu0 0.0
    %2530 = vmatpush1.msra.mxu0 0.0
    %2531 = vmatprep.subr.mxu0 0.0
    %2532 = vmatpush1.msra.mxu0 0.0
    %2533 = vmatprep.subr.mxu0 0.0
    %2534 = vmatpush1.msra.mxu0 0.0
    %2535 = vmatprep.subr.mxu0 0.0
    %2536 = vmatpush1.msra.mxu0 0.0
    %2537 = vmatprep.subr.mxu0 0.0
    %2538 = vmatpush1.msra.mxu0 0.0
    %2539 = vmatprep.subr.mxu0 0.0
    %2540 = vmatpush1.msra.mxu0 0.0
    %2541 = vmatprep.subr.mxu0 0.0
    %2542 = vmatpush1.msra.mxu0 0.0
    %2543 = vmatprep.subr.mxu0 0.0
    %2544 = vmatpush1.msra.mxu0 0.0
    %2545 = vmatprep.subr.mxu0 0.0
    %2546 = vmatpush1.msra.mxu0 0.0
    %2547 = vmatprep.subr.mxu0 0.0
    %2548 = vmatpush1.msra.mxu0 0.0
    %2549 = vmatprep.subr.mxu0 0.0
    %2550 = vmatpush1.msra.mxu0 0.0
    %2551 = vmatprep.mubr.f32.mxu0 0.0
    %2552 = vmatmul.mubr.f32.gmra.mrb[0].mxu0 %v2485
    %v2553 = vpop.f32.mrb[0].mxu0
    %v2554 = vadd.f32 %v2480, %v2553
    %v2555 = vpop.f32.mrb[0].mxu0
    %2556 = vdwg.mxu0
    %2557 = vst.msk [vmem:[#allocation8] sm:$0xff] %vm165, %v2554
    %vm2558 = vcmp.ne.f32.partialorder %v123, 0.0
    %vm2559 = vcmp.ne.f32.partialorder %v125, 0.0
    %vm2560 = vcmp.ne.f32.partialorder %v127, 0.0
    %vm2561 = vcmp.ne.f32.partialorder %v129, 0.0
    %vm2562 = vcmp.ne.f32.partialorder %v131, 0.0
    %vm2563 = vcmp.ne.f32.partialorder %v133, 0.0
    %vm2564 = vcmp.ne.f32.partialorder %v135, 0.0
    %vm2565 = vcmp.ne.f32.partialorder %v137, 0.0
    %v2566 = vsel %vm2558, 1.0, 0.0
    %v2567 = vsel %vm2559, 1.0, 0.0
    %v2568 = vsel %vm2560, 1.0, 0.0
    %v2569 = vsel %vm2561, 1.0, 0.0
    %v2570 = vsel %vm2562, 1.0, 0.0
    %v2571 = vsel %vm2563, 1.0, 0.0
    %v2572 = vsel %vm2564, 1.0, 0.0
    %v2573 = vsel %vm2565, 1.0, 0.0
    %v2574 = vsel %vm156, 1.0, %v2566
    %v2575 = vsel %vm156, 1.0, %v2567
    %v2576 = vsel %vm156, 1.0, %v2568
    %v2577 = vsel %vm156, 1.0, %v2569
    %v2578 = vsel %vm156, 1.0, %v2570
    %v2579 = vsel %vm156, 1.0, %v2571
    %v2580 = vsel %vm156, 1.0, %v2572
    %v2581 = vsel %vm156, 1.0, %v2573
    %v2582 = vsel %vm165, %v2574, 0.0
    %v2583 = vrot.slane %v2582, 4
    %v2584 = vadd.f32 %v2582, %v2583
    %v2585 = vrot.slane %v2584, 2
    %v2586 = vadd.f32 %v2584, %v2585
    %v2587 = vrot.slane %v2586, 1
    %v2588 = vadd.f32 %v2586, %v2587
    %v2589 = vsel %vm165, %v2575, 0.0
    %v2590 = vrot.slane %v2589, 4
    %v2591 = vadd.f32 %v2589, %v2590
    %v2592 = vrot.slane %v2591, 2
    %v2593 = vadd.f32 %v2591, %v2592
    %v2594 = vrot.slane %v2593, 1
    %v2595 = vadd.f32 %v2593, %v2594
    %v2596 = vsel %vm165, %v2576, 0.0
    %v2597 = vrot.slane %v2596, 4
    %v2598 = vadd.f32 %v2596, %v2597
    %v2599 = vrot.slane %v2598, 2
    %v2600 = vadd.f32 %v2598, %v2599
    %v2601 = vrot.slane %v2600, 1
    %v2602 = vadd.f32 %v2600, %v2601
    %v2603 = vsel %vm165, %v2577, 0.0
    %v2604 = vrot.slane %v2603, 4
    %v2605 = vadd.f32 %v2603, %v2604
    %v2606 = vrot.slane %v2605, 2
    %v2607 = vadd.f32 %v2605, %v2606
    %v2608 = vrot.slane %v2607, 1
    %v2609 = vadd.f32 %v2607, %v2608
    %v2610 = vsel %vm165, %v2578, 0.0
    %v2611 = vrot.slane %v2610, 4
    %v2612 = vadd.f32 %v2610, %v2611
    %v2613 = vrot.slane %v2612, 2
    %v2614 = vadd.f32 %v2612, %v2613
    %v2615 = vrot.slane %v2614, 1
    %v2616 = vadd.f32 %v2614, %v2615
    %v2617 = vsel %vm165, %v2579, 0.0
    %v2618 = vrot.slane %v2617, 4
    %v2619 = vadd.f32 %v2617, %v2618
    %v2620 = vrot.slane %v2619, 2
    %v2621 = vadd.f32 %v2619, %v2620
    %v2622 = vrot.slane %v2621, 1
    %v2623 = vadd.f32 %v2621, %v2622
    %v2624 = vsel %vm165, %v2580, 0.0
    %v2625 = vrot.slane %v2624, 4
    %v2626 = vadd.f32 %v2624, %v2625
    %v2627 = vrot.slane %v2626, 2
    %v2628 = vadd.f32 %v2626, %v2627
    %v2629 = vrot.slane %v2628, 1
    %v2630 = vadd.f32 %v2628, %v2629
    %v2631 = vsel %vm165, %v2581, 0.0
    %v2632 = vrot.slane %v2631, 4
    %v2633 = vadd.f32 %v2631, %v2632
    %v2634 = vrot.slane %v2633, 2
    %v2635 = vadd.f32 %v2633, %v2634
    %v2636 = vrot.slane %v2635, 1
    %v2637 = vadd.f32 %v2635, %v2636
    %v2638 = vrsqrt.pop %v2588
    %v2639 = vrsqrt.pop %v2595
    %v2640 = vrsqrt.pop %v2602
    %v2641 = vrsqrt.pop %v2609
    %v2642 = vrsqrt.pop %v2616
    %v2643 = vrsqrt.pop %v2623
    %v2644 = vrsqrt.pop %v2630
    %v2645 = vrsqrt.pop %v2637
    %2646 = vxpose.xlu0.b32.start [1/16] %v2638, 128
    %2647 = vxpose.xlu0.b32.cont [2/16] 0.0, 128
    %2648 = vxpose.xlu0.b32.cont [3/16] 0.0, 128
    %2649 = vxpose.xlu0.b32.cont [4/16] 0.0, 128
    %2650 = vxpose.xlu0.b32.cont [5/16] 0.0, 128
    %2651 = vxpose.xlu0.b32.cont [6/16] 0.0, 128
    %2652 = vxpose.xlu0.b32.cont [7/16] 0.0, 128
    %2653 = vxpose.xlu0.b32.cont [8/16] 0.0, 128
    %2654 = vxpose.xlu0.b32.cont [9/16] 0.0, 128
    %2655 = vxpose.xlu0.b32.cont [10/16] 0.0, 128
    %2656 = vxpose.xlu0.b32.cont [11/16] 0.0, 128
    %2657 = vxpose.xlu0.b32.cont [12/16] 0.0, 128
    %2658 = vxpose.xlu0.b32.cont [13/16] 0.0, 128
    %2659 = vxpose.xlu0.b32.cont [14/16] 0.0, 128
    %2660 = vxpose.xlu0.b32.cont [15/16] 0.0, 128
    %2661 = vxpose.xlu0.b32.end [16/16] 0.0, 128
    %v2662 = vpop.trf.xlu0
    %v2663 = vpop.trf.xlu0
    %v2664 = vpop.trf.xlu0
    %v2665 = vpop.trf.xlu0
    %v2666 = vpop.trf.xlu0
    %v2667 = vpop.trf.xlu0
    %v2668 = vpop.trf.xlu0
    %v2669 = vpop.trf.xlu0
    %v2670 = vpop.trf.xlu0
    %v2671 = vpop.trf.xlu0
    %v2672 = vpop.trf.xlu0
    %v2673 = vpop.trf.xlu0
    %v2674 = vpop.trf.xlu0
    %v2675 = vpop.trf.xlu0
    %v2676 = vpop.trf.xlu0
    %v2677 = vpop.trf.xlu0
    %2678 = vxpose.xlu0.b32.start [1/16] %v2639, 128
    %2679 = vxpose.xlu0.b32.cont [2/16] 0.0, 128
    %2680 = vxpose.xlu0.b32.cont [3/16] 0.0, 128
    %2681 = vxpose.xlu0.b32.cont [4/16] 0.0, 128
    %2682 = vxpose.xlu0.b32.cont [5/16] 0.0, 128
    %2683 = vxpose.xlu0.b32.cont [6/16] 0.0, 128
    %2684 = vxpose.xlu0.b32.cont [7/16] 0.0, 128
    %2685 = vxpose.xlu0.b32.cont [8/16] 0.0, 128
    %2686 = vxpose.xlu0.b32.cont [9/16] 0.0, 128
    %2687 = vxpose.xlu0.b32.cont [10/16] 0.0, 128
    %2688 = vxpose.xlu0.b32.cont [11/16] 0.0, 128
    %2689 = vxpose.xlu0.b32.cont [12/16] 0.0, 128
    %2690 = vxpose.xlu0.b32.cont [13/16] 0.0, 128
    %2691 = vxpose.xlu0.b32.cont [14/16] 0.0, 128
    %2692 = vxpose.xlu0.b32.cont [15/16] 0.0, 128
    %2693 = vxpose.xlu0.b32.end [16/16] 0.0, 128
    %v2694 = vpop.trf.xlu0
    %v2695 = vpop.trf.xlu0
    %v2696 = vpop.trf.xlu0
    %v2697 = vpop.trf.xlu0
    %v2698 = vpop.trf.xlu0
    %v2699 = vpop.trf.xlu0
    %v2700 = vpop.trf.xlu0
    %v2701 = vpop.trf.xlu0
    %v2702 = vpop.trf.xlu0
    %v2703 = vpop.trf.xlu0
    %v2704 = vpop.trf.xlu0
    %v2705 = vpop.trf.xlu0
    %v2706 = vpop.trf.xlu0
    %v2707 = vpop.trf.xlu0
    %v2708 = vpop.trf.xlu0
    %v2709 = vpop.trf.xlu0
    %2710 = vxpose.xlu0.b32.start [1/16] %v2640, 128
    %2711 = vxpose.xlu0.b32.cont [2/16] 0.0, 128
    %2712 = vxpose.xlu0.b32.cont [3/16] 0.0, 128
    %2713 = vxpose.xlu0.b32.cont [4/16] 0.0, 128
    %2714 = vxpose.xlu0.b32.cont [5/16] 0.0, 128
    %2715 = vxpose.xlu0.b32.cont [6/16] 0.0, 128
    %2716 = vxpose.xlu0.b32.cont [7/16] 0.0, 128
    %2717 = vxpose.xlu0.b32.cont [8/16] 0.0, 128
    %2718 = vxpose.xlu0.b32.cont [9/16] 0.0, 128
    %2719 = vxpose.xlu0.b32.cont [10/16] 0.0, 128
    %2720 = vxpose.xlu0.b32.cont [11/16] 0.0, 128
    %2721 = vxpose.xlu0.b32.cont [12/16] 0.0, 128
    %2722 = vxpose.xlu0.b32.cont [13/16] 0.0, 128
    %2723 = vxpose.xlu0.b32.cont [14/16] 0.0, 128
    %2724 = vxpose.xlu0.b32.cont [15/16] 0.0, 128
    %2725 = vxpose.xlu0.b32.end [16/16] 0.0, 128
    %v2726 = vpop.trf.xlu0
    %v2727 = vpop.trf.xlu0
    %v2728 = vpop.trf.xlu0
    %v2729 = vpop.trf.xlu0
    %v2730 = vpop.trf.xlu0
    %v2731 = vpop.trf.xlu0
    %v2732 = vpop.trf.xlu0
    %v2733 = vpop.trf.xlu0
    %v2734 = vpop.trf.xlu0
    %v2735 = vpop.trf.xlu0
    %v2736 = vpop.trf.xlu0
    %v2737 = vpop.trf.xlu0
    %v2738 = vpop.trf.xlu0
    %v2739 = vpop.trf.xlu0
    %v2740 = vpop.trf.xlu0
    %v2741 = vpop.trf.xlu0
    %2742 = vxpose.xlu0.b32.start [1/16] %v2641, 128
    %2743 = vxpose.xlu0.b32.cont [2/16] 0.0, 128
    %2744 = vxpose.xlu0.b32.cont [3/16] 0.0, 128
    %2745 = vxpose.xlu0.b32.cont [4/16] 0.0, 128
    %2746 = vxpose.xlu0.b32.cont [5/16] 0.0, 128
    %2747 = vxpose.xlu0.b32.cont [6/16] 0.0, 128
    %2748 = vxpose.xlu0.b32.cont [7/16] 0.0, 128
    %2749 = vxpose.xlu0.b32.cont [8/16] 0.0, 128
    %2750 = vxpose.xlu0.b32.cont [9/16] 0.0, 128
    %2751 = vxpose.xlu0.b32.cont [10/16] 0.0, 128
    %2752 = vxpose.xlu0.b32.cont [11/16] 0.0, 128
    %2753 = vxpose.xlu0.b32.cont [12/16] 0.0, 128
    %2754 = vxpose.xlu0.b32.cont [13/16] 0.0, 128
    %2755 = vxpose.xlu0.b32.cont [14/16] 0.0, 128
    %2756 = vxpose.xlu0.b32.cont [15/16] 0.0, 128
    %2757 = vxpose.xlu0.b32.end [16/16] 0.0, 128
    %v2758 = vpop.trf.xlu0
    %v2759 = vpop.trf.xlu0
    %v2760 = vpop.trf.xlu0
    %v2761 = vpop.trf.xlu0
    %v2762 = vpop.trf.xlu0
    %v2763 = vpop.trf.xlu0
    %v2764 = vpop.trf.xlu0
    %v2765 = vpop.trf.xlu0
    %v2766 = vpop.trf.xlu0
    %v2767 = vpop.trf.xlu0
    %v2768 = vpop.trf.xlu0
    %v2769 = vpop.trf.xlu0
    %v2770 = vpop.trf.xlu0
    %v2771 = vpop.trf.xlu0
    %v2772 = vpop.trf.xlu0
    %v2773 = vpop.trf.xlu0
    %2774 = vxpose.xlu0.b32.start [1/16] %v2642, 128
    %2775 = vxpose.xlu0.b32.cont [2/16] 0.0, 128
    %2776 = vxpose.xlu0.b32.cont [3/16] 0.0, 128
    %2777 = vxpose.xlu0.b32.cont [4/16] 0.0, 128
    %2778 = vxpose.xlu0.b32.cont [5/16] 0.0, 128
    %2779 = vxpose.xlu0.b32.cont [6/16] 0.0, 128
    %2780 = vxpose.xlu0.b32.cont [7/16] 0.0, 128
    %2781 = vxpose.xlu0.b32.cont [8/16] 0.0, 128
    %2782 = vxpose.xlu0.b32.cont [9/16] 0.0, 128
    %2783 = vxpose.xlu0.b32.cont [10/16] 0.0, 128
    %2784 = vxpose.xlu0.b32.cont [11/16] 0.0, 128
    %2785 = vxpose.xlu0.b32.cont [12/16] 0.0, 128
    %2786 = vxpose.xlu0.b32.cont [13/16] 0.0, 128
    %2787 = vxpose.xlu0.b32.cont [14/16] 0.0, 128
    %2788 = vxpose.xlu0.b32.cont [15/16] 0.0, 128
    %2789 = vxpose.xlu0.b32.end [16/16] 0.0, 128
    %v2790 = vpop.trf.xlu0
    %v2791 = vpop.trf.xlu0
    %v2792 = vpop.trf.xlu0
    %v2793 = vpop.trf.xlu0
    %v2794 = vpop.trf.xlu0
    %v2795 = vpop.trf.xlu0
    %v2796 = vpop.trf.xlu0
    %v2797 = vpop.trf.xlu0
    %v2798 = vpop.trf.xlu0
    %v2799 = vpop.trf.xlu0
    %v2800 = vpop.trf.xlu0
    %v2801 = vpop.trf.xlu0
    %v2802 = vpop.trf.xlu0
    %v2803 = vpop.trf.xlu0
    %v2804 = vpop.trf.xlu0
    %v2805 = vpop.trf.xlu0
    %2806 = vxpose.xlu0.b32.start [1/16] %v2643, 128
    %2807 = vxpose.xlu0.b32.cont [2/16] 0.0, 128
    %2808 = vxpose.xlu0.b32.cont [3/16] 0.0, 128
    %2809 = vxpose.xlu0.b32.cont [4/16] 0.0, 128
    %2810 = vxpose.xlu0.b32.cont [5/16] 0.0, 128
    %2811 = vxpose.xlu0.b32.cont [6/16] 0.0, 128
    %2812 = vxpose.xlu0.b32.cont [7/16] 0.0, 128
    %2813 = vxpose.xlu0.b32.cont [8/16] 0.0, 128
    %2814 = vxpose.xlu0.b32.cont [9/16] 0.0, 128
    %2815 = vxpose.xlu0.b32.cont [10/16] 0.0, 128
    %2816 = vxpose.xlu0.b32.cont [11/16] 0.0, 128
    %2817 = vxpose.xlu0.b32.cont [12/16] 0.0, 128
    %2818 = vxpose.xlu0.b32.cont [13/16] 0.0, 128
    %2819 = vxpose.xlu0.b32.cont [14/16] 0.0, 128
    %2820 = vxpose.xlu0.b32.cont [15/16] 0.0, 128
    %2821 = vxpose.xlu0.b32.end [16/16] 0.0, 128
    %v2822 = vpop.trf.xlu0
    %v2823 = vpop.trf.xlu0
    %v2824 = vpop.trf.xlu0
    %v2825 = vpop.trf.xlu0
    %v2826 = vpop.trf.xlu0
    %v2827 = vpop.trf.xlu0
    %v2828 = vpop.trf.xlu0
    %v2829 = vpop.trf.xlu0
    %v2830 = vpop.trf.xlu0
    %v2831 = vpop.trf.xlu0
    %v2832 = vpop.trf.xlu0
    %v2833 = vpop.trf.xlu0
    %v2834 = vpop.trf.xlu0
    %v2835 = vpop.trf.xlu0
    %v2836 = vpop.trf.xlu0
    %v2837 = vpop.trf.xlu0
    %2838 = vxpose.xlu0.b32.start [1/16] %v2644, 128
    %2839 = vxpose.xlu0.b32.cont [2/16] 0.0, 128
    %2840 = vxpose.xlu0.b32.cont [3/16] 0.0, 128
    %2841 = vxpose.xlu0.b32.cont [4/16] 0.0, 128
    %2842 = vxpose.xlu0.b32.cont [5/16] 0.0, 128
    %2843 = vxpose.xlu0.b32.cont [6/16] 0.0, 128
    %2844 = vxpose.xlu0.b32.cont [7/16] 0.0, 128
    %2845 = vxpose.xlu0.b32.cont [8/16] 0.0, 128
    %2846 = vxpose.xlu0.b32.cont [9/16] 0.0, 128
    %2847 = vxpose.xlu0.b32.cont [10/16] 0.0, 128
    %2848 = vxpose.xlu0.b32.cont [11/16] 0.0, 128
    %2849 = vxpose.xlu0.b32.cont [12/16] 0.0, 128
    %2850 = vxpose.xlu0.b32.cont [13/16] 0.0, 128
    %2851 = vxpose.xlu0.b32.cont [14/16] 0.0, 128
    %2852 = vxpose.xlu0.b32.cont [15/16] 0.0, 128
    %2853 = vxpose.xlu0.b32.end [16/16] 0.0, 128
    %v2854 = vpop.trf.xlu0
    %v2855 = vpop.trf.xlu0
    %v2856 = vpop.trf.xlu0
    %v2857 = vpop.trf.xlu0
    %v2858 = vpop.trf.xlu0
    %v2859 = vpop.trf.xlu0
    %v2860 = vpop.trf.xlu0
    %v2861 = vpop.trf.xlu0
    %v2862 = vpop.trf.xlu0
    %v2863 = vpop.trf.xlu0
    %v2864 = vpop.trf.xlu0
    %v2865 = vpop.trf.xlu0
    %v2866 = vpop.trf.xlu0
    %v2867 = vpop.trf.xlu0
    %v2868 = vpop.trf.xlu0
    %v2869 = vpop.trf.xlu0
    %2870 = vxpose.xlu0.b32.start [1/16] %v2645, 128
    %2871 = vxpose.xlu0.b32.cont [2/16] 0.0, 128
    %2872 = vxpose.xlu0.b32.cont [3/16] 0.0, 128
    %2873 = vxpose.xlu0.b32.cont [4/16] 0.0, 128
    %2874 = vxpose.xlu0.b32.cont [5/16] 0.0, 128
    %2875 = vxpose.xlu0.b32.cont [6/16] 0.0, 128
    %2876 = vxpose.xlu0.b32.cont [7/16] 0.0, 128
    %2877 = vxpose.xlu0.b32.cont [8/16] 0.0, 128
    %2878 = vxpose.xlu0.b32.cont [9/16] 0.0, 128
    %2879 = vxpose.xlu0.b32.cont [10/16] 0.0, 128
    %2880 = vxpose.xlu0.b32.cont [11/16] 0.0, 128
    %2881 = vxpose.xlu0.b32.cont [12/16] 0.0, 128
    %2882 = vxpose.xlu0.b32.cont [13/16] 0.0, 128
    %2883 = vxpose.xlu0.b32.cont [14/16] 0.0, 128
    %2884 = vxpose.xlu0.b32.cont [15/16] 0.0, 128
    %2885 = vxpose.xlu0.b32.end [16/16] 0.0, 128
    %v2886 = vpop.trf.xlu0
    %v2887 = vpop.trf.xlu0
    %v2888 = vpop.trf.xlu0
    %v2889 = vpop.trf.xlu0
    %v2890 = vpop.trf.xlu0
    %v2891 = vpop.trf.xlu0
    %v2892 = vpop.trf.xlu0
    %v2893 = vpop.trf.xlu0
    %v2894 = vpop.trf.xlu0
    %v2895 = vpop.trf.xlu0
    %v2896 = vpop.trf.xlu0
    %v2897 = vpop.trf.xlu0
    %v2898 = vpop.trf.xlu0
    %v2899 = vpop.trf.xlu0
    %v2900 = vpop.trf.xlu0
    %v2901 = vpop.trf.xlu0
    %v2903 = vsel %vm486, %v114, 0
    %v2906 = vsel %vm486, %v115, 0
    %v2909 = vsel %vm486, %v116, 0
    %v2912 = vsel %vm486, %v117, 0
    %v2915 = vsel %vm486, %v118, 0
    %v2918 = vsel %vm486, %v119, 0
    %v2921 = vsel %vm486, %v120, 0
    %v2924 = vsel %vm486, %v121, 0
    %2926 = vmatprep.subr.mxu0 0.0
    %2927 = vmatpush1.msra.mxu0 %v74
    %2928 = vmatprep.subr.mxu0 0.0
    %2929 = vmatpush1.msra.mxu0 %v75
    %2930 = vmatprep.subr.mxu0 0.0
    %2931 = vmatpush1.msra.mxu0 0.0
    %2932 = vmatprep.subr.mxu0 0.0
    %2933 = vmatpush1.msra.mxu0 0.0
    %2934 = vmatprep.subr.mxu0 0.0
    %2935 = vmatpush1.msra.mxu0 0.0
    %2936 = vmatprep.subr.mxu0 0.0
    %2937 = vmatpush1.msra.mxu0 0.0
    %2938 = vmatprep.subr.mxu0 0.0
    %2939 = vmatpush1.msra.mxu0 0.0
    %2940 = vmatprep.subr.mxu0 0.0
    %2941 = vmatpush1.msra.mxu0 0.0
    %2942 = vmatprep.subr.mxu0 0.0
    %2943 = vmatpush1.msra.mxu0 0.0
    %2944 = vmatprep.subr.mxu0 0.0
    %2945 = vmatpush1.msra.mxu0 0.0
    %2946 = vmatprep.subr.mxu0 0.0
    %2947 = vmatpush1.msra.mxu0 0.0
    %2948 = vmatprep.subr.mxu0 0.0
    %2949 = vmatpush1.msra.mxu0 0.0
    %2950 = vmatprep.subr.mxu0 0.0
    %2951 = vmatpush1.msra.mxu0 0.0
    %2952 = vmatprep.subr.mxu0 0.0
    %2953 = vmatpush1.msra.mxu0 0.0
    %2954 = vmatprep.subr.mxu0 0.0
    %2955 = vmatpush1.msra.mxu0 0.0
    %2956 = vmatprep.subr.mxu0 0.0
    %2957 = vmatpush1.msra.mxu0 0.0
    %2958 = vmatprep.subr.mxu0 0.0
    %2959 = vmatpush1.msra.mxu0 0.0
    %2960 = vmatprep.subr.mxu0 0.0
    %2961 = vmatpush1.msra.mxu0 0.0
    %2962 = vmatprep.subr.mxu0 0.0
    %2963 = vmatpush1.msra.mxu0 0.0
    %2964 = vmatprep.subr.mxu0 0.0
    %2965 = vmatpush1.msra.mxu0 0.0
    %2966 = vmatprep.subr.mxu0 0.0
    %2967 = vmatpush1.msra.mxu0 0.0
    %2968 = vmatprep.subr.mxu0 0.0
    %2969 = vmatpush1.msra.mxu0 0.0
    %2970 = vmatprep.subr.mxu0 0.0
    %2971 = vmatpush1.msra.mxu0 0.0
    %2972 = vmatprep.subr.mxu0 0.0
    %2973 = vmatpush1.msra.mxu0 0.0
    %2974 = vmatprep.subr.mxu0 0.0
    %2975 = vmatpush1.msra.mxu0 0.0
    %2976 = vmatprep.subr.mxu0 0.0
    %2977 = vmatpush1.msra.mxu0 0.0
    %2978 = vmatprep.subr.mxu0 0.0
    %2979 = vmatpush1.msra.mxu0 0.0
    %2980 = vmatprep.subr.mxu0 0.0
    %2981 = vmatpush1.msra.mxu0 0.0
    %2982 = vmatprep.subr.mxu0 0.0
    %2983 = vmatpush1.msra.mxu0 0.0
    %2984 = vmatprep.subr.mxu0 0.0
    %2985 = vmatpush1.msra.mxu0 0.0
    %2986 = vmatprep.subr.mxu0 0.0
    %2987 = vmatpush1.msra.mxu0 0.0
    %2988 = vmatprep.subr.mxu0 0.0
    %2989 = vmatpush1.msra.mxu0 0.0
    %2990 = vmatprep.mubr.f32.mxu0 0.0
    %2991 = vmatmul.mubr.f32.gmra.mrb[0].mxu0 %v2903
    %v2992 = vpop.f32.mrb[0].mxu0
    %v2993 = vadd.f32 0.0, %v2992
    %v2994 = vpop.f32.mrb[0].mxu0
    %2995 = vmatprep.mubr.f32.mxu0 0.0
    %2996 = vmatmul.mubr.f32.gmra.mrb[0].mxu0 %v2906
    %v2997 = vpop.f32.mrb[0].mxu0
    %v2998 = vadd.f32 0.0, %v2997
    %v2999 = vpop.f32.mrb[0].mxu0
    %3000 = vmatprep.mubr.f32.mxu0 0.0
    %3001 = vmatmul.mubr.f32.gmra.mrb[0].mxu0 %v2909
    %v3002 = vpop.f32.mrb[0].mxu0
    %v3003 = vadd.f32 0.0, %v3002
    %v3004 = vpop.f32.mrb[0].mxu0
    %3005 = vmatprep.mubr.f32.mxu0 0.0
    %3006 = vmatmul.mubr.f32.gmra.mrb[0].mxu0 %v2912
    %v3007 = vpop.f32.mrb[0].mxu0
    %v3008 = vadd.f32 0.0, %v3007
    %v3009 = vpop.f32.mrb[0].mxu0
    %3010 = vmatprep.mubr.f32.mxu0 0.0
    %3011 = vmatmul.mubr.f32.gmra.mrb[0].mxu0 %v2915
    %v3012 = vpop.f32.mrb[0].mxu0
    %v3013 = vadd.f32 0.0, %v3012
    %v3014 = vpop.f32.mrb[0].mxu0
    %3015 = vmatprep.mubr.f32.mxu0 0.0
    %3016 = vmatmul.mubr.f32.gmra.mrb[0].mxu0 %v2918
    %v3017 = vpop.f32.mrb[0].mxu0
    %v3018 = vadd.f32 0.0, %v3017
    %v3019 = vpop.f32.mrb[0].mxu0
    %3020 = vmatprep.mubr.f32.mxu0 0.0
    %3021 = vmatmul.mubr.f32.gmra.mrb[0].mxu0 %v2921
    %v3022 = vpop.f32.mrb[0].mxu0
    %v3023 = vadd.f32 0.0, %v3022
    %v3024 = vpop.f32.mrb[0].mxu0
    %3025 = vmatprep.mubr.f32.mxu0 0.0
    %3026 = vmatmul.mubr.f32.gmra.mrb[0].mxu0 %v2924
    %v3027 = vpop.f32.mrb[0].mxu0
    %v3028 = vadd.f32 0.0, %v3027
    %v3029 = vpop.f32.mrb[0].mxu0
    %3030 = vdwg.mxu0
    %3032 = vset.pattern.permute.xlu0 0
    %3033 = vperm.xlu0 %3032, %v2662
    %v3034 = vpop.permute.xlu0 %3033
    %3037 = vset.pattern.permute.xlu0 0
    %3038 = vperm.xlu0 %3037, %v2694
    %v3039 = vpop.permute.xlu0 %3038
    %3042 = vset.pattern.permute.xlu0 0
    %3043 = vperm.xlu0 %3042, %v2726
    %v3044 = vpop.permute.xlu0 %3043
    %3047 = vset.pattern.permute.xlu0 0
    %3048 = vperm.xlu0 %3047, %v2758
    %v3049 = vpop.permute.xlu0 %3048
    %3052 = vset.pattern.permute.xlu0 0
    %3053 = vperm.xlu0 %3052, %v2790
    %v3054 = vpop.permute.xlu0 %3053
    %3057 = vset.pattern.permute.xlu0 0
    %3058 = vperm.xlu0 %3057, %v2822
    %v3059 = vpop.permute.xlu0 %3058
    %3062 = vset.pattern.permute.xlu0 0
    %3063 = vperm.xlu0 %3062, %v2854
    %v3064 = vpop.permute.xlu0 %3063
    %3067 = vset.pattern.permute.xlu0 0
    %3068 = vperm.xlu0 %3067, %v2886
    %v3069 = vpop.permute.xlu0 %3068
    %v3071 = vmul.f32 %v2993, %v3034
    %v3072 = vmul.f32 %v2998, %v3039
    %v3073 = vmul.f32 %v3003, %v3044
    %v3074 = vmul.f32 %v3008, %v3049
    %v3075 = vmul.f32 %v3013, %v3054
    %v3076 = vmul.f32 %v3018, %v3059
    %v3077 = vmul.f32 %v3023, %v3064
    %v3078 = vmul.f32 %v3028, %v3069
    %3079 = vxpose.xlu0.b32.start [1/16] %v2574, 128
    %3080 = vxpose.xlu0.b32.cont [2/16] 0.0, 128
    %3081 = vxpose.xlu0.b32.cont [3/16] 0.0, 128
    %3082 = vxpose.xlu0.b32.cont [4/16] 0.0, 128
    %3083 = vxpose.xlu0.b32.cont [5/16] 0.0, 128
    %3084 = vxpose.xlu0.b32.cont [6/16] 0.0, 128
    %3085 = vxpose.xlu0.b32.cont [7/16] 0.0, 128
    %3086 = vxpose.xlu0.b32.cont [8/16] 0.0, 128
    %3087 = vxpose.xlu0.b32.cont [9/16] 0.0, 128
    %3088 = vxpose.xlu0.b32.cont [10/16] 0.0, 128
    %3089 = vxpose.xlu0.b32.cont [11/16] 0.0, 128
    %3090 = vxpose.xlu0.b32.cont [12/16] 0.0, 128
    %3091 = vxpose.xlu0.b32.cont [13/16] 0.0, 128
    %3092 = vxpose.xlu0.b32.cont [14/16] 0.0, 128
    %3093 = vxpose.xlu0.b32.cont [15/16] 0.0, 128
    %3094 = vxpose.xlu0.b32.end [16/16] 0.0, 128
    %v3095 = vpop.trf.xlu0
    %v3096 = vpop.trf.xlu0
    %v3097 = vpop.trf.xlu0
    %v3098 = vpop.trf.xlu0
    %v3099 = vpop.trf.xlu0
    %v3100 = vpop.trf.xlu0
    %v3101 = vpop.trf.xlu0
    %v3102 = vpop.trf.xlu0
    %v3103 = vpop.trf.xlu0
    %v3104 = vpop.trf.xlu0
    %v3105 = vpop.trf.xlu0
    %v3106 = vpop.trf.xlu0
    %v3107 = vpop.trf.xlu0
    %v3108 = vpop.trf.xlu0
    %v3109 = vpop.trf.xlu0
    %v3110 = vpop.trf.xlu0
    %v3112 = vsel %vm165, %v3095, 0
    %3114 = vmatprep.subr.mxu0 0.0
    %3115 = vmatpush1.msra.mxu0 %v3071
    %3116 = vmatprep.subr.mxu0 0.0
    %3117 = vmatpush1.msra.mxu0 0.0
    %3118 = vmatprep.subr.mxu0 0.0
    %3119 = vmatpush1.msra.mxu0 0.0
    %3120 = vmatprep.subr.mxu0 0.0
    %3121 = vmatpush1.msra.mxu0 0.0
    %3122 = vmatprep.subr.mxu0 0.0
    %3123 = vmatpush1.msra.mxu0 0.0
    %3124 = vmatprep.subr.mxu0 0.0
    %3125 = vmatpush1.msra.mxu0 0.0
    %3126 = vmatprep.subr.mxu0 0.0
    %3127 = vmatpush1.msra.mxu0 0.0
    %3128 = vmatprep.subr.mxu0 0.0
    %3129 = vmatpush1.msra.mxu0 0.0
    %3130 = vmatprep.subr.mxu0 0.0
    %3131 = vmatpush1.msra.mxu0 0.0
    %3132 = vmatprep.subr.mxu0 0.0
    %3133 = vmatpush1.msra.mxu0 0.0
    %3134 = vmatprep.subr.mxu0 0.0
    %3135 = vmatpush1.msra.mxu0 0.0
    %3136 = vmatprep.subr.mxu0 0.0
    %3137 = vmatpush1.msra.mxu0 0.0
    %3138 = vmatprep.subr.mxu0 0.0
    %3139 = vmatpush1.msra.mxu0 0.0
    %3140 = vmatprep.subr.mxu0 0.0
    %3141 = vmatpush1.msra.mxu0 0.0
    %3142 = vmatprep.subr.mxu0 0.0
    %3143 = vmatpush1.msra.mxu0 0.0
    %3144 = vmatprep.subr.mxu0 0.0
    %3145 = vmatpush1.msra.mxu0 0.0
    %3146 = vmatprep.subr.mxu0 0.0
    %3147 = vmatpush1.msra.mxu0 0.0
    %3148 = vmatprep.subr.mxu0 0.0
    %3149 = vmatpush1.msra.mxu0 0.0
    %3150 = vmatprep.subr.mxu0 0.0
    %3151 = vmatpush1.msra.mxu0 0.0
    %3152 = vmatprep.subr.mxu0 0.0
    %3153 = vmatpush1.msra.mxu0 0.0
    %3154 = vmatprep.subr.mxu0 0.0
    %3155 = vmatpush1.msra.mxu0 0.0
    %3156 = vmatprep.subr.mxu0 0.0
    %3157 = vmatpush1.msra.mxu0 0.0
    %3158 = vmatprep.subr.mxu0 0.0
    %3159 = vmatpush1.msra.mxu0 0.0
    %3160 = vmatprep.subr.mxu0 0.0
    %3161 = vmatpush1.msra.mxu0 0.0
    %3162 = vmatprep.subr.mxu0 0.0
    %3163 = vmatpush1.msra.mxu0 0.0
    %3164 = vmatprep.subr.mxu0 0.0
    %3165 = vmatpush1.msra.mxu0 0.0
    %3166 = vmatprep.subr.mxu0 0.0
    %3167 = vmatpush1.msra.mxu0 0.0
    %3168 = vmatprep.subr.mxu0 0.0
    %3169 = vmatpush1.msra.mxu0 0.0
    %3170 = vmatprep.subr.mxu0 0.0
    %3171 = vmatpush1.msra.mxu0 0.0
    %3172 = vmatprep.subr.mxu0 0.0
    %3173 = vmatpush1.msra.mxu0 0.0
    %3174 = vmatprep.subr.mxu0 0.0
    %3175 = vmatpush1.msra.mxu0 0.0
    %3176 = vmatprep.subr.mxu0 0.0
    %3177 = vmatpush1.msra.mxu0 0.0
    %3178 = vmatprep.mubr.f32.mxu0 0.0
    %3179 = vmatmul.mubr.f32.gmra.mrb[0].mxu0 %v3112
    %v3180 = vpop.f32.mrb[0].mxu0
    %v3181 = vadd.f32 0.0, %v3180
    %v3182 = vpop.f32.mrb[0].mxu0
    %3183 = vdwg.mxu0
    %3184 = vxpose.xlu0.b32.start [1/16] %v2575, 128
    %3185 = vxpose.xlu0.b32.cont [2/16] 0.0, 128
    %3186 = vxpose.xlu0.b32.cont [3/16] 0.0, 128
    %3187 = vxpose.xlu0.b32.cont [4/16] 0.0, 128
    %3188 = vxpose.xlu0.b32.cont [5/16] 0.0, 128
    %3189 = vxpose.xlu0.b32.cont [6/16] 0.0, 128
    %3190 = vxpose.xlu0.b32.cont [7/16] 0.0, 128
    %3191 = vxpose.xlu0.b32.cont [8/16] 0.0, 128
    %3192 = vxpose.xlu0.b32.cont [9/16] 0.0, 128
    %3193 = vxpose.xlu0.b32.cont [10/16] 0.0, 128
    %3194 = vxpose.xlu0.b32.cont [11/16] 0.0, 128
    %3195 = vxpose.xlu0.b32.cont [12/16] 0.0, 128
    %3196 = vxpose.xlu0.b32.cont [13/16] 0.0, 128
    %3197 = vxpose.xlu0.b32.cont [14/16] 0.0, 128
    %3198 = vxpose.xlu0.b32.cont [15/16] 0.0, 128
    %3199 = vxpose.xlu0.b32.end [16/16] 0.0, 128
    %v3200 = vpop.trf.xlu0
    %v3201 = vpop.trf.xlu0
    %v3202 = vpop.trf.xlu0
    %v3203 = vpop.trf.xlu0
    %v3204 = vpop.trf.xlu0
    %v3205 = vpop.trf.xlu0
    %v3206 = vpop.trf.xlu0
    %v3207 = vpop.trf.xlu0
    %v3208 = vpop.trf.xlu0
    %v3209 = vpop.trf.xlu0
    %v3210 = vpop.trf.xlu0
    %v3211 = vpop.trf.xlu0
    %v3212 = vpop.trf.xlu0
    %v3213 = vpop.trf.xlu0
    %v3214 = vpop.trf.xlu0
    %v3215 = vpop.trf.xlu0
    %v3217 = vsel %vm165, %v3200, 0
    %3219 = vmatprep.subr.mxu0 0.0
    %3220 = vmatpush1.msra.mxu0 %v3072
    %3221 = vmatprep.subr.mxu0 0.0
    %3222 = vmatpush1.msra.mxu0 0.0
    %3223 = vmatprep.subr.mxu0 0.0
    %3224 = vmatpush1.msra.mxu0 0.0
    %3225 = vmatprep.subr.mxu0 0.0
    %3226 = vmatpush1.msra.mxu0 0.0
    %3227 = vmatprep.subr.mxu0 0.0
    %3228 = vmatpush1.msra.mxu0 0.0
    %3229 = vmatprep.subr.mxu0 0.0
    %3230 = vmatpush1.msra.mxu0 0.0
    %3231 = vmatprep.subr.mxu0 0.0
    %3232 = vmatpush1.msra.mxu0 0.0
    %3233 = vmatprep.subr.mxu0 0.0
    %3234 = vmatpush1.msra.mxu0 0.0
    %3235 = vmatprep.subr.mxu0 0.0
    %3236 = vmatpush1.msra.mxu0 0.0
    %3237 = vmatprep.subr.mxu0 0.0
    %3238 = vmatpush1.msra.mxu0 0.0
    %3239 = vmatprep.subr.mxu0 0.0
    %3240 = vmatpush1.msra.mxu0 0.0
    %3241 = vmatprep.subr.mxu0 0.0
    %3242 = vmatpush1.msra.mxu0 0.0
    %3243 = vmatprep.subr.mxu0 0.0
    %3244 = vmatpush1.msra.mxu0 0.0
    %3245 = vmatprep.subr.mxu0 0.0
    %3246 = vmatpush1.msra.mxu0 0.0
    %3247 = vmatprep.subr.mxu0 0.0
    %3248 = vmatpush1.msra.mxu0 0.0
    %3249 = vmatprep.subr.mxu0 0.0
    %3250 = vmatpush1.msra.mxu0 0.0
    %3251 = vmatprep.subr.mxu0 0.0
    %3252 = vmatpush1.msra.mxu0 0.0
    %3253 = vmatprep.subr.mxu0 0.0
    %3254 = vmatpush1.msra.mxu0 0.0
    %3255 = vmatprep.subr.mxu0 0.0
    %3256 = vmatpush1.msra.mxu0 0.0
    %3257 = vmatprep.subr.mxu0 0.0
    %3258 = vmatpush1.msra.mxu0 0.0
    %3259 = vmatprep.subr.mxu0 0.0
    %3260 = vmatpush1.msra.mxu0 0.0
    %3261 = vmatprep.subr.mxu0 0.0
    %3262 = vmatpush1.msra.mxu0 0.0
    %3263 = vmatprep.subr.mxu0 0.0
    %3264 = vmatpush1.msra.mxu0 0.0
    %3265 = vmatprep.subr.mxu0 0.0
    %3266 = vmatpush1.msra.mxu0 0.0
    %3267 = vmatprep.subr.mxu0 0.0
    %3268 = vmatpush1.msra.mxu0 0.0
    %3269 = vmatprep.subr.mxu0 0.0
    %3270 = vmatpush1.msra.mxu0 0.0
    %3271 = vmatprep.subr.mxu0 0.0
    %3272 = vmatpush1.msra.mxu0 0.0
    %3273 = vmatprep.subr.mxu0 0.0
    %3274 = vmatpush1.msra.mxu0 0.0
    %3275 = vmatprep.subr.mxu0 0.0
    %3276 = vmatpush1.msra.mxu0 0.0
    %3277 = vmatprep.subr.mxu0 0.0
    %3278 = vmatpush1.msra.mxu0 0.0
    %3279 = vmatprep.subr.mxu0 0.0
    %3280 = vmatpush1.msra.mxu0 0.0
    %3281 = vmatprep.subr.mxu0 0.0
    %3282 = vmatpush1.msra.mxu0 0.0
    %3283 = vmatprep.mubr.f32.mxu0 0.0
    %3284 = vmatmul.mubr.f32.gmra.mrb[0].mxu0 %v3217
    %v3285 = vpop.f32.mrb[0].mxu0
    %v3286 = vadd.f32 0.0, %v3285
    %v3287 = vpop.f32.mrb[0].mxu0
    %3288 = vdwg.mxu0
    %3289 = vxpose.xlu0.b32.start [1/16] %v2576, 128
    %3290 = vxpose.xlu0.b32.cont [2/16] 0.0, 128
    %3291 = vxpose.xlu0.b32.cont [3/16] 0.0, 128
    %3292 = vxpose.xlu0.b32.cont [4/16] 0.0, 128
    %3293 = vxpose.xlu0.b32.cont [5/16] 0.0, 128
    %3294 = vxpose.xlu0.b32.cont [6/16] 0.0, 128
    %3295 = vxpose.xlu0.b32.cont [7/16] 0.0, 128
    %3296 = vxpose.xlu0.b32.cont [8/16] 0.0, 128
    %3297 = vxpose.xlu0.b32.cont [9/16] 0.0, 128
    %3298 = vxpose.xlu0.b32.cont [10/16] 0.0, 128
    %3299 = vxpose.xlu0.b32.cont [11/16] 0.0, 128
    %3300 = vxpose.xlu0.b32.cont [12/16] 0.0, 128
    %3301 = vxpose.xlu0.b32.cont [13/16] 0.0, 128
    %3302 = vxpose.xlu0.b32.cont [14/16] 0.0, 128
    %3303 = vxpose.xlu0.b32.cont [15/16] 0.0, 128
    %3304 = vxpose.xlu0.b32.end [16/16] 0.0, 128
    %v3305 = vpop.trf.xlu0
    %v3306 = vpop.trf.xlu0
    %v3307 = vpop.trf.xlu0
    %v3308 = vpop.trf.xlu0
    %v3309 = vpop.trf.xlu0
    %v3310 = vpop.trf.xlu0
    %v3311 = vpop.trf.xlu0
    %v3312 = vpop.trf.xlu0
    %v3313 = vpop.trf.xlu0
    %v3314 = vpop.trf.xlu0
    %v3315 = vpop.trf.xlu0
    %v3316 = vpop.trf.xlu0
    %v3317 = vpop.trf.xlu0
    %v3318 = vpop.trf.xlu0
    %v3319 = vpop.trf.xlu0
    %v3320 = vpop.trf.xlu0
    %v3322 = vsel %vm165, %v3305, 0
    %3324 = vmatprep.subr.mxu0 0.0
    %3325 = vmatpush1.msra.mxu0 %v3073
    %3326 = vmatprep.subr.mxu0 0.0
    %3327 = vmatpush1.msra.mxu0 0.0
    %3328 = vmatprep.subr.mxu0 0.0
    %3329 = vmatpush1.msra.mxu0 0.0
    %3330 = vmatprep.subr.mxu0 0.0
    %3331 = vmatpush1.msra.mxu0 0.0
    %3332 = vmatprep.subr.mxu0 0.0
    %3333 = vmatpush1.msra.mxu0 0.0
    %3334 = vmatprep.subr.mxu0 0.0
    %3335 = vmatpush1.msra.mxu0 0.0
    %3336 = vmatprep.subr.mxu0 0.0
    %3337 = vmatpush1.msra.mxu0 0.0
    %3338 = vmatprep.subr.mxu0 0.0
    %3339 = vmatpush1.msra.mxu0 0.0
    %3340 = vmatprep.subr.mxu0 0.0
    %3341 = vmatpush1.msra.mxu0 0.0
    %3342 = vmatprep.subr.mxu0 0.0
    %3343 = vmatpush1.msra.mxu0 0.0
    %3344 = vmatprep.subr.mxu0 0.0
    %3345 = vmatpush1.msra.mxu0 0.0
    %3346 = vmatprep.subr.mxu0 0.0
    %3347 = vmatpush1.msra.mxu0 0.0
    %3348 = vmatprep.subr.mxu0 0.0
    %3349 = vmatpush1.msra.mxu0 0.0
    %3350 = vmatprep.subr.mxu0 0.0
    %3351 = vmatpush1.msra.mxu0 0.0
    %3352 = vmatprep.subr.mxu0 0.0
    %3353 = vmatpush1.msra.mxu0 0.0
    %3354 = vmatprep.subr.mxu0 0.0
    %3355 = vmatpush1.msra.mxu0 0.0
    %3356 = vmatprep.subr.mxu0 0.0
    %3357 = vmatpush1.msra.mxu0 0.0
    %3358 = vmatprep.subr.mxu0 0.0
    %3359 = vmatpush1.msra.mxu0 0.0
    %3360 = vmatprep.subr.mxu0 0.0
    %3361 = vmatpush1.msra.mxu0 0.0
    %3362 = vmatprep.subr.mxu0 0.0
    %3363 = vmatpush1.msra.mxu0 0.0
    %3364 = vmatprep.subr.mxu0 0.0
    %3365 = vmatpush1.msra.mxu0 0.0
    %3366 = vmatprep.subr.mxu0 0.0
    %3367 = vmatpush1.msra.mxu0 0.0
    %3368 = vmatprep.subr.mxu0 0.0
    %3369 = vmatpush1.msra.mxu0 0.0
    %3370 = vmatprep.subr.mxu0 0.0
    %3371 = vmatpush1.msra.mxu0 0.0
    %3372 = vmatprep.subr.mxu0 0.0
    %3373 = vmatpush1.msra.mxu0 0.0
    %3374 = vmatprep.subr.mxu0 0.0
    %3375 = vmatpush1.msra.mxu0 0.0
    %3376 = vmatprep.subr.mxu0 0.0
    %3377 = vmatpush1.msra.mxu0 0.0
    %3378 = vmatprep.subr.mxu0 0.0
    %3379 = vmatpush1.msra.mxu0 0.0
    %3380 = vmatprep.subr.mxu0 0.0
    %3381 = vmatpush1.msra.mxu0 0.0
    %3382 = vmatprep.subr.mxu0 0.0
    %3383 = vmatpush1.msra.mxu0 0.0
    %3384 = vmatprep.subr.mxu0 0.0
    %3385 = vmatpush1.msra.mxu0 0.0
    %3386 = vmatprep.subr.mxu0 0.0
    %3387 = vmatpush1.msra.mxu0 0.0
    %3388 = vmatprep.mubr.f32.mxu0 0.0
    %3389 = vmatmul.mubr.f32.gmra.mrb[0].mxu0 %v3322
    %v3390 = vpop.f32.mrb[0].mxu0
    %v3391 = vadd.f32 0.0, %v3390
    %v3392 = vpop.f32.mrb[0].mxu0
    %3393 = vdwg.mxu0
    %3394 = vxpose.xlu0.b32.start [1/16] %v2577, 128
    %3395 = vxpose.xlu0.b32.cont [2/16] 0.0, 128
    %3396 = vxpose.xlu0.b32.cont [3/16] 0.0, 128
    %3397 = vxpose.xlu0.b32.cont [4/16] 0.0, 128
    %3398 = vxpose.xlu0.b32.cont [5/16] 0.0, 128
    %3399 = vxpose.xlu0.b32.cont [6/16] 0.0, 128
    %3400 = vxpose.xlu0.b32.cont [7/16] 0.0, 128
    %3401 = vxpose.xlu0.b32.cont [8/16] 0.0, 128
    %3402 = vxpose.xlu0.b32.cont [9/16] 0.0, 128
    %3403 = vxpose.xlu0.b32.cont [10/16] 0.0, 128
    %3404 = vxpose.xlu0.b32.cont [11/16] 0.0, 128
    %3405 = vxpose.xlu0.b32.cont [12/16] 0.0, 128
    %3406 = vxpose.xlu0.b32.cont [13/16] 0.0, 128
    %3407 = vxpose.xlu0.b32.cont [14/16] 0.0, 128
    %3408 = vxpose.xlu0.b32.cont [15/16] 0.0, 128
    %3409 = vxpose.xlu0.b32.end [16/16] 0.0, 128
    %v3410 = vpop.trf.xlu0
    %v3411 = vpop.trf.xlu0
    %v3412 = vpop.trf.xlu0
    %v3413 = vpop.trf.xlu0
    %v3414 = vpop.trf.xlu0
    %v3415 = vpop.trf.xlu0
    %v3416 = vpop.trf.xlu0
    %v3417 = vpop.trf.xlu0
    %v3418 = vpop.trf.xlu0
    %v3419 = vpop.trf.xlu0
    %v3420 = vpop.trf.xlu0
    %v3421 = vpop.trf.xlu0
    %v3422 = vpop.trf.xlu0
    %v3423 = vpop.trf.xlu0
    %v3424 = vpop.trf.xlu0
    %v3425 = vpop.trf.xlu0
    %v3427 = vsel %vm165, %v3410, 0
    %3429 = vmatprep.subr.mxu0 0.0
    %3430 = vmatpush1.msra.mxu0 %v3074
    %3431 = vmatprep.subr.mxu0 0.0
    %3432 = vmatpush1.msra.mxu0 0.0
    %3433 = vmatprep.subr.mxu0 0.0
    %3434 = vmatpush1.msra.mxu0 0.0
    %3435 = vmatprep.subr.mxu0 0.0
    %3436 = vmatpush1.msra.mxu0 0.0
    %3437 = vmatprep.subr.mxu0 0.0
    %3438 = vmatpush1.msra.mxu0 0.0
    %3439 = vmatprep.subr.mxu0 0.0
    %3440 = vmatpush1.msra.mxu0 0.0
    %3441 = vmatprep.subr.mxu0 0.0
    %3442 = vmatpush1.msra.mxu0 0.0
    %3443 = vmatprep.subr.mxu0 0.0
    %3444 = vmatpush1.msra.mxu0 0.0
    %3445 = vmatprep.subr.mxu0 0.0
    %3446 = vmatpush1.msra.mxu0 0.0
    %3447 = vmatprep.subr.mxu0 0.0
    %3448 = vmatpush1.msra.mxu0 0.0
    %3449 = vmatprep.subr.mxu0 0.0
    %3450 = vmatpush1.msra.mxu0 0.0
    %3451 = vmatprep.subr.mxu0 0.0
    %3452 = vmatpush1.msra.mxu0 0.0
    %3453 = vmatprep.subr.mxu0 0.0
    %3454 = vmatpush1.msra.mxu0 0.0
    %3455 = vmatprep.subr.mxu0 0.0
    %3456 = vmatpush1.msra.mxu0 0.0
    %3457 = vmatprep.subr.mxu0 0.0
    %3458 = vmatpush1.msra.mxu0 0.0
    %3459 = vmatprep.subr.mxu0 0.0
    %3460 = vmatpush1.msra.mxu0 0.0
    %3461 = vmatprep.subr.mxu0 0.0
    %3462 = vmatpush1.msra.mxu0 0.0
    %3463 = vmatprep.subr.mxu0 0.0
    %3464 = vmatpush1.msra.mxu0 0.0
    %3465 = vmatprep.subr.mxu0 0.0
    %3466 = vmatpush1.msra.mxu0 0.0
    %3467 = vmatprep.subr.mxu0 0.0
    %3468 = vmatpush1.msra.mxu0 0.0
    %3469 = vmatprep.subr.mxu0 0.0
    %3470 = vmatpush1.msra.mxu0 0.0
    %3471 = vmatprep.subr.mxu0 0.0
    %3472 = vmatpush1.msra.mxu0 0.0
    %3473 = vmatprep.subr.mxu0 0.0
    %3474 = vmatpush1.msra.mxu0 0.0
    %3475 = vmatprep.subr.mxu0 0.0
    %3476 = vmatpush1.msra.mxu0 0.0
    %3477 = vmatprep.subr.mxu0 0.0
    %3478 = vmatpush1.msra.mxu0 0.0
    %3479 = vmatprep.subr.mxu0 0.0
    %3480 = vmatpush1.msra.mxu0 0.0
    %3481 = vmatprep.subr.mxu0 0.0
    %3482 = vmatpush1.msra.mxu0 0.0
    %3483 = vmatprep.subr.mxu0 0.0
    %3484 = vmatpush1.msra.mxu0 0.0
    %3485 = vmatprep.subr.mxu0 0.0
    %3486 = vmatpush1.msra.mxu0 0.0
    %3487 = vmatprep.subr.mxu0 0.0
    %3488 = vmatpush1.msra.mxu0 0.0
    %3489 = vmatprep.subr.mxu0 0.0
    %3490 = vmatpush1.msra.mxu0 0.0
    %3491 = vmatprep.subr.mxu0 0.0
    %3492 = vmatpush1.msra.mxu0 0.0
    %3493 = vmatprep.mubr.f32.mxu0 0.0
    %3494 = vmatmul.mubr.f32.gmra.mrb[0].mxu0 %v3427
    %v3495 = vpop.f32.mrb[0].mxu0
    %v3496 = vadd.f32 0.0, %v3495
    %v3497 = vpop.f32.mrb[0].mxu0
    %3498 = vdwg.mxu0
    %3499 = vxpose.xlu0.b32.start [1/16] %v2578, 128
    %3500 = vxpose.xlu0.b32.cont [2/16] 0.0, 128
    %3501 = vxpose.xlu0.b32.cont [3/16] 0.0, 128
    %3502 = vxpose.xlu0.b32.cont [4/16] 0.0, 128
    %3503 = vxpose.xlu0.b32.cont [5/16] 0.0, 128
    %3504 = vxpose.xlu0.b32.cont [6/16] 0.0, 128
    %3505 = vxpose.xlu0.b32.cont [7/16] 0.0, 128
    %3506 = vxpose.xlu0.b32.cont [8/16] 0.0, 128
    %3507 = vxpose.xlu0.b32.cont [9/16] 0.0, 128
    %3508 = vxpose.xlu0.b32.cont [10/16] 0.0, 128
    %3509 = vxpose.xlu0.b32.cont [11/16] 0.0, 128
    %3510 = vxpose.xlu0.b32.cont [12/16] 0.0, 128
    %3511 = vxpose.xlu0.b32.cont [13/16] 0.0, 128
    %3512 = vxpose.xlu0.b32.cont [14/16] 0.0, 128
    %3513 = vxpose.xlu0.b32.cont [15/16] 0.0, 128
    %3514 = vxpose.xlu0.b32.end [16/16] 0.0, 128
    %v3515 = vpop.trf.xlu0
    %v3516 = vpop.trf.xlu0
    %v3517 = vpop.trf.xlu0
    %v3518 = vpop.trf.xlu0
    %v3519 = vpop.trf.xlu0
    %v3520 = vpop.trf.xlu0
    %v3521 = vpop.trf.xlu0
    %v3522 = vpop.trf.xlu0
    %v3523 = vpop.trf.xlu0
    %v3524 = vpop.trf.xlu0
    %v3525 = vpop.trf.xlu0
    %v3526 = vpop.trf.xlu0
    %v3527 = vpop.trf.xlu0
    %v3528 = vpop.trf.xlu0
    %v3529 = vpop.trf.xlu0
    %v3530 = vpop.trf.xlu0
    %v3532 = vsel %vm165, %v3515, 0
    %3534 = vmatprep.subr.mxu0 0.0
    %3535 = vmatpush1.msra.mxu0 %v3075
    %3536 = vmatprep.subr.mxu0 0.0
    %3537 = vmatpush1.msra.mxu0 0.0
    %3538 = vmatprep.subr.mxu0 0.0
    %3539 = vmatpush1.msra.mxu0 0.0
    %3540 = vmatprep.subr.mxu0 0.0
    %3541 = vmatpush1.msra.mxu0 0.0
    %3542 = vmatprep.subr.mxu0 0.0
    %3543 = vmatpush1.msra.mxu0 0.0
    %3544 = vmatprep.subr.mxu0 0.0
    %3545 = vmatpush1.msra.mxu0 0.0
    %3546 = vmatprep.subr.mxu0 0.0
    %3547 = vmatpush1.msra.mxu0 0.0
    %3548 = vmatprep.subr.mxu0 0.0
    %3549 = vmatpush1.msra.mxu0 0.0
    %3550 = vmatprep.subr.mxu0 0.0
    %3551 = vmatpush1.msra.mxu0 0.0
    %3552 = vmatprep.subr.mxu0 0.0
    %3553 = vmatpush1.msra.mxu0 0.0
    %3554 = vmatprep.subr.mxu0 0.0
    %3555 = vmatpush1.msra.mxu0 0.0
    %3556 = vmatprep.subr.mxu0 0.0
    %3557 = vmatpush1.msra.mxu0 0.0
    %3558 = vmatprep.subr.mxu0 0.0
    %3559 = vmatpush1.msra.mxu0 0.0
    %3560 = vmatprep.subr.mxu0 0.0
    %3561 = vmatpush1.msra.mxu0 0.0
    %3562 = vmatprep.subr.mxu0 0.0
    %3563 = vmatpush1.msra.mxu0 0.0
    %3564 = vmatprep.subr.mxu0 0.0
    %3565 = vmatpush1.msra.mxu0 0.0
    %3566 = vmatprep.subr.mxu0 0.0
    %3567 = vmatpush1.msra.mxu0 0.0
    %3568 = vmatprep.subr.mxu0 0.0
    %3569 = vmatpush1.msra.mxu0 0.0
    %3570 = vmatprep.subr.mxu0 0.0
    %3571 = vmatpush1.msra.mxu0 0.0
    %3572 = vmatprep.subr.mxu0 0.0
    %3573 = vmatpush1.msra.mxu0 0.0
    %3574 = vmatprep.subr.mxu0 0.0
    %3575 = vmatpush1.msra.mxu0 0.0
    %3576 = vmatprep.subr.mxu0 0.0
    %3577 = vmatpush1.msra.mxu0 0.0
    %3578 = vmatprep.subr.mxu0 0.0
    %3579 = vmatpush1.msra.mxu0 0.0
    %3580 = vmatprep.subr.mxu0 0.0
    %3581 = vmatpush1.msra.mxu0 0.0
    %3582 = vmatprep.subr.mxu0 0.0
    %3583 = vmatpush1.msra.mxu0 0.0
    %3584 = vmatprep.subr.mxu0 0.0
    %3585 = vmatpush1.msra.mxu0 0.0
    %3586 = vmatprep.subr.mxu0 0.0
    %3587 = vmatpush1.msra.mxu0 0.0
    %3588 = vmatprep.subr.mxu0 0.0
    %3589 = vmatpush1.msra.mxu0 0.0
    %3590 = vmatprep.subr.mxu0 0.0
    %3591 = vmatpush1.msra.mxu0 0.0
    %3592 = vmatprep.subr.mxu0 0.0
    %3593 = vmatpush1.msra.mxu0 0.0
    %3594 = vmatprep.subr.mxu0 0.0
    %3595 = vmatpush1.msra.mxu0 0.0
    %3596 = vmatprep.subr.mxu0 0.0
    %3597 = vmatpush1.msra.mxu0 0.0
    %3598 = vmatprep.mubr.f32.mxu0 0.0
    %3599 = vmatmul.mubr.f32.gmra.mrb[0].mxu0 %v3532
    %v3600 = vpop.f32.mrb[0].mxu0
    %v3601 = vadd.f32 0.0, %v3600
    %v3602 = vpop.f32.mrb[0].mxu0
    %3603 = vdwg.mxu0
    %3604 = vxpose.xlu0.b32.start [1/16] %v2579, 128
    %3605 = vxpose.xlu0.b32.cont [2/16] 0.0, 128
    %3606 = vxpose.xlu0.b32.cont [3/16] 0.0, 128
    %3607 = vxpose.xlu0.b32.cont [4/16] 0.0, 128
    %3608 = vxpose.xlu0.b32.cont [5/16] 0.0, 128
    %3609 = vxpose.xlu0.b32.cont [6/16] 0.0, 128
    %3610 = vxpose.xlu0.b32.cont [7/16] 0.0, 128
    %3611 = vxpose.xlu0.b32.cont [8/16] 0.0, 128
    %3612 = vxpose.xlu0.b32.cont [9/16] 0.0, 128
    %3613 = vxpose.xlu0.b32.cont [10/16] 0.0, 128
    %3614 = vxpose.xlu0.b32.cont [11/16] 0.0, 128
    %3615 = vxpose.xlu0.b32.cont [12/16] 0.0, 128
    %3616 = vxpose.xlu0.b32.cont [13/16] 0.0, 128
    %3617 = vxpose.xlu0.b32.cont [14/16] 0.0, 128
    %3618 = vxpose.xlu0.b32.cont [15/16] 0.0, 128
    %3619 = vxpose.xlu0.b32.end [16/16] 0.0, 128
    %v3620 = vpop.trf.xlu0
    %v3621 = vpop.trf.xlu0
    %v3622 = vpop.trf.xlu0
    %v3623 = vpop.trf.xlu0
    %v3624 = vpop.trf.xlu0
    %v3625 = vpop.trf.xlu0
    %v3626 = vpop.trf.xlu0
    %v3627 = vpop.trf.xlu0
    %v3628 = vpop.trf.xlu0
    %v3629 = vpop.trf.xlu0
    %v3630 = vpop.trf.xlu0
    %v3631 = vpop.trf.xlu0
    %v3632 = vpop.trf.xlu0
    %v3633 = vpop.trf.xlu0
    %v3634 = vpop.trf.xlu0
    %v3635 = vpop.trf.xlu0
    %v3637 = vsel %vm165, %v3620, 0
    %3639 = vmatprep.subr.mxu0 0.0
    %3640 = vmatpush1.msra.mxu0 %v3076
    %3641 = vmatprep.subr.mxu0 0.0
    %3642 = vmatpush1.msra.mxu0 0.0
    %3643 = vmatprep.subr.mxu0 0.0
    %3644 = vmatpush1.msra.mxu0 0.0
    %3645 = vmatprep.subr.mxu0 0.0
    %3646 = vmatpush1.msra.mxu0 0.0
    %3647 = vmatprep.subr.mxu0 0.0
    %3648 = vmatpush1.msra.mxu0 0.0
    %3649 = vmatprep.subr.mxu0 0.0
    %3650 = vmatpush1.msra.mxu0 0.0
    %3651 = vmatprep.subr.mxu0 0.0
    %3652 = vmatpush1.msra.mxu0 0.0
    %3653 = vmatprep.subr.mxu0 0.0
    %3654 = vmatpush1.msra.mxu0 0.0
    %3655 = vmatprep.subr.mxu0 0.0
    %3656 = vmatpush1.msra.mxu0 0.0
    %3657 = vmatprep.subr.mxu0 0.0
    %3658 = vmatpush1.msra.mxu0 0.0
    %3659 = vmatprep.subr.mxu0 0.0
    %3660 = vmatpush1.msra.mxu0 0.0
    %3661 = vmatprep.subr.mxu0 0.0
    %3662 = vmatpush1.msra.mxu0 0.0
    %3663 = vmatprep.subr.mxu0 0.0
    %3664 = vmatpush1.msra.mxu0 0.0
    %3665 = vmatprep.subr.mxu0 0.0
    %3666 = vmatpush1.msra.mxu0 0.0
    %3667 = vmatprep.subr.mxu0 0.0
    %3668 = vmatpush1.msra.mxu0 0.0
    %3669 = vmatprep.subr.mxu0 0.0
    %3670 = vmatpush1.msra.mxu0 0.0
    %3671 = vmatprep.subr.mxu0 0.0
    %3672 = vmatpush1.msra.mxu0 0.0
    %3673 = vmatprep.subr.mxu0 0.0
    %3674 = vmatpush1.msra.mxu0 0.0
    %3675 = vmatprep.subr.mxu0 0.0
    %3676 = vmatpush1.msra.mxu0 0.0
    %3677 = vmatprep.subr.mxu0 0.0
    %3678 = vmatpush1.msra.mxu0 0.0
    %3679 = vmatprep.subr.mxu0 0.0
    %3680 = vmatpush1.msra.mxu0 0.0
    %3681 = vmatprep.subr.mxu0 0.0
    %3682 = vmatpush1.msra.mxu0 0.0
    %3683 = vmatprep.subr.mxu0 0.0
    %3684 = vmatpush1.msra.mxu0 0.0
    %3685 = vmatprep.subr.mxu0 0.0
    %3686 = vmatpush1.msra.mxu0 0.0
    %3687 = vmatprep.subr.mxu0 0.0
    %3688 = vmatpush1.msra.mxu0 0.0
    %3689 = vmatprep.subr.mxu0 0.0
    %3690 = vmatpush1.msra.mxu0 0.0
    %3691 = vmatprep.subr.mxu0 0.0
    %3692 = vmatpush1.msra.mxu0 0.0
    %3693 = vmatprep.subr.mxu0 0.0
    %3694 = vmatpush1.msra.mxu0 0.0
    %3695 = vmatprep.subr.mxu0 0.0
    %3696 = vmatpush1.msra.mxu0 0.0
    %3697 = vmatprep.subr.mxu0 0.0
    %3698 = vmatpush1.msra.mxu0 0.0
    %3699 = vmatprep.subr.mxu0 0.0
    %3700 = vmatpush1.msra.mxu0 0.0
    %3701 = vmatprep.subr.mxu0 0.0
    %3702 = vmatpush1.msra.mxu0 0.0
    %3703 = vmatprep.mubr.f32.mxu0 0.0
    %3704 = vmatmul.mubr.f32.gmra.mrb[0].mxu0 %v3637
    %v3705 = vpop.f32.mrb[0].mxu0
    %v3706 = vadd.f32 0.0, %v3705
    %v3707 = vpop.f32.mrb[0].mxu0
    %3708 = vdwg.mxu0
    %3709 = vxpose.xlu0.b32.start [1/16] %v2580, 128
    %3710 = vxpose.xlu0.b32.cont [2/16] 0.0, 128
    %3711 = vxpose.xlu0.b32.cont [3/16] 0.0, 128
    %3712 = vxpose.xlu0.b32.cont [4/16] 0.0, 128
    %3713 = vxpose.xlu0.b32.cont [5/16] 0.0, 128
    %3714 = vxpose.xlu0.b32.cont [6/16] 0.0, 128
    %3715 = vxpose.xlu0.b32.cont [7/16] 0.0, 128
    %3716 = vxpose.xlu0.b32.cont [8/16] 0.0, 128
    %3717 = vxpose.xlu0.b32.cont [9/16] 0.0, 128
    %3718 = vxpose.xlu0.b32.cont [10/16] 0.0, 128
    %3719 = vxpose.xlu0.b32.cont [11/16] 0.0, 128
    %3720 = vxpose.xlu0.b32.cont [12/16] 0.0, 128
    %3721 = vxpose.xlu0.b32.cont [13/16] 0.0, 128
    %3722 = vxpose.xlu0.b32.cont [14/16] 0.0, 128
    %3723 = vxpose.xlu0.b32.cont [15/16] 0.0, 128
    %3724 = vxpose.xlu0.b32.end [16/16] 0.0, 128
    %v3725 = vpop.trf.xlu0
    %v3726 = vpop.trf.xlu0
    %v3727 = vpop.trf.xlu0
    %v3728 = vpop.trf.xlu0
    %v3729 = vpop.trf.xlu0
    %v3730 = vpop.trf.xlu0
    %v3731 = vpop.trf.xlu0
    %v3732 = vpop.trf.xlu0
    %v3733 = vpop.trf.xlu0
    %v3734 = vpop.trf.xlu0
    %v3735 = vpop.trf.xlu0
    %v3736 = vpop.trf.xlu0
    %v3737 = vpop.trf.xlu0
    %v3738 = vpop.trf.xlu0
    %v3739 = vpop.trf.xlu0
    %v3740 = vpop.trf.xlu0
    %v3742 = vsel %vm165, %v3725, 0
    %3744 = vmatprep.subr.mxu0 0.0
    %3745 = vmatpush1.msra.mxu0 %v3077
    %3746 = vmatprep.subr.mxu0 0.0
    %3747 = vmatpush1.msra.mxu0 0.0
    %3748 = vmatprep.subr.mxu0 0.0
    %3749 = vmatpush1.msra.mxu0 0.0
    %3750 = vmatprep.subr.mxu0 0.0
    %3751 = vmatpush1.msra.mxu0 0.0
    %3752 = vmatprep.subr.mxu0 0.0
    %3753 = vmatpush1.msra.mxu0 0.0
    %3754 = vmatprep.subr.mxu0 0.0
    %3755 = vmatpush1.msra.mxu0 0.0
    %3756 = vmatprep.subr.mxu0 0.0
    %3757 = vmatpush1.msra.mxu0 0.0
    %3758 = vmatprep.subr.mxu0 0.0
    %3759 = vmatpush1.msra.mxu0 0.0
    %3760 = vmatprep.subr.mxu0 0.0
    %3761 = vmatpush1.msra.mxu0 0.0
    %3762 = vmatprep.subr.mxu0 0.0
    %3763 = vmatpush1.msra.mxu0 0.0
    %3764 = vmatprep.subr.mxu0 0.0
    %3765 = vmatpush1.msra.mxu0 0.0
    %3766 = vmatprep.subr.mxu0 0.0
    %3767 = vmatpush1.msra.mxu0 0.0
    %3768 = vmatprep.subr.mxu0 0.0
    %3769 = vmatpush1.msra.mxu0 0.0
    %3770 = vmatprep.subr.mxu0 0.0
    %3771 = vmatpush1.msra.mxu0 0.0
    %3772 = vmatprep.subr.mxu0 0.0
    %3773 = vmatpush1.msra.mxu0 0.0
    %3774 = vmatprep.subr.mxu0 0.0
    %3775 = vmatpush1.msra.mxu0 0.0
    %3776 = vmatprep.subr.mxu0 0.0
    %3777 = vmatpush1.msra.mxu0 0.0
    %3778 = vmatprep.subr.mxu0 0.0
    %3779 = vmatpush1.msra.mxu0 0.0
    %3780 = vmatprep.subr.mxu0 0.0
    %3781 = vmatpush1.msra.mxu0 0.0
    %3782 = vmatprep.subr.mxu0 0.0
    %3783 = vmatpush1.msra.mxu0 0.0
    %3784 = vmatprep.subr.mxu0 0.0
    %3785 = vmatpush1.msra.mxu0 0.0
    %3786 = vmatprep.subr.mxu0 0.0
    %3787 = vmatpush1.msra.mxu0 0.0
    %3788 = vmatprep.subr.mxu0 0.0
    %3789 = vmatpush1.msra.mxu0 0.0
    %3790 = vmatprep.subr.mxu0 0.0
    %3791 = vmatpush1.msra.mxu0 0.0
    %3792 = vmatprep.subr.mxu0 0.0
    %3793 = vmatpush1.msra.mxu0 0.0
    %3794 = vmatprep.subr.mxu0 0.0
    %3795 = vmatpush1.msra.mxu0 0.0
    %3796 = vmatprep.subr.mxu0 0.0
    %3797 = vmatpush1.msra.mxu0 0.0
    %3798 = vmatprep.subr.mxu0 0.0
    %3799 = vmatpush1.msra.mxu0 0.0
    %3800 = vmatprep.subr.mxu0 0.0
    %3801 = vmatpush1.msra.mxu0 0.0
    %3802 = vmatprep.subr.mxu0 0.0
    %3803 = vmatpush1.msra.mxu0 0.0
    %3804 = vmatprep.subr.mxu0 0.0
    %3805 = vmatpush1.msra.mxu0 0.0
    %3806 = vmatprep.subr.mxu0 0.0
    %3807 = vmatpush1.msra.mxu0 0.0
    %3808 = vmatprep.mubr.f32.mxu0 0.0
    %3809 = vmatmul.mubr.f32.gmra.mrb[0].mxu0 %v3742
    %v3810 = vpop.f32.mrb[0].mxu0
    %v3811 = vadd.f32 0.0, %v3810
    %v3812 = vpop.f32.mrb[0].mxu0
    %3813 = vdwg.mxu0
    %3814 = vxpose.xlu0.b32.start [1/16] %v2581, 128
    %3815 = vxpose.xlu0.b32.cont [2/16] 0.0, 128
    %3816 = vxpose.xlu0.b32.cont [3/16] 0.0, 128
    %3817 = vxpose.xlu0.b32.cont [4/16] 0.0, 128
    %3818 = vxpose.xlu0.b32.cont [5/16] 0.0, 128
    %3819 = vxpose.xlu0.b32.cont [6/16] 0.0, 128
    %3820 = vxpose.xlu0.b32.cont [7/16] 0.0, 128
    %3821 = vxpose.xlu0.b32.cont [8/16] 0.0, 128
    %3822 = vxpose.xlu0.b32.cont [9/16] 0.0, 128
    %3823 = vxpose.xlu0.b32.cont [10/16] 0.0, 128
    %3824 = vxpose.xlu0.b32.cont [11/16] 0.0, 128
    %3825 = vxpose.xlu0.b32.cont [12/16] 0.0, 128
    %3826 = vxpose.xlu0.b32.cont [13/16] 0.0, 128
    %3827 = vxpose.xlu0.b32.cont [14/16] 0.0, 128
    %3828 = vxpose.xlu0.b32.cont [15/16] 0.0, 128
    %3829 = vxpose.xlu0.b32.end [16/16] 0.0, 128
    %v3830 = vpop.trf.xlu0
    %v3831 = vpop.trf.xlu0
    %v3832 = vpop.trf.xlu0
    %v3833 = vpop.trf.xlu0
    %v3834 = vpop.trf.xlu0
    %v3835 = vpop.trf.xlu0
    %v3836 = vpop.trf.xlu0
    %v3837 = vpop.trf.xlu0
    %v3838 = vpop.trf.xlu0
    %v3839 = vpop.trf.xlu0
    %v3840 = vpop.trf.xlu0
    %v3841 = vpop.trf.xlu0
    %v3842 = vpop.trf.xlu0
    %v3843 = vpop.trf.xlu0
    %v3844 = vpop.trf.xlu0
    %v3845 = vpop.trf.xlu0
    %v3847 = vsel %vm165, %v3830, 0
    %3849 = vmatprep.subr.mxu0 0.0
    %3850 = vmatpush1.msra.mxu0 %v3078
    %3851 = vmatprep.subr.mxu0 0.0
    %3852 = vmatpush1.msra.mxu0 0.0
    %3853 = vmatprep.subr.mxu0 0.0
    %3854 = vmatpush1.msra.mxu0 0.0
    %3855 = vmatprep.subr.mxu0 0.0
    %3856 = vmatpush1.msra.mxu0 0.0
    %3857 = vmatprep.subr.mxu0 0.0
    %3858 = vmatpush1.msra.mxu0 0.0
    %3859 = vmatprep.subr.mxu0 0.0
    %3860 = vmatpush1.msra.mxu0 0.0
    %3861 = vmatprep.subr.mxu0 0.0
    %3862 = vmatpush1.msra.mxu0 0.0
    %3863 = vmatprep.subr.mxu0 0.0
    %3864 = vmatpush1.msra.mxu0 0.0
    %3865 = vmatprep.subr.mxu0 0.0
    %3866 = vmatpush1.msra.mxu0 0.0
    %3867 = vmatprep.subr.mxu0 0.0
    %3868 = vmatpush1.msra.mxu0 0.0
    %3869 = vmatprep.subr.mxu0 0.0
    %3870 = vmatpush1.msra.mxu0 0.0
    %3871 = vmatprep.subr.mxu0 0.0
    %3872 = vmatpush1.msra.mxu0 0.0
    %3873 = vmatprep.subr.mxu0 0.0
    %3874 = vmatpush1.msra.mxu0 0.0
    %3875 = vmatprep.subr.mxu0 0.0
    %3876 = vmatpush1.msra.mxu0 0.0
    %3877 = vmatprep.subr.mxu0 0.0
    %3878 = vmatpush1.msra.mxu0 0.0
    %3879 = vmatprep.subr.mxu0 0.0
    %3880 = vmatpush1.msra.mxu0 0.0
    %3881 = vmatprep.subr.mxu0 0.0
    %3882 = vmatpush1.msra.mxu0 0.0
    %3883 = vmatprep.subr.mxu0 0.0
    %3884 = vmatpush1.msra.mxu0 0.0
    %3885 = vmatprep.subr.mxu0 0.0
    %3886 = vmatpush1.msra.mxu0 0.0
    %3887 = vmatprep.subr.mxu0 0.0
    %3888 = vmatpush1.msra.mxu0 0.0
    %3889 = vmatprep.subr.mxu0 0.0
    %3890 = vmatpush1.msra.mxu0 0.0
    %3891 = vmatprep.subr.mxu0 0.0
    %3892 = vmatpush1.msra.mxu0 0.0
    %3893 = vmatprep.subr.mxu0 0.0
    %3894 = vmatpush1.msra.mxu0 0.0
    %3895 = vmatprep.subr.mxu0 0.0
    %3896 = vmatpush1.msra.mxu0 0.0
    %3897 = vmatprep.subr.mxu0 0.0
    %3898 = vmatpush1.msra.mxu0 0.0
    %3899 = vmatprep.subr.mxu0 0.0
    %3900 = vmatpush1.msra.mxu0 0.0
    %3901 = vmatprep.subr.mxu0 0.0
    %3902 = vmatpush1.msra.mxu0 0.0
    %3903 = vmatprep.subr.mxu0 0.0
    %3904 = vmatpush1.msra.mxu0 0.0
    %3905 = vmatprep.subr.mxu0 0.0
    %3906 = vmatpush1.msra.mxu0 0.0
    %3907 = vmatprep.subr.mxu0 0.0
    %3908 = vmatpush1.msra.mxu0 0.0
    %3909 = vmatprep.subr.mxu0 0.0
    %3910 = vmatpush1.msra.mxu0 0.0
    %3911 = vmatprep.subr.mxu0 0.0
    %3912 = vmatpush1.msra.mxu0 0.0
    %3913 = vmatprep.mubr.f32.mxu0 0.0
    %3914 = vmatmul.mubr.f32.gmra.mrb[0].mxu0 %v3847
    %v3915 = vpop.f32.mrb[0].mxu0
    %v3916 = vadd.f32 0.0, %v3915
    %v3917 = vpop.f32.mrb[0].mxu0
    %3918 = vdwg.mxu0
    %v3919 = vmul.f32 %v3181, %v3034
    %v3920 = vmul.f32 %v3286, %v3039
    %v3921 = vmul.f32 %v3391, %v3044
    %v3922 = vmul.f32 %v3496, %v3049
    %v3923 = vmul.f32 %v3601, %v3054
    %v3924 = vmul.f32 %v3706, %v3059
    %v3925 = vmul.f32 %v3811, %v3064
    %v3926 = vmul.f32 %v3916, %v3069
    %v3927 = vadd.f32 %v3919, %v1516
    %v3928 = vadd.f32 %v3920, %v1516
    %v3929 = vadd.f32 %v3921, %v1516
    %v3930 = vadd.f32 %v3922, %v1516
    %v3931 = vadd.f32 %v3923, %v1516
    %v3932 = vadd.f32 %v3924, %v1516
    %v3933 = vadd.f32 %v3925, %v1516
    %v3934 = vadd.f32 %v3926, %v1516
    %v3936 = vsel %vm1526, %v3927, 0
    %v3939 = vsel %vm1526, %v3928, 0
    %v3942 = vsel %vm1526, %v3929, 0
    %v3945 = vsel %vm1526, %v3930, 0
    %v3948 = vsel %vm1526, %v3931, 0
    %v3951 = vsel %vm1526, %v3932, 0
    %v3954 = vsel %vm1526, %v3933, 0
    %v3957 = vsel %vm1526, %v3934, 0
    %3959 = vmatprep.subr.mxu0 0.0
    %3960 = vmatpush1.msra.mxu0 %v92
    %3961 = vmatprep.subr.mxu0 0.0
    %3962 = vmatpush1.msra.mxu0 %v93
    %3963 = vmatprep.subr.mxu0 0.0
    %3964 = vmatpush1.msra.mxu0 %v94
    %3965 = vmatprep.subr.mxu0 0.0
    %3966 = vmatpush1.msra.mxu0 %v95
    %3967 = vmatprep.subr.mxu0 0.0
    %3968 = vmatpush1.msra.mxu0 0.0
    %3969 = vmatprep.subr.mxu0 0.0
    %3970 = vmatpush1.msra.mxu0 0.0
    %3971 = vmatprep.subr.mxu0 0.0
    %3972 = vmatpush1.msra.mxu0 0.0
    %3973 = vmatprep.subr.mxu0 0.0
    %3974 = vmatpush1.msra.mxu0 0.0
    %3975 = vmatprep.subr.mxu0 0.0
    %3976 = vmatpush1.msra.mxu0 0.0
    %3977 = vmatprep.subr.mxu0 0.0
    %3978 = vmatpush1.msra.mxu0 0.0
    %3979 = vmatprep.subr.mxu0 0.0
    %3980 = vmatpush1.msra.mxu0 0.0
    %3981 = vmatprep.subr.mxu0 0.0
    %3982 = vmatpush1.msra.mxu0 0.0
    %3983 = vmatprep.subr.mxu0 0.0
    %3984 = vmatpush1.msra.mxu0 0.0
    %3985 = vmatprep.subr.mxu0 0.0
    %3986 = vmatpush1.msra.mxu0 0.0
    %3987 = vmatprep.subr.mxu0 0.0
    %3988 = vmatpush1.msra.mxu0 0.0
    %3989 = vmatprep.subr.mxu0 0.0
    %3990 = vmatpush1.msra.mxu0 0.0
    %3991 = vmatprep.subr.mxu0 0.0
    %3992 = vmatpush1.msra.mxu0 0.0
    %3993 = vmatprep.subr.mxu0 0.0
    %3994 = vmatpush1.msra.mxu0 0.0
    %3995 = vmatprep.subr.mxu0 0.0
    %3996 = vmatpush1.msra.mxu0 0.0
    %3997 = vmatprep.subr.mxu0 0.0
    %3998 = vmatpush1.msra.mxu0 0.0
    %3999 = vmatprep.subr.mxu0 0.0
    %4000 = vmatpush1.msra.mxu0 0.0
    %4001 = vmatprep.subr.mxu0 0.0
    %4002 = vmatpush1.msra.mxu0 0.0
    %4003 = vmatprep.subr.mxu0 0.0
    %4004 = vmatpush1.msra.mxu0 0.0
    %4005 = vmatprep.subr.mxu0 0.0
    %4006 = vmatpush1.msra.mxu0 0.0
    %4007 = vmatprep.subr.mxu0 0.0
    %4008 = vmatpush1.msra.mxu0 0.0
    %4009 = vmatprep.subr.mxu0 0.0
    %4010 = vmatpush1.msra.mxu0 0.0
    %4011 = vmatprep.subr.mxu0 0.0
    %4012 = vmatpush1.msra.mxu0 0.0
    %4013 = vmatprep.subr.mxu0 0.0
    %4014 = vmatpush1.msra.mxu0 0.0
    %4015 = vmatprep.subr.mxu0 0.0
    %4016 = vmatpush1.msra.mxu0 0.0
    %4017 = vmatprep.subr.mxu0 0.0
    %4018 = vmatpush1.msra.mxu0 0.0
    %4019 = vmatprep.subr.mxu0 0.0
    %4020 = vmatpush1.msra.mxu0 0.0
    %4021 = vmatprep.subr.mxu0 0.0
    %4022 = vmatpush1.msra.mxu0 0.0
    %4023 = vmatprep.mubr.f32.mxu0 0.0
    %4024 = vmatmul.mubr.f32.gmra.mrb[0].mxu0 %v3936
    %v4025 = vpop.f32.mrb[0].mxu0
    %v4026 = vadd.f32 0.0, %v4025
    %v4027 = vpop.f32.mrb[0].mxu0
    %4028 = vmatprep.mubr.f32.mxu0 0.0
    %4029 = vmatmul.mubr.f32.gmra.mrb[0].mxu0 %v3939
    %v4030 = vpop.f32.mrb[0].mxu0
    %v4031 = vadd.f32 0.0, %v4030
    %v4032 = vpop.f32.mrb[0].mxu0
    %4033 = vmatprep.mubr.f32.mxu0 0.0
    %4034 = vmatmul.mubr.f32.gmra.mrb[0].mxu0 %v3942
    %v4035 = vpop.f32.mrb[0].mxu0
    %v4036 = vadd.f32 0.0, %v4035
    %v4037 = vpop.f32.mrb[0].mxu0
    %4038 = vmatprep.mubr.f32.mxu0 0.0
    %4039 = vmatmul.mubr.f32.gmra.mrb[0].mxu0 %v3945
    %v4040 = vpop.f32.mrb[0].mxu0
    %v4041 = vadd.f32 0.0, %v4040
    %v4042 = vpop.f32.mrb[0].mxu0
    %4043 = vmatprep.mubr.f32.mxu0 0.0
    %4044 = vmatmul.mubr.f32.gmra.mrb[0].mxu0 %v3948
    %v4045 = vpop.f32.mrb[0].mxu0
    %v4046 = vadd.f32 0.0, %v4045
    %v4047 = vpop.f32.mrb[0].mxu0
    %4048 = vmatprep.mubr.f32.mxu0 0.0
    %4049 = vmatmul.mubr.f32.gmra.mrb[0].mxu0 %v3951
    %v4050 = vpop.f32.mrb[0].mxu0
    %v4051 = vadd.f32 0.0, %v4050
    %v4052 = vpop.f32.mrb[0].mxu0
    %4053 = vmatprep.mubr.f32.mxu0 0.0
    %4054 = vmatmul.mubr.f32.gmra.mrb[0].mxu0 %v3954
    %v4055 = vpop.f32.mrb[0].mxu0
    %v4056 = vadd.f32 0.0, %v4055
    %v4057 = vpop.f32.mrb[0].mxu0
    %4058 = vmatprep.mubr.f32.mxu0 0.0
    %4059 = vmatmul.mubr.f32.gmra.mrb[0].mxu0 %v3957
    %v4060 = vpop.f32.mrb[0].mxu0
    %v4061 = vadd.f32 0.0, %v4060
    %v4062 = vpop.f32.mrb[0].mxu0
    %4063 = vdwg.mxu0
    %v4064 = vadd.f32 %v4026, %v1660
    %v4065 = vadd.f32 %v4031, %v1660
    %v4066 = vadd.f32 %v4036, %v1660
    %v4067 = vadd.f32 %v4041, %v1660
    %v4068 = vadd.f32 %v4046, %v1660
    %v4069 = vadd.f32 %v4051, %v1660
    %v4070 = vadd.f32 %v4056, %v1660
    %v4071 = vadd.f32 %v4061, %v1660
    %v4072 = vadd.f32 %v4064, %v1740
    %v4073 = vxor.u32 %v4072, 2147483648
    %v4074 = vmul.f32 %v4073, 1.442695
    %v4075 = vpow.pop %v4074
    %v4076 = vadd.f32 %v4075, 1.0
    %v4077 = vrcp.pop %v4076
    %v4078 = vmul.f32 1.0, %v4077
    %v4079 = vmul.f32 %v4078, 2.0
    %v4080 = vsub.f32 %v4079, 1.0
    %v4081 = vmul.f32 %v4078, 0.0
    %4083 = vrot.lane.b32.xlu0 %v4080, 64
    %v4084 = vpop.permute.xlu0 %4083
    %v4086 = vmul.f32 %v4078, %v4084
    %4088 = vrot.lane.b32.xlu0 %v4086, 32
    %v4089 = vpop.permute.xlu0 %4088
    %v4091 = vadd.f32 %v4081, %v4089
    %v4092 = vtanh.pop %v4091
    %4094 = vrot.lane.b32.xlu0 %v4092, 64
    %v4095 = vpop.permute.xlu0 %4094
    %v4097 = vmul.f32 %v4078, %v4095
    %4099 = vrot.lane.b32.xlu0 %v4097, 32
    %v4100 = vpop.permute.xlu0 %4099
    %v4101 = vsel %vm1526, %v4100, 0
    %4103 = vmatprep.subr.mxu0 0.0
    %4104 = vmatpush1.msra.mxu0 %v100
    %4105 = vmatprep.subr.mxu0 0.0
    %4106 = vmatpush1.msra.mxu0 %v101
    %4107 = vmatprep.subr.mxu0 0.0
    %4108 = vmatpush1.msra.mxu0 %v102
    %4109 = vmatprep.subr.mxu0 0.0
    %4110 = vmatpush1.msra.mxu0 %v103
    %4111 = vmatprep.subr.mxu0 0.0
    %4112 = vmatpush1.msra.mxu0 0.0
    %4113 = vmatprep.subr.mxu0 0.0
    %4114 = vmatpush1.msra.mxu0 0.0
    %4115 = vmatprep.subr.mxu0 0.0
    %4116 = vmatpush1.msra.mxu0 0.0
    %4117 = vmatprep.subr.mxu0 0.0
    %4118 = vmatpush1.msra.mxu0 0.0
    %4119 = vmatprep.subr.mxu0 0.0
    %4120 = vmatpush1.msra.mxu0 0.0
    %4121 = vmatprep.subr.mxu0 0.0
    %4122 = vmatpush1.msra.mxu0 0.0
    %4123 = vmatprep.subr.mxu0 0.0
    %4124 = vmatpush1.msra.mxu0 0.0
    %4125 = vmatprep.subr.mxu0 0.0
    %4126 = vmatpush1.msra.mxu0 0.0
    %4127 = vmatprep.subr.mxu0 0.0
    %4128 = vmatpush1.msra.mxu0 0.0
    %4129 = vmatprep.subr.mxu0 0.0
    %4130 = vmatpush1.msra.mxu0 0.0
    %4131 = vmatprep.subr.mxu0 0.0
    %4132 = vmatpush1.msra.mxu0 0.0
    %4133 = vmatprep.subr.mxu0 0.0
    %4134 = vmatpush1.msra.mxu0 0.0
    %4135 = vmatprep.subr.mxu0 0.0
    %4136 = vmatpush1.msra.mxu0 0.0
    %4137 = vmatprep.subr.mxu0 0.0
    %4138 = vmatpush1.msra.mxu0 0.0
    %4139 = vmatprep.subr.mxu0 0.0
    %4140 = vmatpush1.msra.mxu0 0.0
    %4141 = vmatprep.subr.mxu0 0.0
    %4142 = vmatpush1.msra.mxu0 0.0
    %4143 = vmatprep.subr.mxu0 0.0
    %4144 = vmatpush1.msra.mxu0 0.0
    %4145 = vmatprep.subr.mxu0 0.0
    %4146 = vmatpush1.msra.mxu0 0.0
    %4147 = vmatprep.subr.mxu0 0.0
    %4148 = vmatpush1.msra.mxu0 0.0
    %4149 = vmatprep.subr.mxu0 0.0
    %4150 = vmatpush1.msra.mxu0 0.0
    %4151 = vmatprep.subr.mxu0 0.0
    %4152 = vmatpush1.msra.mxu0 0.0
    %4153 = vmatprep.subr.mxu0 0.0
    %4154 = vmatpush1.msra.mxu0 0.0
    %4155 = vmatprep.subr.mxu0 0.0
    %4156 = vmatpush1.msra.mxu0 0.0
    %4157 = vmatprep.subr.mxu0 0.0
    %4158 = vmatpush1.msra.mxu0 0.0
    %4159 = vmatprep.subr.mxu0 0.0
    %4160 = vmatpush1.msra.mxu0 0.0
    %4161 = vmatprep.subr.mxu0 0.0
    %4162 = vmatpush1.msra.mxu0 0.0
    %4163 = vmatprep.subr.mxu0 0.0
    %4164 = vmatpush1.msra.mxu0 0.0
    %4165 = vmatprep.subr.mxu0 0.0
    %4166 = vmatpush1.msra.mxu0 0.0
    %4167 = vmatprep.mubr.f32.mxu0 0.0
    %4168 = vmatmul.mubr.f32.gmra.mrb[0].mxu0 %v4101
    %v4169 = vpop.f32.mrb[0].mxu0
    %v4170 = vadd.f32 0.0, %v4169
    %v4171 = vpop.f32.mrb[0].mxu0
    %4172 = vdwg.mxu0
    %v4173 = vadd.f32 %v4065, %v4170
    %v4174 = vxor.u32 %v4173, 2147483648
    %v4175 = vmul.f32 %v4174, 1.442695
    %v4176 = vpow.pop %v4175
    %v4177 = vadd.f32 %v4176, 1.0
    %v4178 = vrcp.pop %v4177
    %v4179 = vmul.f32 1.0, %v4178
    %v4180 = vmul.f32 %v4179, 2.0
    %v4181 = vsub.f32 %v4180, 1.0
    %v4182 = vmul.f32 %v4179, %v4091
    %4184 = vrot.lane.b32.xlu0 %v4181, 64
    %v4185 = vpop.permute.xlu0 %4184
    %v4187 = vmul.f32 %v4179, %v4185
    %4189 = vrot.lane.b32.xlu0 %v4187, 32
    %v4190 = vpop.permute.xlu0 %4189
    %v4192 = vadd.f32 %v4182, %v4190
    %v4193 = vtanh.pop %v4192
    %4195 = vrot.lane.b32.xlu0 %v4193, 64
    %v4196 = vpop.permute.xlu0 %4195
    %v4198 = vmul.f32 %v4179, %v4196
    %4200 = vrot.lane.b32.xlu0 %v4198, 32
    %v4201 = vpop.permute.xlu0 %4200
    %v4202 = vsel %vm1526, %v4201, 0
    %4204 = vmatprep.subr.mxu0 0.0
    %4205 = vmatpush1.msra.mxu0 %v100
    %4206 = vmatprep.subr.mxu0 0.0
    %4207 = vmatpush1.msra.mxu0 %v101
    %4208 = vmatprep.subr.mxu0 0.0
    %4209 = vmatpush1.msra.mxu0 %v102
    %4210 = vmatprep.subr.mxu0 0.0
    %4211 = vmatpush1.msra.mxu0 %v103
    %4212 = vmatprep.subr.mxu0 0.0
    %4213 = vmatpush1.msra.mxu0 0.0
    %4214 = vmatprep.subr.mxu0 0.0
    %4215 = vmatpush1.msra.mxu0 0.0
    %4216 = vmatprep.subr.mxu0 0.0
    %4217 = vmatpush1.msra.mxu0 0.0
    %4218 = vmatprep.subr.mxu0 0.0
    %4219 = vmatpush1.msra.mxu0 0.0
    %4220 = vmatprep.subr.mxu0 0.0
    %4221 = vmatpush1.msra.mxu0 0.0
    %4222 = vmatprep.subr.mxu0 0.0
    %4223 = vmatpush1.msra.mxu0 0.0
    %4224 = vmatprep.subr.mxu0 0.0
    %4225 = vmatpush1.msra.mxu0 0.0
    %4226 = vmatprep.subr.mxu0 0.0
    %4227 = vmatpush1.msra.mxu0 0.0
    %4228 = vmatprep.subr.mxu0 0.0
    %4229 = vmatpush1.msra.mxu0 0.0
    %4230 = vmatprep.subr.mxu0 0.0
    %4231 = vmatpush1.msra.mxu0 0.0
    %4232 = vmatprep.subr.mxu0 0.0
    %4233 = vmatpush1.msra.mxu0 0.0
    %4234 = vmatprep.subr.mxu0 0.0
    %4235 = vmatpush1.msra.mxu0 0.0
    %4236 = vmatprep.subr.mxu0 0.0
    %4237 = vmatpush1.msra.mxu0 0.0
    %4238 = vmatprep.subr.mxu0 0.0
    %4239 = vmatpush1.msra.mxu0 0.0
    %4240 = vmatprep.subr.mxu0 0.0
    %4241 = vmatpush1.msra.mxu0 0.0
    %4242 = vmatprep.subr.mxu0 0.0
    %4243 = vmatpush1.msra.mxu0 0.0
    %4244 = vmatprep.subr.mxu0 0.0
    %4245 = vmatpush1.msra.mxu0 0.0
    %4246 = vmatprep.subr.mxu0 0.0
    %4247 = vmatpush1.msra.mxu0 0.0
    %4248 = vmatprep.subr.mxu0 0.0
    %4249 = vmatpush1.msra.mxu0 0.0
    %4250 = vmatprep.subr.mxu0 0.0
    %4251 = vmatpush1.msra.mxu0 0.0
    %4252 = vmatprep.subr.mxu0 0.0
    %4253 = vmatpush1.msra.mxu0 0.0
    %4254 = vmatprep.subr.mxu0 0.0
    %4255 = vmatpush1.msra.mxu0 0.0
    %4256 = vmatprep.subr.mxu0 0.0
    %4257 = vmatpush1.msra.mxu0 0.0
    %4258 = vmatprep.subr.mxu0 0.0
    %4259 = vmatpush1.msra.mxu0 0.0
    %4260 = vmatprep.subr.mxu0 0.0
    %4261 = vmatpush1.msra.mxu0 0.0
    %4262 = vmatprep.subr.mxu0 0.0
    %4263 = vmatpush1.msra.mxu0 0.0
    %4264 = vmatprep.subr.mxu0 0.0
    %4265 = vmatpush1.msra.mxu0 0.0
    %4266 = vmatprep.subr.mxu0 0.0
    %4267 = vmatpush1.msra.mxu0 0.0
    %4268 = vmatprep.mubr.f32.mxu0 0.0
    %4269 = vmatmul.mubr.f32.gmra.mrb[0].mxu0 %v4202
    %v4270 = vpop.f32.mrb[0].mxu0
    %v4271 = vadd.f32 0.0, %v4270
    %v4272 = vpop.f32.mrb[0].mxu0
    %4273 = vdwg.mxu0
    %v4274 = vadd.f32 %v4066, %v4271
    %v4275 = vxor.u32 %v4274, 2147483648
    %v4276 = vmul.f32 %v4275, 1.442695
    %v4277 = vpow.pop %v4276
    %v4278 = vadd.f32 %v4277, 1.0
    %v4279 = vrcp.pop %v4278
    %v4280 = vmul.f32 1.0, %v4279
    %v4281 = vmul.f32 %v4280, 2.0
    %v4282 = vsub.f32 %v4281, 1.0
    %v4283 = vmul.f32 %v4280, %v4192
    %4285 = vrot.lane.b32.xlu0 %v4282, 64
    %v4286 = vpop.permute.xlu0 %4285
    %v4288 = vmul.f32 %v4280, %v4286
    %4290 = vrot.lane.b32.xlu0 %v4288, 32
    %v4291 = vpop.permute.xlu0 %4290
    %v4293 = vadd.f32 %v4283, %v4291
    %v4294 = vtanh.pop %v4293
    %4296 = vrot.lane.b32.xlu0 %v4294, 64
    %v4297 = vpop.permute.xlu0 %4296
    %v4299 = vmul.f32 %v4280, %v4297
    %4301 = vrot.lane.b32.xlu0 %v4299, 32
    %v4302 = vpop.permute.xlu0 %4301
    %v4303 = vsel %vm1526, %v4302, 0
    %4305 = vmatprep.subr.mxu0 0.0
    %4306 = vmatpush1.msra.mxu0 %v100
    %4307 = vmatprep.subr.mxu0 0.0
    %4308 = vmatpush1.msra.mxu0 %v101
    %4309 = vmatprep.subr.mxu0 0.0
    %4310 = vmatpush1.msra.mxu0 %v102
    %4311 = vmatprep.subr.mxu0 0.0
    %4312 = vmatpush1.msra.mxu0 %v103
    %4313 = vmatprep.subr.mxu0 0.0
    %4314 = vmatpush1.msra.mxu0 0.0
    %4315 = vmatprep.subr.mxu0 0.0
    %4316 = vmatpush1.msra.mxu0 0.0
    %4317 = vmatprep.subr.mxu0 0.0
    %4318 = vmatpush1.msra.mxu0 0.0
    %4319 = vmatprep.subr.mxu0 0.0
    %4320 = vmatpush1.msra.mxu0 0.0
    %4321 = vmatprep.subr.mxu0 0.0
    %4322 = vmatpush1.msra.mxu0 0.0
    %4323 = vmatprep.subr.mxu0 0.0
    %4324 = vmatpush1.msra.mxu0 0.0
    %4325 = vmatprep.subr.mxu0 0.0
    %4326 = vmatpush1.msra.mxu0 0.0
    %4327 = vmatprep.subr.mxu0 0.0
    %4328 = vmatpush1.msra.mxu0 0.0
    %4329 = vmatprep.subr.mxu0 0.0
    %4330 = vmatpush1.msra.mxu0 0.0
    %4331 = vmatprep.subr.mxu0 0.0
    %4332 = vmatpush1.msra.mxu0 0.0
    %4333 = vmatprep.subr.mxu0 0.0
    %4334 = vmatpush1.msra.mxu0 0.0
    %4335 = vmatprep.subr.mxu0 0.0
    %4336 = vmatpush1.msra.mxu0 0.0
    %4337 = vmatprep.subr.mxu0 0.0
    %4338 = vmatpush1.msra.mxu0 0.0
    %4339 = vmatprep.subr.mxu0 0.0
    %4340 = vmatpush1.msra.mxu0 0.0
    %4341 = vmatprep.subr.mxu0 0.0
    %4342 = vmatpush1.msra.mxu0 0.0
    %4343 = vmatprep.subr.mxu0 0.0
    %4344 = vmatpush1.msra.mxu0 0.0
    %4345 = vmatprep.subr.mxu0 0.0
    %4346 = vmatpush1.msra.mxu0 0.0
    %4347 = vmatprep.subr.mxu0 0.0
    %4348 = vmatpush1.msra.mxu0 0.0
    %4349 = vmatprep.subr.mxu0 0.0
    %4350 = vmatpush1.msra.mxu0 0.0
    %4351 = vmatprep.subr.mxu0 0.0
    %4352 = vmatpush1.msra.mxu0 0.0
    %4353 = vmatprep.subr.mxu0 0.0
    %4354 = vmatpush1.msra.mxu0 0.0
    %4355 = vmatprep.subr.mxu0 0.0
    %4356 = vmatpush1.msra.mxu0 0.0
    %4357 = vmatprep.subr.mxu0 0.0
    %4358 = vmatpush1.msra.mxu0 0.0
    %4359 = vmatprep.subr.mxu0 0.0
    %4360 = vmatpush1.msra.mxu0 0.0
    %4361 = vmatprep.subr.mxu0 0.0
    %4362 = vmatpush1.msra.mxu0 0.0
    %4363 = vmatprep.subr.mxu0 0.0
    %4364 = vmatpush1.msra.mxu0 0.0
    %4365 = vmatprep.subr.mxu0 0.0
    %4366 = vmatpush1.msra.mxu0 0.0
    %4367 = vmatprep.subr.mxu0 0.0
    %4368 = vmatpush1.msra.mxu0 0.0
    %4369 = vmatprep.mubr.f32.mxu0 0.0
    %4370 = vmatmul.mubr.f32.gmra.mrb[0].mxu0 %v4303
    %v4371 = vpop.f32.mrb[0].mxu0
    %v4372 = vadd.f32 0.0, %v4371
    %v4373 = vpop.f32.mrb[0].mxu0
    %4374 = vdwg.mxu0
    %v4375 = vadd.f32 %v4067, %v4372
    %v4376 = vxor.u32 %v4375, 2147483648
    %v4377 = vmul.f32 %v4376, 1.442695
    %v4378 = vpow.pop %v4377
    %v4379 = vadd.f32 %v4378, 1.0
    %v4380 = vrcp.pop %v4379
    %v4381 = vmul.f32 1.0, %v4380
    %v4382 = vmul.f32 %v4381, 2.0
    %v4383 = vsub.f32 %v4382, 1.0
    %v4384 = vmul.f32 %v4381, %v4293
    %4386 = vrot.lane.b32.xlu0 %v4383, 64
    %v4387 = vpop.permute.xlu0 %4386
    %v4389 = vmul.f32 %v4381, %v4387
    %4391 = vrot.lane.b32.xlu0 %v4389, 32
    %v4392 = vpop.permute.xlu0 %4391
    %v4394 = vadd.f32 %v4384, %v4392
    %v4395 = vtanh.pop %v4394
    %4397 = vrot.lane.b32.xlu0 %v4395, 64
    %v4398 = vpop.permute.xlu0 %4397
    %v4400 = vmul.f32 %v4381, %v4398
    %4402 = vrot.lane.b32.xlu0 %v4400, 32
    %v4403 = vpop.permute.xlu0 %4402
    %v4404 = vsel %vm1526, %v4403, 0
    %4406 = vmatprep.subr.mxu0 0.0
    %4407 = vmatpush1.msra.mxu0 %v100
    %4408 = vmatprep.subr.mxu0 0.0
    %4409 = vmatpush1.msra.mxu0 %v101
    %4410 = vmatprep.subr.mxu0 0.0
    %4411 = vmatpush1.msra.mxu0 %v102
    %4412 = vmatprep.subr.mxu0 0.0
    %4413 = vmatpush1.msra.mxu0 %v103
    %4414 = vmatprep.subr.mxu0 0.0
    %4415 = vmatpush1.msra.mxu0 0.0
    %4416 = vmatprep.subr.mxu0 0.0
    %4417 = vmatpush1.msra.mxu0 0.0
    %4418 = vmatprep.subr.mxu0 0.0
    %4419 = vmatpush1.msra.mxu0 0.0
    %4420 = vmatprep.subr.mxu0 0.0
    %4421 = vmatpush1.msra.mxu0 0.0
    %4422 = vmatprep.subr.mxu0 0.0
    %4423 = vmatpush1.msra.mxu0 0.0
    %4424 = vmatprep.subr.mxu0 0.0
    %4425 = vmatpush1.msra.mxu0 0.0
    %4426 = vmatprep.subr.mxu0 0.0
    %4427 = vmatpush1.msra.mxu0 0.0
    %4428 = vmatprep.subr.mxu0 0.0
    %4429 = vmatpush1.msra.mxu0 0.0
    %4430 = vmatprep.subr.mxu0 0.0
    %4431 = vmatpush1.msra.mxu0 0.0
    %4432 = vmatprep.subr.mxu0 0.0
    %4433 = vmatpush1.msra.mxu0 0.0
    %4434 = vmatprep.subr.mxu0 0.0
    %4435 = vmatpush1.msra.mxu0 0.0
    %4436 = vmatprep.subr.mxu0 0.0
    %4437 = vmatpush1.msra.mxu0 0.0
    %4438 = vmatprep.subr.mxu0 0.0
    %4439 = vmatpush1.msra.mxu0 0.0
    %4440 = vmatprep.subr.mxu0 0.0
    %4441 = vmatpush1.msra.mxu0 0.0
    %4442 = vmatprep.subr.mxu0 0.0
    %4443 = vmatpush1.msra.mxu0 0.0
    %4444 = vmatprep.subr.mxu0 0.0
    %4445 = vmatpush1.msra.mxu0 0.0
    %4446 = vmatprep.subr.mxu0 0.0
    %4447 = vmatpush1.msra.mxu0 0.0
    %4448 = vmatprep.subr.mxu0 0.0
    %4449 = vmatpush1.msra.mxu0 0.0
    %4450 = vmatprep.subr.mxu0 0.0
    %4451 = vmatpush1.msra.mxu0 0.0
    %4452 = vmatprep.subr.mxu0 0.0
    %4453 = vmatpush1.msra.mxu0 0.0
    %4454 = vmatprep.subr.mxu0 0.0
    %4455 = vmatpush1.msra.mxu0 0.0
    %4456 = vmatprep.subr.mxu0 0.0
    %4457 = vmatpush1.msra.mxu0 0.0
    %4458 = vmatprep.subr.mxu0 0.0
    %4459 = vmatpush1.msra.mxu0 0.0
    %4460 = vmatprep.subr.mxu0 0.0
    %4461 = vmatpush1.msra.mxu0 0.0
    %4462 = vmatprep.subr.mxu0 0.0
    %4463 = vmatpush1.msra.mxu0 0.0
    %4464 = vmatprep.subr.mxu0 0.0
    %4465 = vmatpush1.msra.mxu0 0.0
    %4466 = vmatprep.subr.mxu0 0.0
    %4467 = vmatpush1.msra.mxu0 0.0
    %4468 = vmatprep.subr.mxu0 0.0
    %4469 = vmatpush1.msra.mxu0 0.0
    %4470 = vmatprep.mubr.f32.mxu0 0.0
    %4471 = vmatmul.mubr.f32.gmra.mrb[0].mxu0 %v4404
    %v4472 = vpop.f32.mrb[0].mxu0
    %v4473 = vadd.f32 0.0, %v4472
    %v4474 = vpop.f32.mrb[0].mxu0
    %4475 = vdwg.mxu0
    %v4476 = vadd.f32 %v4068, %v4473
    %v4477 = vxor.u32 %v4476, 2147483648
    %v4478 = vmul.f32 %v4477, 1.442695
    %v4479 = vpow.pop %v4478
    %v4480 = vadd.f32 %v4479, 1.0
    %v4481 = vrcp.pop %v4480
    %v4482 = vmul.f32 1.0, %v4481
    %v4483 = vmul.f32 %v4482, 2.0
    %v4484 = vsub.f32 %v4483, 1.0
    %v4485 = vmul.f32 %v4482, %v4394
    %4487 = vrot.lane.b32.xlu0 %v4484, 64
    %v4488 = vpop.permute.xlu0 %4487
    %v4490 = vmul.f32 %v4482, %v4488
    %4492 = vrot.lane.b32.xlu0 %v4490, 32
    %v4493 = vpop.permute.xlu0 %4492
    %v4495 = vadd.f32 %v4485, %v4493
    %v4496 = vtanh.pop %v4495
    %4498 = vrot.lane.b32.xlu0 %v4496, 64
    %v4499 = vpop.permute.xlu0 %4498
    %v4501 = vmul.f32 %v4482, %v4499
    %4503 = vrot.lane.b32.xlu0 %v4501, 32
    %v4504 = vpop.permute.xlu0 %4503
    %v4505 = vsel %vm1526, %v4504, 0
    %4507 = vmatprep.subr.mxu0 0.0
    %4508 = vmatpush1.msra.mxu0 %v100
    %4509 = vmatprep.subr.mxu0 0.0
    %4510 = vmatpush1.msra.mxu0 %v101
    %4511 = vmatprep.subr.mxu0 0.0
    %4512 = vmatpush1.msra.mxu0 %v102
    %4513 = vmatprep.subr.mxu0 0.0
    %4514 = vmatpush1.msra.mxu0 %v103
    %4515 = vmatprep.subr.mxu0 0.0
    %4516 = vmatpush1.msra.mxu0 0.0
    %4517 = vmatprep.subr.mxu0 0.0
    %4518 = vmatpush1.msra.mxu0 0.0
    %4519 = vmatprep.subr.mxu0 0.0
    %4520 = vmatpush1.msra.mxu0 0.0
    %4521 = vmatprep.subr.mxu0 0.0
    %4522 = vmatpush1.msra.mxu0 0.0
    %4523 = vmatprep.subr.mxu0 0.0
    %4524 = vmatpush1.msra.mxu0 0.0
    %4525 = vmatprep.subr.mxu0 0.0
    %4526 = vmatpush1.msra.mxu0 0.0
    %4527 = vmatprep.subr.mxu0 0.0
    %4528 = vmatpush1.msra.mxu0 0.0
    %4529 = vmatprep.subr.mxu0 0.0
    %4530 = vmatpush1.msra.mxu0 0.0
    %4531 = vmatprep.subr.mxu0 0.0
    %4532 = vmatpush1.msra.mxu0 0.0
    %4533 = vmatprep.subr.mxu0 0.0
    %4534 = vmatpush1.msra.mxu0 0.0
    %4535 = vmatprep.subr.mxu0 0.0
    %4536 = vmatpush1.msra.mxu0 0.0
    %4537 = vmatprep.subr.mxu0 0.0
    %4538 = vmatpush1.msra.mxu0 0.0
    %4539 = vmatprep.subr.mxu0 0.0
    %4540 = vmatpush1.msra.mxu0 0.0
    %4541 = vmatprep.subr.mxu0 0.0
    %4542 = vmatpush1.msra.mxu0 0.0
    %4543 = vmatprep.subr.mxu0 0.0
    %4544 = vmatpush1.msra.mxu0 0.0
    %4545 = vmatprep.subr.mxu0 0.0
    %4546 = vmatpush1.msra.mxu0 0.0
    %4547 = vmatprep.subr.mxu0 0.0
    %4548 = vmatpush1.msra.mxu0 0.0
    %4549 = vmatprep.subr.mxu0 0.0
    %4550 = vmatpush1.msra.mxu0 0.0
    %4551 = vmatprep.subr.mxu0 0.0
    %4552 = vmatpush1.msra.mxu0 0.0
    %4553 = vmatprep.subr.mxu0 0.0
    %4554 = vmatpush1.msra.mxu0 0.0
    %4555 = vmatprep.subr.mxu0 0.0
    %4556 = vmatpush1.msra.mxu0 0.0
    %4557 = vmatprep.subr.mxu0 0.0
    %4558 = vmatpush1.msra.mxu0 0.0
    %4559 = vmatprep.subr.mxu0 0.0
    %4560 = vmatpush1.msra.mxu0 0.0
    %4561 = vmatprep.subr.mxu0 0.0
    %4562 = vmatpush1.msra.mxu0 0.0
    %4563 = vmatprep.subr.mxu0 0.0
    %4564 = vmatpush1.msra.mxu0 0.0
    %4565 = vmatprep.subr.mxu0 0.0
    %4566 = vmatpush1.msra.mxu0 0.0
    %4567 = vmatprep.subr.mxu0 0.0
    %4568 = vmatpush1.msra.mxu0 0.0
    %4569 = vmatprep.subr.mxu0 0.0
    %4570 = vmatpush1.msra.mxu0 0.0
    %4571 = vmatprep.mubr.f32.mxu0 0.0
    %4572 = vmatmul.mubr.f32.gmra.mrb[0].mxu0 %v4505
    %v4573 = vpop.f32.mrb[0].mxu0
    %v4574 = vadd.f32 0.0, %v4573
    %v4575 = vpop.f32.mrb[0].mxu0
    %4576 = vdwg.mxu0
    %v4577 = vadd.f32 %v4069, %v4574
    %v4578 = vxor.u32 %v4577, 2147483648
    %v4579 = vmul.f32 %v4578, 1.442695
    %v4580 = vpow.pop %v4579
    %v4581 = vadd.f32 %v4580, 1.0
    %v4582 = vrcp.pop %v4581
    %v4583 = vmul.f32 1.0, %v4582
    %v4584 = vmul.f32 %v4583, 2.0
    %v4585 = vsub.f32 %v4584, 1.0
    %v4586 = vmul.f32 %v4583, %v4495
    %4588 = vrot.lane.b32.xlu0 %v4585, 64
    %v4589 = vpop.permute.xlu0 %4588
    %v4591 = vmul.f32 %v4583, %v4589
    %4593 = vrot.lane.b32.xlu0 %v4591, 32
    %v4594 = vpop.permute.xlu0 %4593
    %v4596 = vadd.f32 %v4586, %v4594
    %v4597 = vtanh.pop %v4596
    %4599 = vrot.lane.b32.xlu0 %v4597, 64
    %v4600 = vpop.permute.xlu0 %4599
    %v4602 = vmul.f32 %v4583, %v4600
    %4604 = vrot.lane.b32.xlu0 %v4602, 32
    %v4605 = vpop.permute.xlu0 %4604
    %v4606 = vsel %vm1526, %v4605, 0
    %4608 = vmatprep.subr.mxu0 0.0
    %4609 = vmatpush1.msra.mxu0 %v100
    %4610 = vmatprep.subr.mxu0 0.0
    %4611 = vmatpush1.msra.mxu0 %v101
    %4612 = vmatprep.subr.mxu0 0.0
    %4613 = vmatpush1.msra.mxu0 %v102
    %4614 = vmatprep.subr.mxu0 0.0
    %4615 = vmatpush1.msra.mxu0 %v103
    %4616 = vmatprep.subr.mxu0 0.0
    %4617 = vmatpush1.msra.mxu0 0.0
    %4618 = vmatprep.subr.mxu0 0.0
    %4619 = vmatpush1.msra.mxu0 0.0
    %4620 = vmatprep.subr.mxu0 0.0
    %4621 = vmatpush1.msra.mxu0 0.0
    %4622 = vmatprep.subr.mxu0 0.0
    %4623 = vmatpush1.msra.mxu0 0.0
    %4624 = vmatprep.subr.mxu0 0.0
    %4625 = vmatpush1.msra.mxu0 0.0
    %4626 = vmatprep.subr.mxu0 0.0
    %4627 = vmatpush1.msra.mxu0 0.0
    %4628 = vmatprep.subr.mxu0 0.0
    %4629 = vmatpush1.msra.mxu0 0.0
    %4630 = vmatprep.subr.mxu0 0.0
    %4631 = vmatpush1.msra.mxu0 0.0
    %4632 = vmatprep.subr.mxu0 0.0
    %4633 = vmatpush1.msra.mxu0 0.0
    %4634 = vmatprep.subr.mxu0 0.0
    %4635 = vmatpush1.msra.mxu0 0.0
    %4636 = vmatprep.subr.mxu0 0.0
    %4637 = vmatpush1.msra.mxu0 0.0
    %4638 = vmatprep.subr.mxu0 0.0
    %4639 = vmatpush1.msra.mxu0 0.0
    %4640 = vmatprep.subr.mxu0 0.0
    %4641 = vmatpush1.msra.mxu0 0.0
    %4642 = vmatprep.subr.mxu0 0.0
    %4643 = vmatpush1.msra.mxu0 0.0
    %4644 = vmatprep.subr.mxu0 0.0
    %4645 = vmatpush1.msra.mxu0 0.0
    %4646 = vmatprep.subr.mxu0 0.0
    %4647 = vmatpush1.msra.mxu0 0.0
    %4648 = vmatprep.subr.mxu0 0.0
    %4649 = vmatpush1.msra.mxu0 0.0
    %4650 = vmatprep.subr.mxu0 0.0
    %4651 = vmatpush1.msra.mxu0 0.0
    %4652 = vmatprep.subr.mxu0 0.0
    %4653 = vmatpush1.msra.mxu0 0.0
    %4654 = vmatprep.subr.mxu0 0.0
    %4655 = vmatpush1.msra.mxu0 0.0
    %4656 = vmatprep.subr.mxu0 0.0
    %4657 = vmatpush1.msra.mxu0 0.0
    %4658 = vmatprep.subr.mxu0 0.0
    %4659 = vmatpush1.msra.mxu0 0.0
    %4660 = vmatprep.subr.mxu0 0.0
    %4661 = vmatpush1.msra.mxu0 0.0
    %4662 = vmatprep.subr.mxu0 0.0
    %4663 = vmatpush1.msra.mxu0 0.0
    %4664 = vmatprep.subr.mxu0 0.0
    %4665 = vmatpush1.msra.mxu0 0.0
    %4666 = vmatprep.subr.mxu0 0.0
    %4667 = vmatpush1.msra.mxu0 0.0
    %4668 = vmatprep.subr.mxu0 0.0
    %4669 = vmatpush1.msra.mxu0 0.0
    %4670 = vmatprep.subr.mxu0 0.0
    %4671 = vmatpush1.msra.mxu0 0.0
    %4672 = vmatprep.mubr.f32.mxu0 0.0
    %4673 = vmatmul.mubr.f32.gmra.mrb[0].mxu0 %v4606
    %v4674 = vpop.f32.mrb[0].mxu0
    %v4675 = vadd.f32 0.0, %v4674
    %v4676 = vpop.f32.mrb[0].mxu0
    %4677 = vdwg.mxu0
    %v4678 = vadd.f32 %v4070, %v4675
    %v4679 = vxor.u32 %v4678, 2147483648
    %v4680 = vmul.f32 %v4679, 1.442695
    %v4681 = vpow.pop %v4680
    %v4682 = vadd.f32 %v4681, 1.0
    %v4683 = vrcp.pop %v4682
    %v4684 = vmul.f32 1.0, %v4683
    %v4685 = vmul.f32 %v4684, 2.0
    %v4686 = vsub.f32 %v4685, 1.0
    %v4687 = vmul.f32 %v4684, %v4596
    %4689 = vrot.lane.b32.xlu0 %v4686, 64
    %v4690 = vpop.permute.xlu0 %4689
    %v4692 = vmul.f32 %v4684, %v4690
    %4694 = vrot.lane.b32.xlu0 %v4692, 32
    %v4695 = vpop.permute.xlu0 %4694
    %v4697 = vadd.f32 %v4687, %v4695
    %v4698 = vtanh.pop %v4697
    %4700 = vrot.lane.b32.xlu0 %v4698, 64
    %v4701 = vpop.permute.xlu0 %4700
    %v4703 = vmul.f32 %v4684, %v4701
    %4705 = vrot.lane.b32.xlu0 %v4703, 32
    %v4706 = vpop.permute.xlu0 %4705
    %v4707 = vsel %vm1526, %v4706, 0
    %4709 = vmatprep.subr.mxu0 0.0
    %4710 = vmatpush1.msra.mxu0 %v100
    %4711 = vmatprep.subr.mxu0 0.0
    %4712 = vmatpush1.msra.mxu0 %v101
    %4713 = vmatprep.subr.mxu0 0.0
    %4714 = vmatpush1.msra.mxu0 %v102
    %4715 = vmatprep.subr.mxu0 0.0
    %4716 = vmatpush1.msra.mxu0 %v103
    %4717 = vmatprep.subr.mxu0 0.0
    %4718 = vmatpush1.msra.mxu0 0.0
    %4719 = vmatprep.subr.mxu0 0.0
    %4720 = vmatpush1.msra.mxu0 0.0
    %4721 = vmatprep.subr.mxu0 0.0
    %4722 = vmatpush1.msra.mxu0 0.0
    %4723 = vmatprep.subr.mxu0 0.0
    %4724 = vmatpush1.msra.mxu0 0.0
    %4725 = vmatprep.subr.mxu0 0.0
    %4726 = vmatpush1.msra.mxu0 0.0
    %4727 = vmatprep.subr.mxu0 0.0
    %4728 = vmatpush1.msra.mxu0 0.0
    %4729 = vmatprep.subr.mxu0 0.0
    %4730 = vmatpush1.msra.mxu0 0.0
    %4731 = vmatprep.subr.mxu0 0.0
    %4732 = vmatpush1.msra.mxu0 0.0
    %4733 = vmatprep.subr.mxu0 0.0
    %4734 = vmatpush1.msra.mxu0 0.0
    %4735 = vmatprep.subr.mxu0 0.0
    %4736 = vmatpush1.msra.mxu0 0.0
    %4737 = vmatprep.subr.mxu0 0.0
    %4738 = vmatpush1.msra.mxu0 0.0
    %4739 = vmatprep.subr.mxu0 0.0
    %4740 = vmatpush1.msra.mxu0 0.0
    %4741 = vmatprep.subr.mxu0 0.0
    %4742 = vmatpush1.msra.mxu0 0.0
    %4743 = vmatprep.subr.mxu0 0.0
    %4744 = vmatpush1.msra.mxu0 0.0
    %4745 = vmatprep.subr.mxu0 0.0
    %4746 = vmatpush1.msra.mxu0 0.0
    %4747 = vmatprep.subr.mxu0 0.0
    %4748 = vmatpush1.msra.mxu0 0.0
    %4749 = vmatprep.subr.mxu0 0.0
    %4750 = vmatpush1.msra.mxu0 0.0
    %4751 = vmatprep.subr.mxu0 0.0
    %4752 = vmatpush1.msra.mxu0 0.0
    %4753 = vmatprep.subr.mxu0 0.0
    %4754 = vmatpush1.msra.mxu0 0.0
    %4755 = vmatprep.subr.mxu0 0.0
    %4756 = vmatpush1.msra.mxu0 0.0
    %4757 = vmatprep.subr.mxu0 0.0
    %4758 = vmatpush1.msra.mxu0 0.0
    %4759 = vmatprep.subr.mxu0 0.0
    %4760 = vmatpush1.msra.mxu0 0.0
    %4761 = vmatprep.subr.mxu0 0.0
    %4762 = vmatpush1.msra.mxu0 0.0
    %4763 = vmatprep.subr.mxu0 0.0
    %4764 = vmatpush1.msra.mxu0 0.0
    %4765 = vmatprep.subr.mxu0 0.0
    %4766 = vmatpush1.msra.mxu0 0.0
    %4767 = vmatprep.subr.mxu0 0.0
    %4768 = vmatpush1.msra.mxu0 0.0
    %4769 = vmatprep.subr.mxu0 0.0
    %4770 = vmatpush1.msra.mxu0 0.0
    %4771 = vmatprep.subr.mxu0 0.0
    %4772 = vmatpush1.msra.mxu0 0.0
    %4773 = vmatprep.mubr.f32.mxu0 0.0
    %4774 = vmatmul.mubr.f32.gmra.mrb[0].mxu0 %v4707
    %v4775 = vpop.f32.mrb[0].mxu0
    %v4776 = vadd.f32 0.0, %v4775
    %v4777 = vpop.f32.mrb[0].mxu0
    %4778 = vdwg.mxu0
    %v4779 = vadd.f32 %v4071, %v4776
    %v4780 = vxor.u32 %v4779, 2147483648
    %v4781 = vmul.f32 %v4780, 1.442695
    %v4782 = vpow.pop %v4781
    %v4783 = vadd.f32 %v4782, 1.0
    %v4784 = vrcp.pop %v4783
    %v4785 = vmul.f32 1.0, %v4784
    %v4786 = vmul.f32 %v4785, 2.0
    %v4787 = vsub.f32 %v4786, 1.0
    %v4788 = vmul.f32 %v4785, %v4697
    %4790 = vrot.lane.b32.xlu0 %v4787, 64
    %v4791 = vpop.permute.xlu0 %4790
    %v4793 = vmul.f32 %v4785, %v4791
    %4795 = vrot.lane.b32.xlu0 %v4793, 32
    %v4796 = vpop.permute.xlu0 %4795
    %v4798 = vadd.f32 %v4788, %v4796
    %v4799 = vtanh.pop %v4798
    %4801 = vrot.lane.b32.xlu0 %v4799, 64
    %v4802 = vpop.permute.xlu0 %4801
    %v4804 = vmul.f32 %v4785, %v4802
    %4806 = vrot.lane.b32.xlu0 %v4804, 32
    %v4807 = vpop.permute.xlu0 %4806
    %v4808 = vsel %vm1526, %v4807, 0
    %4810 = vmatprep.subr.mxu0 0.0
    %4811 = vmatpush1.msra.mxu0 %v77
    %4812 = vmatprep.subr.mxu0 0.0
    %4813 = vmatpush1.msra.mxu0 %v78
    %4814 = vmatprep.subr.mxu0 0.0
    %4815 = vmatpush1.msra.mxu0 %v79
    %4816 = vmatprep.subr.mxu0 0.0
    %4817 = vmatpush1.msra.mxu0 %v80
    %4818 = vmatprep.subr.mxu0 0.0
    %4819 = vmatpush1.msra.mxu0 0.0
    %4820 = vmatprep.subr.mxu0 0.0
    %4821 = vmatpush1.msra.mxu0 0.0
    %4822 = vmatprep.subr.mxu0 0.0
    %4823 = vmatpush1.msra.mxu0 0.0
    %4824 = vmatprep.subr.mxu0 0.0
    %4825 = vmatpush1.msra.mxu0 0.0
    %4826 = vmatprep.subr.mxu0 0.0
    %4827 = vmatpush1.msra.mxu0 0.0
    %4828 = vmatprep.subr.mxu0 0.0
    %4829 = vmatpush1.msra.mxu0 0.0
    %4830 = vmatprep.subr.mxu0 0.0
    %4831 = vmatpush1.msra.mxu0 0.0
    %4832 = vmatprep.subr.mxu0 0.0
    %4833 = vmatpush1.msra.mxu0 0.0
    %4834 = vmatprep.subr.mxu0 0.0
    %4835 = vmatpush1.msra.mxu0 0.0
    %4836 = vmatprep.subr.mxu0 0.0
    %4837 = vmatpush1.msra.mxu0 0.0
    %4838 = vmatprep.subr.mxu0 0.0
    %4839 = vmatpush1.msra.mxu0 0.0
    %4840 = vmatprep.subr.mxu0 0.0
    %4841 = vmatpush1.msra.mxu0 0.0
    %4842 = vmatprep.subr.mxu0 0.0
    %4843 = vmatpush1.msra.mxu0 0.0
    %4844 = vmatprep.subr.mxu0 0.0
    %4845 = vmatpush1.msra.mxu0 0.0
    %4846 = vmatprep.subr.mxu0 0.0
    %4847 = vmatpush1.msra.mxu0 0.0
    %4848 = vmatprep.subr.mxu0 0.0
    %4849 = vmatpush1.msra.mxu0 0.0
    %4850 = vmatprep.subr.mxu0 0.0
    %4851 = vmatpush1.msra.mxu0 0.0
    %4852 = vmatprep.subr.mxu0 0.0
    %4853 = vmatpush1.msra.mxu0 0.0
    %4854 = vmatprep.subr.mxu0 0.0
    %4855 = vmatpush1.msra.mxu0 0.0
    %4856 = vmatprep.subr.mxu0 0.0
    %4857 = vmatpush1.msra.mxu0 0.0
    %4858 = vmatprep.subr.mxu0 0.0
    %4859 = vmatpush1.msra.mxu0 0.0
    %4860 = vmatprep.subr.mxu0 0.0
    %4861 = vmatpush1.msra.mxu0 0.0
    %4862 = vmatprep.subr.mxu0 0.0
    %4863 = vmatpush1.msra.mxu0 0.0
    %4864 = vmatprep.subr.mxu0 0.0
    %4865 = vmatpush1.msra.mxu0 0.0
    %4866 = vmatprep.subr.mxu0 0.0
    %4867 = vmatpush1.msra.mxu0 0.0
    %4868 = vmatprep.subr.mxu0 0.0
    %4869 = vmatpush1.msra.mxu0 0.0
    %4870 = vmatprep.subr.mxu0 0.0
    %4871 = vmatpush1.msra.mxu0 0.0
    %4872 = vmatprep.subr.mxu0 0.0
    %4873 = vmatpush1.msra.mxu0 0.0
    %4874 = vmatprep.mubr.f32.mxu0 0.0
    %4875 = vmatmul.mubr.f32.gmra.mrb[0].mxu0 %v4808
    %v4876 = vpop.f32.mrb[0].mxu0
    %v4877 = vadd.f32 %v2480, %v4876
    %v4878 = vpop.f32.mrb[0].mxu0
    %4879 = vdwg.mxu0
    %s4880 = scalar_lea.vmem [#allocation8], 8
    %4881 = vst.msk [vmem:[%s4880] sm:$0xff] %vm165, %v4877
    // Predicated region
    $region50: #{tpu_custom_call.1} parent=1 // pred_check
      _
    $region51: #{tpu_custom_call.1} parent=1 // pred_check_branch
      %4883 = sbr.rel (0) target = $region53
    $region52: #{tpu_custom_call.1} parent=1 // pred_region
      %s4885 = ssub.s32 256, 256
      %4886 = vsyncadd [#allocation4], %s4885
      %s4887 = sshll.u32 [#allocation8], 4
      %s4888 = int_to_ptr.vmem [resolvable:$true] %s4887
      %4893 = dma.vmem_to_hbm [thread:$0]  %s4888, 256, %s9, [#allocation4], 128, 128, 8
    $region53: #{tpu_custom_call.1} parent=1 // pred_fallthru
      _
    // Predicated region
    $region54: #{tpu_custom_call.1} parent=1 // pred_check
      _
    $region55: #{tpu_custom_call.1} parent=1 // pred_check_branch
      %4895 = sbr.rel (0) target = $region57
    $region56: #{tpu_custom_call.1} parent=1 // pred_region
      %4896 = dma.done [#allocation4], 256
    $region57: #{tpu_custom_call.1} parent=1 // pred_fallthru
      _
    %4897 = vsyncpa [#allocation3], 1
    %4898 = vsyncpa [#allocation6], 1
    %4899 = vsyncpa [#allocation4], 1

</llo_original>
